<compile_context>
chip_gen: v5e
topology: v5e:2x2
jax: 0.10.0
libtpu: 0.0.40
codegen_flags: <defaults>
</compile_context>

<pallas_src>
import functools
import math

import jax
import jax.numpy as jnp
from jax.experimental import pallas as pl
from jax.experimental.pallas import tpu as pltpu

# ----------------------------- config ---------------------------------------
B = 2          # batch
S_ENC = 8      # encoder sequence length
S_DEC = 8      # decoder sequence length
D = 32         # d_model
H = 2          # heads
DH = D // H    # head dim
FF = 64        # FFN hidden
V = 128        # vocab size (lane-dense logits)
NEG = -1e9
M_ENC = B * S_ENC
M_DEC = B * S_DEC


# ----------------------------- in-kernel helpers -----------------------------
def _ln(x, g, b, eps=1e-5):
    mu = jnp.mean(x, axis=-1, keepdims=True)
    var = jnp.mean(jnp.square(x - mu), axis=-1, keepdims=True)
    return (x - mu) * jax.lax.rsqrt(var + eps) * g + b


def _embed(ids, emb):
    """Exact embedding gather via one-hot matmul (V=128 is lane-dense).
    ids: (M,1) int32, emb: (V,D) f32 -> (M,D) f32."""
    iota = jax.lax.broadcasted_iota(jnp.int32, (ids.shape[0], V), 1)
    onehot = (iota == ids).astype(jnp.float32)
    return jnp.dot(onehot, emb, preferred_element_type=jnp.float32)


def _mha(q, kv, bias, wo, bo, Sq, Sk):
    """q: (B*Sq, D) f32 (1/sqrt(DH) already folded into the projection weights),
    kv: (B*Sk, 2D) f32 with columns [K | V], bias broadcastable to (B, Sq, Sk).
    Heads stay in registers (no VMEM scratch); contractions are batched over B."""
    q3 = q.reshape(B, Sq, D)
    kv3 = kv.reshape(B, Sk, 2 * D)
    heads = []
    for h in range(H):  # static H=2 loop; each iter is a batched 3-D contraction
        qh = q3[:, :, h * DH:(h + 1) * DH].astype(jnp.bfloat16)
        kh = kv3[:, :, h * DH:(h + 1) * DH].astype(jnp.bfloat16)
        vh = kv3[:, :, D + h * DH:D + (h + 1) * DH].astype(jnp.bfloat16)
        s = jnp.einsum("bqd,bkd->bqk", qh, kh, preferred_element_type=jnp.float32)
        s = s + bias                                   # additive 0 / -1e9 mask
        m = jnp.max(s, axis=-1, keepdims=True)
        p = jnp.exp(s - m)
        denom = jnp.sum(p, axis=-1, keepdims=True)
        p = p * pl.reciprocal(denom, approx=True)
        heads.append(jnp.einsum("bqk,bkd->bqd", p.astype(jnp.bfloat16), vh,
                                preferred_element_type=jnp.float32))
    o = jnp.concatenate(heads, axis=-1).reshape(B * Sq, D)
    return jnp.dot(o.astype(jnp.bfloat16), wo,
                   preferred_element_type=jnp.float32) + bo


def _self_attn(x, lng, lnb, wqkv, bqkv, wo, bo, bias, Sq):
    xn = _ln(x, lng, lnb)
    # one MXU launch for Q, K and V (concatenated [D, 3D] weight)
    qkv = jnp.dot(xn.astype(jnp.bfloat16), wqkv,
                  preferred_element_type=jnp.float32) + bqkv
    return x + _mha(qkv[:, :D], qkv[:, D:], bias, wo, bo, Sq, Sq)


def _cross_attn(x, enc_out, lng, lnb, wq, bq, wkv, bkv, wo, bo, bias, Sq, Sk):
    xn = _ln(x, lng, lnb)
    q = jnp.dot(xn.astype(jnp.bfloat16), wq,
                preferred_element_type=jnp.float32) + bq
    kv = jnp.dot(enc_out.astype(jnp.bfloat16), wkv,
                 preferred_element_type=jnp.float32) + bkv
    return x + _mha(q, kv, bias, wo, bo, Sq, Sk)


def _ffn(x, lng, lnb, w1, b1, w2, b2):
    xn = _ln(x, lng, lnb)
    h = jnp.maximum(jnp.dot(xn.astype(jnp.bfloat16), w1,
                            preferred_element_type=jnp.float32) + b1, 0.0)
    return x + jnp.dot(h.astype(jnp.bfloat16), w2,
                       preferred_element_type=jnp.float32) + b2


# ----------------------------- the single fused kernel -----------------------
def _seq2seq_kernel(*refs):
    (ids_enc, ids_dec, enc_kmask, dec_kmask, loss_mask,
     tok_emb, pos_enc, pos_dec,
     ln1g, ln1b, wqkv1, bqkv1, wo1, bo1,
     ln2g, ln2b, w1a, b1a, w2a, b2a,
     ln3g, ln3b, wqkv3, bqkv3, wo3, bo3,
     ln4g, ln4b, wq4, bq4, wkv4, bkv4, wo4, bo4,
     ln5g, ln5b, w1b, b1b, w2b, b2b,
     lm_w, lm_b,
     logits_ref, loss_ref) = refs

    # Additive attention biases, built in-kernel from compact (B, S) key masks.
    enc_bias = (1.0 - enc_kmask[...])[:, None, :] * NEG                  # (B,1,Senc)
    row = jax.lax.broadcasted_iota(jnp.int32, (S_DEC, S_DEC), 0)
    col = jax.lax.broadcasted_iota(jnp.int32, (S_DEC, S_DEC), 1)
    causal = (col <= row).astype(jnp.float32)                            # (Sdec,Sdec)
    dec_bias = (1.0 - causal[None] * dec_kmask[...][:, None, :]) * NEG   # (B,Sdec,Sdec)

    emb = tok_emb[...]

    # ---------------- encoder ----------------
    x = _embed(ids_enc[...], emb)
    x = (x.reshape(B, S_ENC, D) + pos_enc[...][None]).reshape(M_ENC, D)
    x = _self_attn(x, ln1g[...], ln1b[...], wqkv1[...], bqkv1[...],
                   wo1[...], bo1[...], enc_bias, S_ENC)
    enc_out = _ffn(x, ln2g[...], ln2b[...], w1a[...], b1a[...], w2a[...], b2a[...])

    # ---------------- decoder ----------------
    y = _embed(ids_dec[...], emb)
    y = (y.reshape(B, S_DEC, D) + pos_dec[...][None]).reshape(M_DEC, D)
    y = _self_attn(y, ln3g[...], ln3b[...], wqkv3[...], bqkv3[...],
                   wo3[...], bo3[...], dec_bias, S_DEC)
    # TODO(synk): cross-attention consumes enc_out without an extra K/V-side LN,
    # matching the previous kernel; verify against the reference base_model.
    y = _cross_attn(y, enc_out, ln4g[...], ln4b[...], wq4[...], bq4[...],
                    wkv4[...], bkv4[...], wo4[...], bo4[...],
                    enc_bias, S_DEC, S_ENC)
    y = _ffn(y, ln5g[...], ln5b[...], w1b[...], b1b[...], w2b[...], b2b[...])

    # ---------------- lm head + masked cross-entropy ----------------
    logits = jnp.dot(y.astype(jnp.bfloat16), lm_w[...],
                     preferred_element_type=jnp.float32) + lm_b[...]
    logits_ref[...] = logits                          # (M_DEC, V=128) lane-dense
    labels = ids_dec[...]                             # (M_DEC, 1) int32
    mask = loss_mask[...]                             # (M_DEC, 1) f32
    m = jnp.max(logits, axis=-1, keepdims=True)
    lse = m + jnp.log(jnp.sum(jnp.exp(logits - m), axis=-1, keepdims=True))
    lane = jax.lax.broadcasted_iota(jnp.int32, logits.shape, 1)
    picked = jnp.sum(jnp.where(lane == labels, logits, 0.0),
                     axis=-1, keepdims=True)
    nll = (lse - picked) * mask
    loss_ref[0] = jnp.sum(nll) / jnp.maximum(jnp.sum(mask), 1.0)   # SMEM scalar
    # TODO(synk): at realistic vocab / sequence sizes, tile V and Sk with an
    # online logsumexp/softmax and add a batch-parallel grid (v7x has 2 TCs);
    # at these toy shapes a single resident VMEM block is optimal.


# ----------------------------- wrapper ----------------------------------------
def _full_spec(x):
    zeros = (0,) * x.ndim
    return pl.BlockSpec(x.shape, lambda i, z=zeros: z)


def _flatten_params(p):
    ea, ef = p["enc_attn"], p["enc_ffn"]
    da, ca, df = p["dec_self_attn"], p["dec_cross_attn"], p["dec_ffn"]
    return (p["ln1_g"], p["ln1_b"], ea["wqkv"], ea["bqkv"], ea["wo"], ea["bo"],
            p["ln2_g"], p["ln2_b"], ef["w1"], ef["b1"], ef["w2"], ef["b2"],
            p["ln3_g"], p["ln3_b"], da["wqkv"], da["bqkv"], da["wo"], da["bo"],
            p["ln4_g"], p["ln4_b"], ca["wq"], ca["bq"], ca["wkv"], ca["bkv"],
            ca["wo"], ca["bo"],
            p["ln5_g"], p["ln5_b"], df["w1"], df["b1"], df["w2"], df["b2"],
            p["lm_w"], p["lm_b"])


def seq2seq_forward(params, input_ids, decoder_input_ids=None, input_mask=None,
                    decoder_mask=None, labels=None, train=True):
    """Mirrors Seq2seq.forward(train=True, rl=False): loss + predict_score."""
    # _step: y_ids = labels; lm_labels = labels.clone()
    y_ids = labels

    ids_enc = input_ids.reshape(M_ENC, 1).astype(jnp.int32)
    ids_dec = y_ids.reshape(M_DEC, 1).astype(jnp.int32)
    enc_kmask = input_mask.astype(jnp.float32)          # (B, S_ENC)
    dec_kmask = decoder_mask.astype(jnp.float32)        # (B, S_DEC)
    loss_mask = dec_kmask.reshape(M_DEC, 1)

    flat = (ids_enc, ids_dec, enc_kmask, dec_kmask, loss_mask,
            params["tok_emb"], params["pos_emb_enc"], params["pos_emb_dec"],
            *_flatten_params(params))

    logits, loss_vec = pl.pallas_call(
        _seq2seq_kernel,
        out_shape=(jax.ShapeDtypeStruct((M_DEC, V), jnp.float32),
                   jax.ShapeDtypeStruct((1,), jnp.float32)),
        grid=(1,),
        in_specs=[_full_spec(a) for a in flat],
        out_specs=(pl.BlockSpec((M_DEC, V), lambda i: (0, 0)),
                   pl.BlockSpec(memory_space=pltpu.MemorySpace.SMEM)),
        compiler_params=pltpu.CompilerParams(dimension_semantics=("arbitrary",)),
    )(*flat)

    loss = loss_vec[0]
    predict_score = logits.reshape(B, S_DEC, V)
    # TODO(synk): base_model.generate(...) beam/greedy/sampled decoding and
    # tokenizer.decode(...) string post-processing have no Pallas equivalent.
    preds = None; target = None; generated_ids = None
    value_list = []; preds_sample = None; seq_prob = None; seq_prob_sample = None
    return (loss, preds, target, generated_ids, labels, predict_score,
            value_list, preds_sample, seq_prob, seq_prob_sample)


# ----------------------------- parameter init --------------------------------
def init_params(key):
    scale = 1.0 / math.sqrt(DH)

    def dense(k, fan_in, fan_out):
        return jax.random.normal(k, (fan_in, fan_out), jnp.float32) * 0.02

    def self_attn_params(k):
        ks = jax.random.split(k, 4)
        # 1/sqrt(Dh) folded into the Q columns (bias is zero so its fold is a no-op)
        wq = dense(ks[0], D, D) * scale
        wk, wv, wo = dense(ks[1], D, D), dense(ks[2], D, D), dense(ks[3], D, D)
        return dict(
            wqkv=jnp.concatenate([wq, wk, wv], axis=1).astype(jnp.bfloat16),
            bqkv=jnp.zeros((1, 3 * D), jnp.float32),
            wo=wo.astype(jnp.bfloat16), bo=jnp.zeros((1, D), jnp.float32))

    def cross_attn_params(k):
        ks = jax.random.split(k, 4)
        return dict(
            wq=(dense(ks[0], D, D) * scale).astype(jnp.bfloat16),
            bq=jnp.zeros((1, D), jnp.float32),
            wkv=jnp.concatenate([dense(ks[1], D, D), dense(ks[2], D, D)],
                                axis=1).astype(jnp.bfloat16),
            bkv=jnp.zeros((1, 2 * D), jnp.float32),
            wo=dense(ks[3], D, D).astype(jnp.bfloat16),
            bo=jnp.zeros((1, D), jnp.float32))

    def ffn_params(k):
        k1, k2 = jax.random.split(k)
        return dict(w1=dense(k1, D, FF).astype(jnp.bfloat16),
                    b1=jnp.zeros((1, FF), jnp.float32),
                    w2=dense(k2, FF, D).astype(jnp.bfloat16),
                    b2=jnp.zeros((1, D), jnp.float32))

    ks = jax.random.split(key, 10)
    params = dict(
        tok_emb=jax.random.normal(ks[0], (V, D), jnp.float32) * 0.02,
        pos_emb_enc=jax.random.normal(ks[1], (S_ENC, D), jnp.float32) * 0.02,
        pos_emb_dec=jax.random.normal(ks[2], (S_DEC, D), jnp.float32) * 0.02,
        enc_attn=self_attn_params(ks[3]), enc_ffn=ffn_params(ks[4]),
        dec_self_attn=self_attn_params(ks[5]),
        dec_cross_attn=cross_attn_params(ks[6]),
        dec_ffn=ffn_params(ks[7]),
        lm_w=dense(ks[8], D, V).astype(jnp.bfloat16),
        lm_b=jnp.zeros((1, V), jnp.float32),
    )
    for i in range(1, 6):
        params[f"ln{i}_g"] = jnp.ones((1, D), jnp.float32)
        params[f"ln{i}_b"] = jnp.zeros((1, D), jnp.float32)
    return params


# ----------------------------- main ------------------------------------------
if __name__ == "__main__":
    key = jax.random.PRNGKey(0)
    kp, ki, kl = jax.random.split(key, 3)
    params = init_params(kp)

    input_ids = jax.random.randint(ki, (B, S_ENC), 0, V, jnp.int32)
    labels = jax.random.randint(kl, (B, S_DEC), 0, V, jnp.int32)
    input_mask = jnp.ones((B, S_ENC), jnp.int32).at[:, -2:].set(0)
    decoder_mask = jnp.ones((B, S_DEC), jnp.int32).at[:, -1:].set(0)

    fwd = jax.jit(functools.partial(seq2seq_forward, train=True))
    outputs = fwd(params, input_ids, decoder_input_ids=None,
                  input_mask=input_mask, decoder_mask=decoder_mask,
                  labels=labels)
    loss = outputs[0]
    predict_score = outputs[5]
    jax.block_until_ready((loss, predict_score))
    assert jnp.isfinite(loss), "loss is not finite"
    assert predict_score.shape == (B, S_DEC, V)
    print("KERNEL_OK")
</pallas_src>

<mosaic_0001>
module attributes {stable_mosaic.version = 11 : i64} {
  func.func @_seq2seq_kernel(%arg0: i32, %arg1: memref<16x1xi32, #tpu.memory_space<vmem>>, %arg2: memref<16x1xi32, #tpu.memory_space<vmem>>, %arg3: memref<2x8xf32, #tpu.memory_space<vmem>>, %arg4: memref<2x8xf32, #tpu.memory_space<vmem>>, %arg5: memref<16x1xf32, #tpu.memory_space<vmem>>, %arg6: memref<128x32xf32, #tpu.memory_space<vmem>>, %arg7: memref<8x32xf32, #tpu.memory_space<vmem>>, %arg8: memref<8x32xf32, #tpu.memory_space<vmem>>, %arg9: memref<1x32xf32, #tpu.memory_space<vmem>>, %arg10: memref<1x32xf32, #tpu.memory_space<vmem>>, %arg11: memref<32x96xbf16, #tpu.memory_space<vmem>>, %arg12: memref<1x96xf32, #tpu.memory_space<vmem>>, %arg13: memref<32x32xbf16, #tpu.memory_space<vmem>>, %arg14: memref<1x32xf32, #tpu.memory_space<vmem>>, %arg15: memref<1x32xf32, #tpu.memory_space<vmem>>, %arg16: memref<1x32xf32, #tpu.memory_space<vmem>>, %arg17: memref<32x64xbf16, #tpu.memory_space<vmem>>, %arg18: memref<1x64xf32, #tpu.memory_space<vmem>>, %arg19: memref<64x32xbf16, #tpu.memory_space<vmem>>, %arg20: memref<1x32xf32, #tpu.memory_space<vmem>>, %arg21: memref<1x32xf32, #tpu.memory_space<vmem>>, %arg22: memref<1x32xf32, #tpu.memory_space<vmem>>, %arg23: memref<32x96xbf16, #tpu.memory_space<vmem>>, %arg24: memref<1x96xf32, #tpu.memory_space<vmem>>, %arg25: memref<32x32xbf16, #tpu.memory_space<vmem>>, %arg26: memref<1x32xf32, #tpu.memory_space<vmem>>, %arg27: memref<1x32xf32, #tpu.memory_space<vmem>>, %arg28: memref<1x32xf32, #tpu.memory_space<vmem>>, %arg29: memref<32x32xbf16, #tpu.memory_space<vmem>>, %arg30: memref<1x32xf32, #tpu.memory_space<vmem>>, %arg31: memref<32x64xbf16, #tpu.memory_space<vmem>>, %arg32: memref<1x64xf32, #tpu.memory_space<vmem>>, %arg33: memref<32x32xbf16, #tpu.memory_space<vmem>>, %arg34: memref<1x32xf32, #tpu.memory_space<vmem>>, %arg35: memref<1x32xf32, #tpu.memory_space<vmem>>, %arg36: memref<1x32xf32, #tpu.memory_space<vmem>>, %arg37: memref<32x64xbf16, #tpu.memory_space<vmem>>, %arg38: memref<1x64xf32, #tpu.memory_space<vmem>>, %arg39: memref<64x32xbf16, #tpu.memory_space<vmem>>, %arg40: memref<1x32xf32, #tpu.memory_space<vmem>>, %arg41: memref<32x128xbf16, #tpu.memory_space<vmem>>, %arg42: memref<1x128xf32, #tpu.memory_space<vmem>>, %arg43: memref<16x128xf32, #tpu.memory_space<vmem>>, %arg44: memref<1xf32, #tpu.memory_space<smem>>) attributes {dimension_semantics = [#tpu.dimension_semantics<arbitrary>], iteration_bounds = array<i64: 1>, scalar_prefetch = 0 : i64, scratch_operands = 0 : i64, tpu.core_type = #tpu.core_type<tc>, window_params = [{pipeline_mode = #tpu.pipeline_mode<synchronous>, transform_indices = @transform_0, window_bounds = array<i64: 16, 1>}, {pipeline_mode = #tpu.pipeline_mode<synchronous>, transform_indices = @transform_1, window_bounds = array<i64: 16, 1>}, {pipeline_mode = #tpu.pipeline_mode<synchronous>, transform_indices = @transform_2, window_bounds = array<i64: 2, 8>}, {pipeline_mode = #tpu.pipeline_mode<synchronous>, transform_indices = @transform_3, window_bounds = array<i64: 2, 8>}, {pipeline_mode = #tpu.pipeline_mode<synchronous>, transform_indices = @transform_4, window_bounds = array<i64: 16, 1>}, {pipeline_mode = #tpu.pipeline_mode<synchronous>, transform_indices = @transform_5, window_bounds = array<i64: 128, 32>}, {pipeline_mode = #tpu.pipeline_mode<synchronous>, transform_indices = @transform_6, window_bounds = array<i64: 8, 32>}, {pipeline_mode = #tpu.pipeline_mode<synchronous>, transform_indices = @transform_7, window_bounds = array<i64: 8, 32>}, {pipeline_mode = #tpu.pipeline_mode<synchronous>, transform_indices = @transform_8, window_bounds = array<i64: 1, 32>}, {pipeline_mode = #tpu.pipeline_mode<synchronous>, transform_indices = @transform_9, window_bounds = array<i64: 1, 32>}, {pipeline_mode = #tpu.pipeline_mode<synchronous>, transform_indices = @transform_10, window_bounds = array<i64: 32, 96>}, {pipeline_mode = #tpu.pipeline_mode<synchronous>, transform_indices = @transform_11, window_bounds = array<i64: 1, 96>}, {pipeline_mode = #tpu.pipeline_mode<synchronous>, transform_indices = @transform_12, window_bounds = array<i64: 32, 32>}, {pipeline_mode = #tpu.pipeline_mode<synchronous>, transform_indices = @transform_13, window_bounds = array<i64: 1, 32>}, {pipeline_mode = #tpu.pipeline_mode<synchronous>, transform_indices = @transform_14, window_bounds = array<i64: 1, 32>}, {pipeline_mode = #tpu.pipeline_mode<synchronous>, transform_indices = @transform_15, window_bounds = array<i64: 1, 32>}, {pipeline_mode = #tpu.pipeline_mode<synchronous>, transform_indices = @transform_16, window_bounds = array<i64: 32, 64>}, {pipeline_mode = #tpu.pipeline_mode<synchronous>, transform_indices = @transform_17, window_bounds = array<i64: 1, 64>}, {pipeline_mode = #tpu.pipeline_mode<synchronous>, transform_indices = @transform_18, window_bounds = array<i64: 64, 32>}, {pipeline_mode = #tpu.pipeline_mode<synchronous>, transform_indices = @transform_19, window_bounds = array<i64: 1, 32>}, {pipeline_mode = #tpu.pipeline_mode<synchronous>, transform_indices = @transform_20, window_bounds = array<i64: 1, 32>}, {pipeline_mode = #tpu.pipeline_mode<synchronous>, transform_indices = @transform_21, window_bounds = array<i64: 1, 32>}, {pipeline_mode = #tpu.pipeline_mode<synchronous>, transform_indices = @transform_22, window_bounds = array<i64: 32, 96>}, {pipeline_mode = #tpu.pipeline_mode<synchronous>, transform_indices = @transform_23, window_bounds = array<i64: 1, 96>}, {pipeline_mode = #tpu.pipeline_mode<synchronous>, transform_indices = @transform_24, window_bounds = array<i64: 32, 32>}, {pipeline_mode = #tpu.pipeline_mode<synchronous>, transform_indices = @transform_25, window_bounds = array<i64: 1, 32>}, {pipeline_mode = #tpu.pipeline_mode<synchronous>, transform_indices = @transform_26, window_bounds = array<i64: 1, 32>}, {pipeline_mode = #tpu.pipeline_mode<synchronous>, transform_indices = @transform_27, window_bounds = array<i64: 1, 32>}, {pipeline_mode = #tpu.pipeline_mode<synchronous>, transform_indices = @transform_28, window_bounds = array<i64: 32, 32>}, {pipeline_mode = #tpu.pipeline_mode<synchronous>, transform_indices = @transform_29, window_bounds = array<i64: 1, 32>}, {pipeline_mode = #tpu.pipeline_mode<synchronous>, transform_indices = @transform_30, window_bounds = array<i64: 32, 64>}, {pipeline_mode = #tpu.pipeline_mode<synchronous>, transform_indices = @transform_31, window_bounds = array<i64: 1, 64>}, {pipeline_mode = #tpu.pipeline_mode<synchronous>, transform_indices = @transform_32, window_bounds = array<i64: 32, 32>}, {pipeline_mode = #tpu.pipeline_mode<synchronous>, transform_indices = @transform_33, window_bounds = array<i64: 1, 32>}, {pipeline_mode = #tpu.pipeline_mode<synchronous>, transform_indices = @transform_34, window_bounds = array<i64: 1, 32>}, {pipeline_mode = #tpu.pipeline_mode<synchronous>, transform_indices = @transform_35, window_bounds = array<i64: 1, 32>}, {pipeline_mode = #tpu.pipeline_mode<synchronous>, transform_indices = @transform_36, window_bounds = array<i64: 32, 64>}, {pipeline_mode = #tpu.pipeline_mode<synchronous>, transform_indices = @transform_37, window_bounds = array<i64: 1, 64>}, {pipeline_mode = #tpu.pipeline_mode<synchronous>, transform_indices = @transform_38, window_bounds = array<i64: 64, 32>}, {pipeline_mode = #tpu.pipeline_mode<synchronous>, transform_indices = @transform_39, window_bounds = array<i64: 1, 32>}, {pipeline_mode = #tpu.pipeline_mode<synchronous>, transform_indices = @transform_40, window_bounds = array<i64: 32, 128>}, {pipeline_mode = #tpu.pipeline_mode<synchronous>, transform_indices = @transform_41, window_bounds = array<i64: 1, 128>}, {pipeline_mode = #tpu.pipeline_mode<synchronous>, transform_indices = @transform_42, window_bounds = array<i64: 16, 128>}, {transform_indices = @transform_43, window_bounds = array<i64: 1>}]} {
    %c0 = arith.constant 0 : index
    %c0_0 = arith.constant 0 : index
    %0 = vector.load %arg3[%c0, %c0_0] : memref<2x8xf32, #tpu.memory_space<vmem>>, vector<2x8xf32>
    %cst = arith.constant 1.000000e+00 : f32
    %1 = vector.broadcast %cst : f32 to vector<2x8xf32>
    %2 = arith.subf %1, %0 : vector<2x8xf32>
    %3 = vector.shape_cast %2 : vector<2x8xf32> to vector<2x1x8xf32>
    %cst_1 = arith.constant -1.000000e+09 : f32
    %4 = vector.broadcast %cst_1 : f32 to vector<2x1x8xf32>
    %5 = arith.mulf %3, %4 : vector<2x1x8xf32>
    %6 = tpu.iota {dimensions = array<i32: 0>} : vector<8x8xi32>
    %7 = tpu.iota {dimensions = array<i32: 1>} : vector<8x8xi32>
    %8 = arith.cmpi sle, %7, %6 : vector<8x8xi32>
    %9 = arith.extui %8 : vector<8x8xi1> to vector<8x8xi32>
    %10 = arith.sitofp %9 : vector<8x8xi32> to vector<8x8xf32>
    %11 = vector.shape_cast %10 : vector<8x8xf32> to vector<1x8x8xf32>
    %c0_2 = arith.constant 0 : index
    %c0_3 = arith.constant 0 : index
    %12 = vector.load %arg4[%c0_2, %c0_3] : memref<2x8xf32, #tpu.memory_space<vmem>>, vector<2x8xf32>
    %13 = vector.shape_cast %12 : vector<2x8xf32> to vector<2x1x8xf32>
    %14 = vector.broadcast %11 : vector<1x8x8xf32> to vector<2x8x8xf32>
    %15 = vector.broadcast %13 : vector<2x1x8xf32> to vector<2x8x8xf32>
    %16 = arith.mulf %14, %15 : vector<2x8x8xf32>
    %cst_4 = arith.constant 1.000000e+00 : f32
    %17 = vector.broadcast %cst_4 : f32 to vector<2x8x8xf32>
    %18 = arith.subf %17, %16 : vector<2x8x8xf32>
    %cst_5 = arith.constant -1.000000e+09 : f32
    %19 = vector.broadcast %cst_5 : f32 to vector<2x8x8xf32>
    %20 = arith.mulf %18, %19 : vector<2x8x8xf32>
    %c0_6 = arith.constant 0 : index
    %c0_7 = arith.constant 0 : index
    %21 = vector.load %arg6[%c0_6, %c0_7] : memref<128x32xf32, #tpu.memory_space<vmem>>, vector<128x32xf32>
    %c0_8 = arith.constant 0 : index
    %c0_9 = arith.constant 0 : index
    %22 = vector.load %arg1[%c0_8, %c0_9] : memref<16x1xi32, #tpu.memory_space<vmem>>, vector<16x1xi32>
    %23 = tpu.iota {dimensions = array<i32: 1>} : vector<16x128xi32>
    %24 = vector.broadcast %22 : vector<16x1xi32> to vector<16x128xi32>
    %25 = arith.cmpi eq, %23, %24 : vector<16x128xi32>
    %26 = arith.extui %25 : vector<16x128xi1> to vector<16x128xi32>
    %27 = arith.sitofp %26 : vector<16x128xi32> to vector<16x128xf32>
    %cst_10 = arith.constant dense<0.000000e+00> : vector<16x32xf32>
    %28 = tpu.matmul %27, %21, %cst_10 {dimension_numbers = #tpu.dot_dimension_numbers<[1], [0], [0], [1], [0, 0, 1, 1], [], []>} : vector<16x128xf32>, vector<128x32xf32>, vector<16x32xf32> -> vector<16x32xf32>
    %29 = vector.shape_cast %28 : vector<16x32xf32> to vector<2x8x32xf32>
    %c0_11 = arith.constant 0 : index
    %c0_12 = arith.constant 0 : index
    %30 = vector.load %arg7[%c0_11, %c0_12] : memref<8x32xf32, #tpu.memory_space<vmem>>, vector<8x32xf32>
    %31 = vector.shape_cast %30 : vector<8x32xf32> to vector<1x8x32xf32>
    %32 = vector.broadcast %31 : vector<1x8x32xf32> to vector<2x8x32xf32>
    %33 = arith.addf %29, %32 : vector<2x8x32xf32>
    %34 = vector.shape_cast %33 : vector<2x8x32xf32> to vector<16x32xf32>
    %c0_13 = arith.constant 0 : index
    %c0_14 = arith.constant 0 : index
    %35 = vector.load %arg9[%c0_13, %c0_14] : memref<1x32xf32, #tpu.memory_space<vmem>>, vector<1x32xf32>
    %c0_15 = arith.constant 0 : index
    %c0_16 = arith.constant 0 : index
    %36 = vector.load %arg10[%c0_15, %c0_16] : memref<1x32xf32, #tpu.memory_space<vmem>>, vector<1x32xf32>
    %c0_17 = arith.constant 0 : index
    %c0_18 = arith.constant 0 : index
    %37 = vector.load %arg11[%c0_17, %c0_18] : memref<32x96xbf16, #tpu.memory_space<vmem>>, vector<32x96xbf16>
    %c0_19 = arith.constant 0 : index
    %c0_20 = arith.constant 0 : index
    %38 = vector.load %arg12[%c0_19, %c0_20] : memref<1x96xf32, #tpu.memory_space<vmem>>, vector<1x96xf32>
    %c0_21 = arith.constant 0 : index
    %c0_22 = arith.constant 0 : index
    %39 = vector.load %arg13[%c0_21, %c0_22] : memref<32x32xbf16, #tpu.memory_space<vmem>>, vector<32x32xbf16>
    %c0_23 = arith.constant 0 : index
    %c0_24 = arith.constant 0 : index
    %40 = vector.load %arg14[%c0_23, %c0_24] : memref<1x32xf32, #tpu.memory_space<vmem>>, vector<1x32xf32>
    %cst_25 = arith.constant dense<0.000000e+00> : vector<16xf32>
    %41 = vector.multi_reduction <add>, %34, %cst_25 [1] : vector<16x32xf32> to vector<16xf32>
    %42 = vector.shape_cast %41 : vector<16xf32> to vector<16x1xf32>
    %cst_26 = arith.constant 3.200000e+01 : f32
    %43 = vector.broadcast %cst_26 : f32 to vector<16x1xf32>
    %44 = arith.divf %42, %43 : vector<16x1xf32>
    %45 = vector.broadcast %44 : vector<16x1xf32> to vector<16x32xf32>
    %46 = arith.subf %34, %45 : vector<16x32xf32>
    %47 = arith.mulf %46, %46 : vector<16x32xf32>
    %cst_27 = arith.constant dense<0.000000e+00> : vector<16xf32>
    %48 = vector.multi_reduction <add>, %47, %cst_27 [1] : vector<16x32xf32> to vector<16xf32>
    %49 = vector.shape_cast %48 : vector<16xf32> to vector<16x1xf32>
    %cst_28 = arith.constant 3.200000e+01 : f32
    %50 = vector.broadcast %cst_28 : f32 to vector<16x1xf32>
    %51 = arith.divf %49, %50 : vector<16x1xf32>
    %52 = vector.broadcast %44 : vector<16x1xf32> to vector<16x32xf32>
    %53 = arith.subf %34, %52 : vector<16x32xf32>
    %cst_29 = arith.constant 9.99999974E-6 : f32
    %54 = vector.broadcast %cst_29 : f32 to vector<16x1xf32>
    %55 = arith.addf %51, %54 : vector<16x1xf32>
    %56 = math.rsqrt %55 : vector<16x1xf32>
    %57 = vector.broadcast %56 : vector<16x1xf32> to vector<16x32xf32>
    %58 = arith.mulf %53, %57 : vector<16x32xf32>
    %59 = vector.broadcast %35 : vector<1x32xf32> to vector<16x32xf32>
    %60 = arith.mulf %58, %59 : vector<16x32xf32>
    %61 = vector.broadcast %36 : vector<1x32xf32> to vector<16x32xf32>
    %62 = arith.addf %60, %61 : vector<16x32xf32>
    %63 = arith.truncf %62 : vector<16x32xf32> to vector<16x32xbf16>
    %cst_30 = arith.constant dense<0.000000e+00> : vector<16x96xf32>
    %64 = tpu.matmul %63, %37, %cst_30 {dimension_numbers = #tpu.dot_dimension_numbers<[1], [0], [0], [1], [0, 0, 1, 1], [], []>} : vector<16x32xbf16>, vector<32x96xbf16>, vector<16x96xf32> -> vector<16x96xf32>
    %65 = vector.broadcast %38 : vector<1x96xf32> to vector<16x96xf32>
    %66 = arith.addf %64, %65 : vector<16x96xf32>
    %67 = vector.extract_strided_slice %66 {offsets = [0, 0], sizes = [16, 32], strides = [1, 1]} : vector<16x96xf32> to vector<16x32xf32>
    %68 = vector.extract_strided_slice %66 {offsets = [0, 32], sizes = [16, 64], strides = [1, 1]} : vector<16x96xf32> to vector<16x64xf32>
    %69 = vector.shape_cast %67 : vector<16x32xf32> to vector<2x8x32xf32>
    %70 = vector.shape_cast %68 : vector<16x64xf32> to vector<2x8x64xf32>
    %71 = vector.extract_strided_slice %69 {offsets = [0, 0, 0], sizes = [2, 8, 16], strides = [1, 1, 1]} : vector<2x8x32xf32> to vector<2x8x16xf32>
    %72 = arith.truncf %71 : vector<2x8x16xf32> to vector<2x8x16xbf16>
    %73 = vector.extract_strided_slice %70 {offsets = [0, 0, 0], sizes = [2, 8, 16], strides = [1, 1, 1]} : vector<2x8x64xf32> to vector<2x8x16xf32>
    %74 = arith.truncf %73 : vector<2x8x16xf32> to vector<2x8x16xbf16>
    %75 = vector.extract_strided_slice %70 {offsets = [0, 0, 32], sizes = [2, 8, 16], strides = [1, 1, 1]} : vector<2x8x64xf32> to vector<2x8x16xf32>
    %76 = arith.truncf %75 : vector<2x8x16xf32> to vector<2x8x16xbf16>
    "tpu.trace_start"() <{level = 10 : i32, message = "bqd,bkd->bqk"}> : () -> ()
    %cst_31 = arith.constant dense<0.000000e+00> : vector<2x8x8xf32>
    %77 = tpu.matmul %72, %74, %cst_31 {dimension_numbers = #tpu.dot_dimension_numbers<[2], [2], [1], [1], [0, 0, 0, 1, 1, 1], [0], [0]>} : vector<2x8x16xbf16>, vector<2x8x16xbf16>, vector<2x8x8xf32> -> vector<2x8x8xf32>
    "tpu.trace_stop"() : () -> ()
    %78 = vector.broadcast %5 : vector<2x1x8xf32> to vector<2x8x8xf32>
    %79 = arith.addf %77, %78 : vector<2x8x8xf32>
    %cst_32 = arith.constant dense<0xFF800000> : vector<2x8xf32>
    %80 = vector.multi_reduction <maximumf>, %79, %cst_32 [2] : vector<2x8x8xf32> to vector<2x8xf32>
    %81 = vector.shape_cast %80 : vector<2x8xf32> to vector<2x8x1xf32>
    %82 = vector.broadcast %81 : vector<2x8x1xf32> to vector<2x8x8xf32>
    %83 = arith.subf %79, %82 : vector<2x8x8xf32>
    %84 = math.exp %83 : vector<2x8x8xf32>
    %cst_33 = arith.constant dense<0.000000e+00> : vector<2x8xf32>
    %85 = vector.multi_reduction <add>, %84, %cst_33 [2] : vector<2x8x8xf32> to vector<2x8xf32>
    %86 = vector.shape_cast %85 : vector<2x8xf32> to vector<2x8x1xf32>
    %87 = tpu.reciprocal %86 {approx = true} : vector<2x8x1xf32> -> vector<2x8x1xf32>
    %88 = vector.broadcast %87 : vector<2x8x1xf32> to vector<2x8x8xf32>
    %89 = arith.mulf %84, %88 : vector<2x8x8xf32>
    %90 = arith.truncf %89 : vector<2x8x8xf32> to vector<2x8x8xbf16>
    "tpu.trace_start"() <{level = 10 : i32, message = "bqk,bkd->bqd"}> : () -> ()
    %cst_34 = arith.constant dense<0.000000e+00> : vector<2x8x16xf32>
    %91 = tpu.matmul %90, %76, %cst_34 {dimension_numbers = #tpu.dot_dimension_numbers<[2], [1], [1], [2], [0, 0, 0, 1, 1, 2], [0], [0]>} : vector<2x8x8xbf16>, vector<2x8x16xbf16>, vector<2x8x16xf32> -> vector<2x8x16xf32>
    "tpu.trace_stop"() : () -> ()
    %92 = vector.extract_strided_slice %69 {offsets = [0, 0, 16], sizes = [2, 8, 16], strides = [1, 1, 1]} : vector<2x8x32xf32> to vector<2x8x16xf32>
    %93 = arith.truncf %92 : vector<2x8x16xf32> to vector<2x8x16xbf16>
    %94 = vector.extract_strided_slice %70 {offsets = [0, 0, 16], sizes = [2, 8, 16], strides = [1, 1, 1]} : vector<2x8x64xf32> to vector<2x8x16xf32>
    %95 = arith.truncf %94 : vector<2x8x16xf32> to vector<2x8x16xbf16>
    %96 = vector.extract_strided_slice %70 {offsets = [0, 0, 48], sizes = [2, 8, 16], strides = [1, 1, 1]} : vector<2x8x64xf32> to vector<2x8x16xf32>
    %97 = arith.truncf %96 : vector<2x8x16xf32> to vector<2x8x16xbf16>
    "tpu.trace_start"() <{level = 10 : i32, message = "bqd,bkd->bqk"}> : () -> ()
    %cst_35 = arith.constant dense<0.000000e+00> : vector<2x8x8xf32>
    %98 = tpu.matmul %93, %95, %cst_35 {dimension_numbers = #tpu.dot_dimension_numbers<[2], [2], [1], [1], [0, 0, 0, 1, 1, 1], [0], [0]>} : vector<2x8x16xbf16>, vector<2x8x16xbf16>, vector<2x8x8xf32> -> vector<2x8x8xf32>
    "tpu.trace_stop"() : () -> ()
    %99 = vector.broadcast %5 : vector<2x1x8xf32> to vector<2x8x8xf32>
    %100 = arith.addf %98, %99 : vector<2x8x8xf32>
    %cst_36 = arith.constant dense<0xFF800000> : vector<2x8xf32>
    %101 = vector.multi_reduction <maximumf>, %100, %cst_36 [2] : vector<2x8x8xf32> to vector<2x8xf32>
    %102 = vector.shape_cast %101 : vector<2x8xf32> to vector<2x8x1xf32>
    %103 = vector.broadcast %102 : vector<2x8x1xf32> to vector<2x8x8xf32>
    %104 = arith.subf %100, %103 : vector<2x8x8xf32>
    %105 = math.exp %104 : vector<2x8x8xf32>
    %cst_37 = arith.constant dense<0.000000e+00> : vector<2x8xf32>
    %106 = vector.multi_reduction <add>, %105, %cst_37 [2] : vector<2x8x8xf32> to vector<2x8xf32>
    %107 = vector.shape_cast %106 : vector<2x8xf32> to vector<2x8x1xf32>
    %108 = tpu.reciprocal %107 {approx = true} : vector<2x8x1xf32> -> vector<2x8x1xf32>
    %109 = vector.broadcast %108 : vector<2x8x1xf32> to vector<2x8x8xf32>
    %110 = arith.mulf %105, %109 : vector<2x8x8xf32>
    %111 = arith.truncf %110 : vector<2x8x8xf32> to vector<2x8x8xbf16>
    "tpu.trace_start"() <{level = 10 : i32, message = "bqk,bkd->bqd"}> : () -> ()
    %cst_38 = arith.constant dense<0.000000e+00> : vector<2x8x16xf32>
    %112 = tpu.matmul %111, %97, %cst_38 {dimension_numbers = #tpu.dot_dimension_numbers<[2], [1], [1], [2], [0, 0, 0, 1, 1, 2], [0], [0]>} : vector<2x8x8xbf16>, vector<2x8x16xbf16>, vector<2x8x16xf32> -> vector<2x8x16xf32>
    "tpu.trace_stop"() : () -> ()
    %113 = tpu.concatenate %91, %112 in 2 : vector<2x8x16xf32>, vector<2x8x16xf32> -> vector<2x8x32xf32>
    %114 = vector.shape_cast %113 : vector<2x8x32xf32> to vector<16x32xf32>
    %115 = arith.truncf %114 : vector<16x32xf32> to vector<16x32xbf16>
    %cst_39 = arith.constant dense<0.000000e+00> : vector<16x32xf32>
    %116 = tpu.matmul %115, %39, %cst_39 {dimension_numbers = #tpu.dot_dimension_numbers<[1], [0], [0], [1], [0, 0, 1, 1], [], []>} : vector<16x32xbf16>, vector<32x32xbf16>, vector<16x32xf32> -> vector<16x32xf32>
    %117 = vector.broadcast %40 : vector<1x32xf32> to vector<16x32xf32>
    %118 = arith.addf %116, %117 : vector<16x32xf32>
    %119 = arith.addf %34, %118 : vector<16x32xf32>
    %c0_40 = arith.constant 0 : index
    %c0_41 = arith.constant 0 : index
    %120 = vector.load %arg15[%c0_40, %c0_41] : memref<1x32xf32, #tpu.memory_space<vmem>>, vector<1x32xf32>
    %c0_42 = arith.constant 0 : index
    %c0_43 = arith.constant 0 : index
    %121 = vector.load %arg16[%c0_42, %c0_43] : memref<1x32xf32, #tpu.memory_space<vmem>>, vector<1x32xf32>
    %c0_44 = arith.constant 0 : index
    %c0_45 = arith.constant 0 : index
    %122 = vector.load %arg17[%c0_44, %c0_45] : memref<32x64xbf16, #tpu.memory_space<vmem>>, vector<32x64xbf16>
    %c0_46 = arith.constant 0 : index
    %c0_47 = arith.constant 0 : index
    %123 = vector.load %arg18[%c0_46, %c0_47] : memref<1x64xf32, #tpu.memory_space<vmem>>, vector<1x64xf32>
    %c0_48 = arith.constant 0 : index
    %c0_49 = arith.constant 0 : index
    %124 = vector.load %arg19[%c0_48, %c0_49] : memref<64x32xbf16, #tpu.memory_space<vmem>>, vector<64x32xbf16>
    %c0_50 = arith.constant 0 : index
    %c0_51 = arith.constant 0 : index
    %125 = vector.load %arg20[%c0_50, %c0_51] : memref<1x32xf32, #tpu.memory_space<vmem>>, vector<1x32xf32>
    %cst_52 = arith.constant dense<0.000000e+00> : vector<16xf32>
    %126 = vector.multi_reduction <add>, %119, %cst_52 [1] : vector<16x32xf32> to vector<16xf32>
    %127 = vector.shape_cast %126 : vector<16xf32> to vector<16x1xf32>
    %cst_53 = arith.constant 3.200000e+01 : f32
    %128 = vector.broadcast %cst_53 : f32 to vector<16x1xf32>
    %129 = arith.divf %127, %128 : vector<16x1xf32>
    %130 = vector.broadcast %129 : vector<16x1xf32> to vector<16x32xf32>
    %131 = arith.subf %119, %130 : vector<16x32xf32>
    %132 = arith.mulf %131, %131 : vector<16x32xf32>
    %cst_54 = arith.constant dense<0.000000e+00> : vector<16xf32>
    %133 = vector.multi_reduction <add>, %132, %cst_54 [1] : vector<16x32xf32> to vector<16xf32>
    %134 = vector.shape_cast %133 : vector<16xf32> to vector<16x1xf32>
    %cst_55 = arith.constant 3.200000e+01 : f32
    %135 = vector.broadcast %cst_55 : f32 to vector<16x1xf32>
    %136 = arith.divf %134, %135 : vector<16x1xf32>
    %137 = vector.broadcast %129 : vector<16x1xf32> to vector<16x32xf32>
    %138 = arith.subf %119, %137 : vector<16x32xf32>
    %cst_56 = arith.constant 9.99999974E-6 : f32
    %139 = vector.broadcast %cst_56 : f32 to vector<16x1xf32>
    %140 = arith.addf %136, %139 : vector<16x1xf32>
    %141 = math.rsqrt %140 : vector<16x1xf32>
    %142 = vector.broadcast %141 : vector<16x1xf32> to vector<16x32xf32>
    %143 = arith.mulf %138, %142 : vector<16x32xf32>
    %144 = vector.broadcast %120 : vector<1x32xf32> to vector<16x32xf32>
    %145 = arith.mulf %143, %144 : vector<16x32xf32>
    %146 = vector.broadcast %121 : vector<1x32xf32> to vector<16x32xf32>
    %147 = arith.addf %145, %146 : vector<16x32xf32>
    %148 = arith.truncf %147 : vector<16x32xf32> to vector<16x32xbf16>
    %cst_57 = arith.constant dense<0.000000e+00> : vector<16x64xf32>
    %149 = tpu.matmul %148, %122, %cst_57 {dimension_numbers = #tpu.dot_dimension_numbers<[1], [0], [0], [1], [0, 0, 1, 1], [], []>} : vector<16x32xbf16>, vector<32x64xbf16>, vector<16x64xf32> -> vector<16x64xf32>
    %150 = vector.broadcast %123 : vector<1x64xf32> to vector<16x64xf32>
    %151 = arith.addf %149, %150 : vector<16x64xf32>
    %cst_58 = arith.constant 0.000000e+00 : f32
    %152 = vector.broadcast %cst_58 : f32 to vector<16x64xf32>
    %153 = arith.maximumf %151, %152 : vector<16x64xf32>
    %154 = arith.truncf %153 : vector<16x64xf32> to vector<16x64xbf16>
    %cst_59 = arith.constant dense<0.000000e+00> : vector<16x32xf32>
    %155 = tpu.matmul %154, %124, %cst_59 {dimension_numbers = #tpu.dot_dimension_numbers<[1], [0], [0], [1], [0, 0, 1, 1], [], []>} : vector<16x64xbf16>, vector<64x32xbf16>, vector<16x32xf32> -> vector<16x32xf32>
    %156 = arith.addf %119, %155 : vector<16x32xf32>
    %157 = vector.broadcast %125 : vector<1x32xf32> to vector<16x32xf32>
    %158 = arith.addf %156, %157 : vector<16x32xf32>
    %c0_60 = arith.constant 0 : index
    %c0_61 = arith.constant 0 : index
    %159 = vector.load %arg2[%c0_60, %c0_61] : memref<16x1xi32, #tpu.memory_space<vmem>>, vector<16x1xi32>
    %160 = tpu.iota {dimensions = array<i32: 1>} : vector<16x128xi32>
    %161 = vector.broadcast %159 : vector<16x1xi32> to vector<16x128xi32>
    %162 = arith.cmpi eq, %160, %161 : vector<16x128xi32>
    %163 = arith.extui %162 : vector<16x128xi1> to vector<16x128xi32>
    %164 = arith.sitofp %163 : vector<16x128xi32> to vector<16x128xf32>
    %cst_62 = arith.constant dense<0.000000e+00> : vector<16x32xf32>
    %165 = tpu.matmul %164, %21, %cst_62 {dimension_numbers = #tpu.dot_dimension_numbers<[1], [0], [0], [1], [0, 0, 1, 1], [], []>} : vector<16x128xf32>, vector<128x32xf32>, vector<16x32xf32> -> vector<16x32xf32>
    %166 = vector.shape_cast %165 : vector<16x32xf32> to vector<2x8x32xf32>
    %c0_63 = arith.constant 0 : index
    %c0_64 = arith.constant 0 : index
    %167 = vector.load %arg8[%c0_63, %c0_64] : memref<8x32xf32, #tpu.memory_space<vmem>>, vector<8x32xf32>
    %168 = vector.shape_cast %167 : vector<8x32xf32> to vector<1x8x32xf32>
    %169 = vector.broadcast %168 : vector<1x8x32xf32> to vector<2x8x32xf32>
    %170 = arith.addf %166, %169 : vector<2x8x32xf32>
    %171 = vector.shape_cast %170 : vector<2x8x32xf32> to vector<16x32xf32>
    %c0_65 = arith.constant 0 : index
    %c0_66 = arith.constant 0 : index
    %172 = vector.load %arg21[%c0_65, %c0_66] : memref<1x32xf32, #tpu.memory_space<vmem>>, vector<1x32xf32>
    %c0_67 = arith.constant 0 : index
    %c0_68 = arith.constant 0 : index
    %173 = vector.load %arg22[%c0_67, %c0_68] : memref<1x32xf32, #tpu.memory_space<vmem>>, vector<1x32xf32>
    %c0_69 = arith.constant 0 : index
    %c0_70 = arith.constant 0 : index
    %174 = vector.load %arg23[%c0_69, %c0_70] : memref<32x96xbf16, #tpu.memory_space<vmem>>, vector<32x96xbf16>
    %c0_71 = arith.constant 0 : index
    %c0_72 = arith.constant 0 : index
    %175 = vector.load %arg24[%c0_71, %c0_72] : memref<1x96xf32, #tpu.memory_space<vmem>>, vector<1x96xf32>
    %c0_73 = arith.constant 0 : index
    %c0_74 = arith.constant 0 : index
    %176 = vector.load %arg25[%c0_73, %c0_74] : memref<32x32xbf16, #tpu.memory_space<vmem>>, vector<32x32xbf16>
    %c0_75 = arith.constant 0 : index
    %c0_76 = arith.constant 0 : index
    %177 = vector.load %arg26[%c0_75, %c0_76] : memref<1x32xf32, #tpu.memory_space<vmem>>, vector<1x32xf32>
    %cst_77 = arith.constant dense<0.000000e+00> : vector<16xf32>
    %178 = vector.multi_reduction <add>, %171, %cst_77 [1] : vector<16x32xf32> to vector<16xf32>
    %179 = vector.shape_cast %178 : vector<16xf32> to vector<16x1xf32>
    %cst_78 = arith.constant 3.200000e+01 : f32
    %180 = vector.broadcast %cst_78 : f32 to vector<16x1xf32>
    %181 = arith.divf %179, %180 : vector<16x1xf32>
    %182 = vector.broadcast %181 : vector<16x1xf32> to vector<16x32xf32>
    %183 = arith.subf %171, %182 : vector<16x32xf32>
    %184 = arith.mulf %183, %183 : vector<16x32xf32>
    %cst_79 = arith.constant dense<0.000000e+00> : vector<16xf32>
    %185 = vector.multi_reduction <add>, %184, %cst_79 [1] : vector<16x32xf32> to vector<16xf32>
    %186 = vector.shape_cast %185 : vector<16xf32> to vector<16x1xf32>
    %cst_80 = arith.constant 3.200000e+01 : f32
    %187 = vector.broadcast %cst_80 : f32 to vector<16x1xf32>
    %188 = arith.divf %186, %187 : vector<16x1xf32>
    %189 = vector.broadcast %181 : vector<16x1xf32> to vector<16x32xf32>
    %190 = arith.subf %171, %189 : vector<16x32xf32>
    %cst_81 = arith.constant 9.99999974E-6 : f32
    %191 = vector.broadcast %cst_81 : f32 to vector<16x1xf32>
    %192 = arith.addf %188, %191 : vector<16x1xf32>
    %193 = math.rsqrt %192 : vector<16x1xf32>
    %194 = vector.broadcast %193 : vector<16x1xf32> to vector<16x32xf32>
    %195 = arith.mulf %190, %194 : vector<16x32xf32>
    %196 = vector.broadcast %172 : vector<1x32xf32> to vector<16x32xf32>
    %197 = arith.mulf %195, %196 : vector<16x32xf32>
    %198 = vector.broadcast %173 : vector<1x32xf32> to vector<16x32xf32>
    %199 = arith.addf %197, %198 : vector<16x32xf32>
    %200 = arith.truncf %199 : vector<16x32xf32> to vector<16x32xbf16>
    %cst_82 = arith.constant dense<0.000000e+00> : vector<16x96xf32>
    %201 = tpu.matmul %200, %174, %cst_82 {dimension_numbers = #tpu.dot_dimension_numbers<[1], [0], [0], [1], [0, 0, 1, 1], [], []>} : vector<16x32xbf16>, vector<32x96xbf16>, vector<16x96xf32> -> vector<16x96xf32>
    %202 = vector.broadcast %175 : vector<1x96xf32> to vector<16x96xf32>
    %203 = arith.addf %201, %202 : vector<16x96xf32>
    %204 = vector.extract_strided_slice %203 {offsets = [0, 0], sizes = [16, 32], strides = [1, 1]} : vector<16x96xf32> to vector<16x32xf32>
    %205 = vector.extract_strided_slice %203 {offsets = [0, 32], sizes = [16, 64], strides = [1, 1]} : vector<16x96xf32> to vector<16x64xf32>
    %206 = vector.shape_cast %204 : vector<16x32xf32> to vector<2x8x32xf32>
    %207 = vector.shape_cast %205 : vector<16x64xf32> to vector<2x8x64xf32>
    %208 = vector.extract_strided_slice %206 {offsets = [0, 0, 0], sizes = [2, 8, 16], strides = [1, 1, 1]} : vector<2x8x32xf32> to vector<2x8x16xf32>
    %209 = arith.truncf %208 : vector<2x8x16xf32> to vector<2x8x16xbf16>
    %210 = vector.extract_strided_slice %207 {offsets = [0, 0, 0], sizes = [2, 8, 16], strides = [1, 1, 1]} : vector<2x8x64xf32> to vector<2x8x16xf32>
    %211 = arith.truncf %210 : vector<2x8x16xf32> to vector<2x8x16xbf16>
    %212 = vector.extract_strided_slice %207 {offsets = [0, 0, 32], sizes = [2, 8, 16], strides = [1, 1, 1]} : vector<2x8x64xf32> to vector<2x8x16xf32>
    %213 = arith.truncf %212 : vector<2x8x16xf32> to vector<2x8x16xbf16>
    "tpu.trace_start"() <{level = 10 : i32, message = "bqd,bkd->bqk"}> : () -> ()
    %cst_83 = arith.constant dense<0.000000e+00> : vector<2x8x8xf32>
    %214 = tpu.matmul %209, %211, %cst_83 {dimension_numbers = #tpu.dot_dimension_numbers<[2], [2], [1], [1], [0, 0, 0, 1, 1, 1], [0], [0]>} : vector<2x8x16xbf16>, vector<2x8x16xbf16>, vector<2x8x8xf32> -> vector<2x8x8xf32>
    "tpu.trace_stop"() : () -> ()
    %215 = arith.addf %214, %20 : vector<2x8x8xf32>
    %cst_84 = arith.constant dense<0xFF800000> : vector<2x8xf32>
    %216 = vector.multi_reduction <maximumf>, %215, %cst_84 [2] : vector<2x8x8xf32> to vector<2x8xf32>
    %217 = vector.shape_cast %216 : vector<2x8xf32> to vector<2x8x1xf32>
    %218 = vector.broadcast %217 : vector<2x8x1xf32> to vector<2x8x8xf32>
    %219 = arith.subf %215, %218 : vector<2x8x8xf32>
    %220 = math.exp %219 : vector<2x8x8xf32>
    %cst_85 = arith.constant dense<0.000000e+00> : vector<2x8xf32>
    %221 = vector.multi_reduction <add>, %220, %cst_85 [2] : vector<2x8x8xf32> to vector<2x8xf32>
    %222 = vector.shape_cast %221 : vector<2x8xf32> to vector<2x8x1xf32>
    %223 = tpu.reciprocal %222 {approx = true} : vector<2x8x1xf32> -> vector<2x8x1xf32>
    %224 = vector.broadcast %223 : vector<2x8x1xf32> to vector<2x8x8xf32>
    %225 = arith.mulf %220, %224 : vector<2x8x8xf32>
    %226 = arith.truncf %225 : vector<2x8x8xf32> to vector<2x8x8xbf16>
    "tpu.trace_start"() <{level = 10 : i32, message = "bqk,bkd->bqd"}> : () -> ()
    %cst_86 = arith.constant dense<0.000000e+00> : vector<2x8x16xf32>
    %227 = tpu.matmul %226, %213, %cst_86 {dimension_numbers = #tpu.dot_dimension_numbers<[2], [1], [1], [2], [0, 0, 0, 1, 1, 2], [0], [0]>} : vector<2x8x8xbf16>, vector<2x8x16xbf16>, vector<2x8x16xf32> -> vector<2x8x16xf32>
    "tpu.trace_stop"() : () -> ()
    %228 = vector.extract_strided_slice %206 {offsets = [0, 0, 16], sizes = [2, 8, 16], strides = [1, 1, 1]} : vector<2x8x32xf32> to vector<2x8x16xf32>
    %229 = arith.truncf %228 : vector<2x8x16xf32> to vector<2x8x16xbf16>
    %230 = vector.extract_strided_slice %207 {offsets = [0, 0, 16], sizes = [2, 8, 16], strides = [1, 1, 1]} : vector<2x8x64xf32> to vector<2x8x16xf32>
    %231 = arith.truncf %230 : vector<2x8x16xf32> to vector<2x8x16xbf16>
    %232 = vector.extract_strided_slice %207 {offsets = [0, 0, 48], sizes = [2, 8, 16], strides = [1, 1, 1]} : vector<2x8x64xf32> to vector<2x8x16xf32>
    %233 = arith.truncf %232 : vector<2x8x16xf32> to vector<2x8x16xbf16>
    "tpu.trace_start"() <{level = 10 : i32, message = "bqd,bkd->bqk"}> : () -> ()
    %cst_87 = arith.constant dense<0.000000e+00> : vector<2x8x8xf32>
    %234 = tpu.matmul %229, %231, %cst_87 {dimension_numbers = #tpu.dot_dimension_numbers<[2], [2], [1], [1], [0, 0, 0, 1, 1, 1], [0], [0]>} : vector<2x8x16xbf16>, vector<2x8x16xbf16>, vector<2x8x8xf32> -> vector<2x8x8xf32>
    "tpu.trace_stop"() : () -> ()
    %235 = arith.addf %234, %20 : vector<2x8x8xf32>
    %cst_88 = arith.constant dense<0xFF800000> : vector<2x8xf32>
    %236 = vector.multi_reduction <maximumf>, %235, %cst_88 [2] : vector<2x8x8xf32> to vector<2x8xf32>
    %237 = vector.shape_cast %236 : vector<2x8xf32> to vector<2x8x1xf32>
    %238 = vector.broadcast %237 : vector<2x8x1xf32> to vector<2x8x8xf32>
    %239 = arith.subf %235, %238 : vector<2x8x8xf32>
    %240 = math.exp %239 : vector<2x8x8xf32>
    %cst_89 = arith.constant dense<0.000000e+00> : vector<2x8xf32>
    %241 = vector.multi_reduction <add>, %240, %cst_89 [2] : vector<2x8x8xf32> to vector<2x8xf32>
    %242 = vector.shape_cast %241 : vector<2x8xf32> to vector<2x8x1xf32>
    %243 = tpu.reciprocal %242 {approx = true} : vector<2x8x1xf32> -> vector<2x8x1xf32>
    %244 = vector.broadcast %243 : vector<2x8x1xf32> to vector<2x8x8xf32>
    %245 = arith.mulf %240, %244 : vector<2x8x8xf32>
    %246 = arith.truncf %245 : vector<2x8x8xf32> to vector<2x8x8xbf16>
    "tpu.trace_start"() <{level = 10 : i32, message = "bqk,bkd->bqd"}> : () -> ()
    %cst_90 = arith.constant dense<0.000000e+00> : vector<2x8x16xf32>
    %247 = tpu.matmul %246, %233, %cst_90 {dimension_numbers = #tpu.dot_dimension_numbers<[2], [1], [1], [2], [0, 0, 0, 1, 1, 2], [0], [0]>} : vector<2x8x8xbf16>, vector<2x8x16xbf16>, vector<2x8x16xf32> -> vector<2x8x16xf32>
    "tpu.trace_stop"() : () -> ()
    %248 = tpu.concatenate %227, %247 in 2 : vector<2x8x16xf32>, vector<2x8x16xf32> -> vector<2x8x32xf32>
    %249 = vector.shape_cast %248 : vector<2x8x32xf32> to vector<16x32xf32>
    %250 = arith.truncf %249 : vector<16x32xf32> to vector<16x32xbf16>
    %cst_91 = arith.constant dense<0.000000e+00> : vector<16x32xf32>
    %251 = tpu.matmul %250, %176, %cst_91 {dimension_numbers = #tpu.dot_dimension_numbers<[1], [0], [0], [1], [0, 0, 1, 1], [], []>} : vector<16x32xbf16>, vector<32x32xbf16>, vector<16x32xf32> -> vector<16x32xf32>
    %252 = vector.broadcast %177 : vector<1x32xf32> to vector<16x32xf32>
    %253 = arith.addf %251, %252 : vector<16x32xf32>
    %254 = arith.addf %171, %253 : vector<16x32xf32>
    %c0_92 = arith.constant 0 : index
    %c0_93 = arith.constant 0 : index
    %255 = vector.load %arg27[%c0_92, %c0_93] : memref<1x32xf32, #tpu.memory_space<vmem>>, vector<1x32xf32>
    %c0_94 = arith.constant 0 : index
    %c0_95 = arith.constant 0 : index
    %256 = vector.load %arg28[%c0_94, %c0_95] : memref<1x32xf32, #tpu.memory_space<vmem>>, vector<1x32xf32>
    %c0_96 = arith.constant 0 : index
    %c0_97 = arith.constant 0 : index
    %257 = vector.load %arg29[%c0_96, %c0_97] : memref<32x32xbf16, #tpu.memory_space<vmem>>, vector<32x32xbf16>
    %c0_98 = arith.constant 0 : index
    %c0_99 = arith.constant 0 : index
    %258 = vector.load %arg30[%c0_98, %c0_99] : memref<1x32xf32, #tpu.memory_space<vmem>>, vector<1x32xf32>
    %c0_100 = arith.constant 0 : index
    %c0_101 = arith.constant 0 : index
    %259 = vector.load %arg31[%c0_100, %c0_101] : memref<32x64xbf16, #tpu.memory_space<vmem>>, vector<32x64xbf16>
    %c0_102 = arith.constant 0 : index
    %c0_103 = arith.constant 0 : index
    %260 = vector.load %arg32[%c0_102, %c0_103] : memref<1x64xf32, #tpu.memory_space<vmem>>, vector<1x64xf32>
    %c0_104 = arith.constant 0 : index
    %c0_105 = arith.constant 0 : index
    %261 = vector.load %arg33[%c0_104, %c0_105] : memref<32x32xbf16, #tpu.memory_space<vmem>>, vector<32x32xbf16>
    %c0_106 = arith.constant 0 : index
    %c0_107 = arith.constant 0 : index
    %262 = vector.load %arg34[%c0_106, %c0_107] : memref<1x32xf32, #tpu.memory_space<vmem>>, vector<1x32xf32>
    %cst_108 = arith.constant dense<0.000000e+00> : vector<16xf32>
    %263 = vector.multi_reduction <add>, %254, %cst_108 [1] : vector<16x32xf32> to vector<16xf32>
    %264 = vector.shape_cast %263 : vector<16xf32> to vector<16x1xf32>
    %cst_109 = arith.constant 3.200000e+01 : f32
    %265 = vector.broadcast %cst_109 : f32 to vector<16x1xf32>
    %266 = arith.divf %264, %265 : vector<16x1xf32>
    %267 = vector.broadcast %266 : vector<16x1xf32> to vector<16x32xf32>
    %268 = arith.subf %254, %267 : vector<16x32xf32>
    %269 = arith.mulf %268, %268 : vector<16x32xf32>
    %cst_110 = arith.constant dense<0.000000e+00> : vector<16xf32>
    %270 = vector.multi_reduction <add>, %269, %cst_110 [1] : vector<16x32xf32> to vector<16xf32>
    %271 = vector.shape_cast %270 : vector<16xf32> to vector<16x1xf32>
    %cst_111 = arith.constant 3.200000e+01 : f32
    %272 = vector.broadcast %cst_111 : f32 to vector<16x1xf32>
    %273 = arith.divf %271, %272 : vector<16x1xf32>
    %274 = vector.broadcast %266 : vector<16x1xf32> to vector<16x32xf32>
    %275 = arith.subf %254, %274 : vector<16x32xf32>
    %cst_112 = arith.constant 9.99999974E-6 : f32
    %276 = vector.broadcast %cst_112 : f32 to vector<16x1xf32>
    %277 = arith.addf %273, %276 : vector<16x1xf32>
    %278 = math.rsqrt %277 : vector<16x1xf32>
    %279 = vector.broadcast %278 : vector<16x1xf32> to vector<16x32xf32>
    %280 = arith.mulf %275, %279 : vector<16x32xf32>
    %281 = vector.broadcast %255 : vector<1x32xf32> to vector<16x32xf32>
    %282 = arith.mulf %280, %281 : vector<16x32xf32>
    %283 = vector.broadcast %256 : vector<1x32xf32> to vector<16x32xf32>
    %284 = arith.addf %282, %283 : vector<16x32xf32>
    %285 = arith.truncf %284 : vector<16x32xf32> to vector<16x32xbf16>
    %cst_113 = arith.constant dense<0.000000e+00> : vector<16x32xf32>
    %286 = tpu.matmul %285, %257, %cst_113 {dimension_numbers = #tpu.dot_dimension_numbers<[1], [0], [0], [1], [0, 0, 1, 1], [], []>} : vector<16x32xbf16>, vector<32x32xbf16>, vector<16x32xf32> -> vector<16x32xf32>
    %287 = vector.broadcast %258 : vector<1x32xf32> to vector<16x32xf32>
    %288 = arith.addf %286, %287 : vector<16x32xf32>
    %289 = arith.truncf %158 : vector<16x32xf32> to vector<16x32xbf16>
    %cst_114 = arith.constant dense<0.000000e+00> : vector<16x64xf32>
    %290 = tpu.matmul %289, %259, %cst_114 {dimension_numbers = #tpu.dot_dimension_numbers<[1], [0], [0], [1], [0, 0, 1, 1], [], []>} : vector<16x32xbf16>, vector<32x64xbf16>, vector<16x64xf32> -> vector<16x64xf32>
    %291 = vector.broadcast %260 : vector<1x64xf32> to vector<16x64xf32>
    %292 = arith.addf %290, %291 : vector<16x64xf32>
    %293 = vector.shape_cast %288 : vector<16x32xf32> to vector<2x8x32xf32>
    %294 = vector.shape_cast %292 : vector<16x64xf32> to vector<2x8x64xf32>
    %295 = vector.extract_strided_slice %293 {offsets = [0, 0, 0], sizes = [2, 8, 16], strides = [1, 1, 1]} : vector<2x8x32xf32> to vector<2x8x16xf32>
    %296 = arith.truncf %295 : vector<2x8x16xf32> to vector<2x8x16xbf16>
    %297 = vector.extract_strided_slice %294 {offsets = [0, 0, 0], sizes = [2, 8, 16], strides = [1, 1, 1]} : vector<2x8x64xf32> to vector<2x8x16xf32>
    %298 = arith.truncf %297 : vector<2x8x16xf32> to vector<2x8x16xbf16>
    %299 = vector.extract_strided_slice %294 {offsets = [0, 0, 32], sizes = [2, 8, 16], strides = [1, 1, 1]} : vector<2x8x64xf32> to vector<2x8x16xf32>
    %300 = arith.truncf %299 : vector<2x8x16xf32> to vector<2x8x16xbf16>
    "tpu.trace_start"() <{level = 10 : i32, message = "bqd,bkd->bqk"}> : () -> ()
    %cst_115 = arith.constant dense<0.000000e+00> : vector<2x8x8xf32>
    %301 = tpu.matmul %296, %298, %cst_115 {dimension_numbers = #tpu.dot_dimension_numbers<[2], [2], [1], [1], [0, 0, 0, 1, 1, 1], [0], [0]>} : vector<2x8x16xbf16>, vector<2x8x16xbf16>, vector<2x8x8xf32> -> vector<2x8x8xf32>
    "tpu.trace_stop"() : () -> ()
    %302 = vector.broadcast %5 : vector<2x1x8xf32> to vector<2x8x8xf32>
    %303 = arith.addf %301, %302 : vector<2x8x8xf32>
    %cst_116 = arith.constant dense<0xFF800000> : vector<2x8xf32>
    %304 = vector.multi_reduction <maximumf>, %303, %cst_116 [2] : vector<2x8x8xf32> to vector<2x8xf32>
    %305 = vector.shape_cast %304 : vector<2x8xf32> to vector<2x8x1xf32>
    %306 = vector.broadcast %305 : vector<2x8x1xf32> to vector<2x8x8xf32>
    %307 = arith.subf %303, %306 : vector<2x8x8xf32>
    %308 = math.exp %307 : vector<2x8x8xf32>
    %cst_117 = arith.constant dense<0.000000e+00> : vector<2x8xf32>
    %309 = vector.multi_reduction <add>, %308, %cst_117 [2] : vector<2x8x8xf32> to vector<2x8xf32>
    %310 = vector.shape_cast %309 : vector<2x8xf32> to vector<2x8x1xf32>
    %311 = tpu.reciprocal %310 {approx = true} : vector<2x8x1xf32> -> vector<2x8x1xf32>
    %312 = vector.broadcast %311 : vector<2x8x1xf32> to vector<2x8x8xf32>
    %313 = arith.mulf %308, %312 : vector<2x8x8xf32>
    %314 = arith.truncf %313 : vector<2x8x8xf32> to vector<2x8x8xbf16>
    "tpu.trace_start"() <{level = 10 : i32, message = "bqk,bkd->bqd"}> : () -> ()
    %cst_118 = arith.constant dense<0.000000e+00> : vector<2x8x16xf32>
    %315 = tpu.matmul %314, %300, %cst_118 {dimension_numbers = #tpu.dot_dimension_numbers<[2], [1], [1], [2], [0, 0, 0, 1, 1, 2], [0], [0]>} : vector<2x8x8xbf16>, vector<2x8x16xbf16>, vector<2x8x16xf32> -> vector<2x8x16xf32>
    "tpu.trace_stop"() : () -> ()
    %316 = vector.extract_strided_slice %293 {offsets = [0, 0, 16], sizes = [2, 8, 16], strides = [1, 1, 1]} : vector<2x8x32xf32> to vector<2x8x16xf32>
    %317 = arith.truncf %316 : vector<2x8x16xf32> to vector<2x8x16xbf16>
    %318 = vector.extract_strided_slice %294 {offsets = [0, 0, 16], sizes = [2, 8, 16], strides = [1, 1, 1]} : vector<2x8x64xf32> to vector<2x8x16xf32>
    %319 = arith.truncf %318 : vector<2x8x16xf32> to vector<2x8x16xbf16>
    %320 = vector.extract_strided_slice %294 {offsets = [0, 0, 48], sizes = [2, 8, 16], strides = [1, 1, 1]} : vector<2x8x64xf32> to vector<2x8x16xf32>
    %321 = arith.truncf %320 : vector<2x8x16xf32> to vector<2x8x16xbf16>
    "tpu.trace_start"() <{level = 10 : i32, message = "bqd,bkd->bqk"}> : () -> ()
    %cst_119 = arith.constant dense<0.000000e+00> : vector<2x8x8xf32>
    %322 = tpu.matmul %317, %319, %cst_119 {dimension_numbers = #tpu.dot_dimension_numbers<[2], [2], [1], [1], [0, 0, 0, 1, 1, 1], [0], [0]>} : vector<2x8x16xbf16>, vector<2x8x16xbf16>, vector<2x8x8xf32> -> vector<2x8x8xf32>
    "tpu.trace_stop"() : () -> ()
    %323 = vector.broadcast %5 : vector<2x1x8xf32> to vector<2x8x8xf32>
    %324 = arith.addf %322, %323 : vector<2x8x8xf32>
    %cst_120 = arith.constant dense<0xFF800000> : vector<2x8xf32>
    %325 = vector.multi_reduction <maximumf>, %324, %cst_120 [2] : vector<2x8x8xf32> to vector<2x8xf32>
    %326 = vector.shape_cast %325 : vector<2x8xf32> to vector<2x8x1xf32>
    %327 = vector.broadcast %326 : vector<2x8x1xf32> to vector<2x8x8xf32>
    %328 = arith.subf %324, %327 : vector<2x8x8xf32>
    %329 = math.exp %328 : vector<2x8x8xf32>
    %cst_121 = arith.constant dense<0.000000e+00> : vector<2x8xf32>
    %330 = vector.multi_reduction <add>, %329, %cst_121 [2] : vector<2x8x8xf32> to vector<2x8xf32>
    %331 = vector.shape_cast %330 : vector<2x8xf32> to vector<2x8x1xf32>
    %332 = tpu.reciprocal %331 {approx = true} : vector<2x8x1xf32> -> vector<2x8x1xf32>
    %333 = vector.broadcast %332 : vector<2x8x1xf32> to vector<2x8x8xf32>
    %334 = arith.mulf %329, %333 : vector<2x8x8xf32>
    %335 = arith.truncf %334 : vector<2x8x8xf32> to vector<2x8x8xbf16>
    "tpu.trace_start"() <{level = 10 : i32, message = "bqk,bkd->bqd"}> : () -> ()
    %cst_122 = arith.constant dense<0.000000e+00> : vector<2x8x16xf32>
    %336 = tpu.matmul %335, %321, %cst_122 {dimension_numbers = #tpu.dot_dimension_numbers<[2], [1], [1], [2], [0, 0, 0, 1, 1, 2], [0], [0]>} : vector<2x8x8xbf16>, vector<2x8x16xbf16>, vector<2x8x16xf32> -> vector<2x8x16xf32>
    "tpu.trace_stop"() : () -> ()
    %337 = tpu.concatenate %315, %336 in 2 : vector<2x8x16xf32>, vector<2x8x16xf32> -> vector<2x8x32xf32>
    %338 = vector.shape_cast %337 : vector<2x8x32xf32> to vector<16x32xf32>
    %339 = arith.truncf %338 : vector<16x32xf32> to vector<16x32xbf16>
    %cst_123 = arith.constant dense<0.000000e+00> : vector<16x32xf32>
    %340 = tpu.matmul %339, %261, %cst_123 {dimension_numbers = #tpu.dot_dimension_numbers<[1], [0], [0], [1], [0, 0, 1, 1], [], []>} : vector<16x32xbf16>, vector<32x32xbf16>, vector<16x32xf32> -> vector<16x32xf32>
    %341 = vector.broadcast %262 : vector<1x32xf32> to vector<16x32xf32>
    %342 = arith.addf %340, %341 : vector<16x32xf32>
    %343 = arith.addf %254, %342 : vector<16x32xf32>
    %c0_124 = arith.constant 0 : index
    %c0_125 = arith.constant 0 : index
    %344 = vector.load %arg35[%c0_124, %c0_125] : memref<1x32xf32, #tpu.memory_space<vmem>>, vector<1x32xf32>
    %c0_126 = arith.constant 0 : index
    %c0_127 = arith.constant 0 : index
    %345 = vector.load %arg36[%c0_126, %c0_127] : memref<1x32xf32, #tpu.memory_space<vmem>>, vector<1x32xf32>
    %c0_128 = arith.constant 0 : index
    %c0_129 = arith.constant 0 : index
    %346 = vector.load %arg37[%c0_128, %c0_129] : memref<32x64xbf16, #tpu.memory_space<vmem>>, vector<32x64xbf16>
    %c0_130 = arith.constant 0 : index
    %c0_131 = arith.constant 0 : index
    %347 = vector.load %arg38[%c0_130, %c0_131] : memref<1x64xf32, #tpu.memory_space<vmem>>, vector<1x64xf32>
    %c0_132 = arith.constant 0 : index
    %c0_133 = arith.constant 0 : index
    %348 = vector.load %arg39[%c0_132, %c0_133] : memref<64x32xbf16, #tpu.memory_space<vmem>>, vector<64x32xbf16>
    %c0_134 = arith.constant 0 : index
    %c0_135 = arith.constant 0 : index
    %349 = vector.load %arg40[%c0_134, %c0_135] : memref<1x32xf32, #tpu.memory_space<vmem>>, vector<1x32xf32>
    %cst_136 = arith.constant dense<0.000000e+00> : vector<16xf32>
    %350 = vector.multi_reduction <add>, %343, %cst_136 [1] : vector<16x32xf32> to vector<16xf32>
    %351 = vector.shape_cast %350 : vector<16xf32> to vector<16x1xf32>
    %cst_137 = arith.constant 3.200000e+01 : f32
    %352 = vector.broadcast %cst_137 : f32 to vector<16x1xf32>
    %353 = arith.divf %351, %352 : vector<16x1xf32>
    %354 = vector.broadcast %353 : vector<16x1xf32> to vector<16x32xf32>
    %355 = arith.subf %343, %354 : vector<16x32xf32>
    %356 = arith.mulf %355, %355 : vector<16x32xf32>
    %cst_138 = arith.constant dense<0.000000e+00> : vector<16xf32>
    %357 = vector.multi_reduction <add>, %356, %cst_138 [1] : vector<16x32xf32> to vector<16xf32>
    %358 = vector.shape_cast %357 : vector<16xf32> to vector<16x1xf32>
    %cst_139 = arith.constant 3.200000e+01 : f32
    %359 = vector.broadcast %cst_139 : f32 to vector<16x1xf32>
    %360 = arith.divf %358, %359 : vector<16x1xf32>
    %361 = vector.broadcast %353 : vector<16x1xf32> to vector<16x32xf32>
    %362 = arith.subf %343, %361 : vector<16x32xf32>
    %cst_140 = arith.constant 9.99999974E-6 : f32
    %363 = vector.broadcast %cst_140 : f32 to vector<16x1xf32>
    %364 = arith.addf %360, %363 : vector<16x1xf32>
    %365 = math.rsqrt %364 : vector<16x1xf32>
    %366 = vector.broadcast %365 : vector<16x1xf32> to vector<16x32xf32>
    %367 = arith.mulf %362, %366 : vector<16x32xf32>
    %368 = vector.broadcast %344 : vector<1x32xf32> to vector<16x32xf32>
    %369 = arith.mulf %367, %368 : vector<16x32xf32>
    %370 = vector.broadcast %345 : vector<1x32xf32> to vector<16x32xf32>
    %371 = arith.addf %369, %370 : vector<16x32xf32>
    %372 = arith.truncf %371 : vector<16x32xf32> to vector<16x32xbf16>
    %cst_141 = arith.constant dense<0.000000e+00> : vector<16x64xf32>
    %373 = tpu.matmul %372, %346, %cst_141 {dimension_numbers = #tpu.dot_dimension_numbers<[1], [0], [0], [1], [0, 0, 1, 1], [], []>} : vector<16x32xbf16>, vector<32x64xbf16>, vector<16x64xf32> -> vector<16x64xf32>
    %374 = vector.broadcast %347 : vector<1x64xf32> to vector<16x64xf32>
    %375 = arith.addf %373, %374 : vector<16x64xf32>
    %cst_142 = arith.constant 0.000000e+00 : f32
    %376 = vector.broadcast %cst_142 : f32 to vector<16x64xf32>
    %377 = arith.maximumf %375, %376 : vector<16x64xf32>
    %378 = arith.truncf %377 : vector<16x64xf32> to vector<16x64xbf16>
    %cst_143 = arith.constant dense<0.000000e+00> : vector<16x32xf32>
    %379 = tpu.matmul %378, %348, %cst_143 {dimension_numbers = #tpu.dot_dimension_numbers<[1], [0], [0], [1], [0, 0, 1, 1], [], []>} : vector<16x64xbf16>, vector<64x32xbf16>, vector<16x32xf32> -> vector<16x32xf32>
    %380 = arith.addf %343, %379 : vector<16x32xf32>
    %381 = vector.broadcast %349 : vector<1x32xf32> to vector<16x32xf32>
    %382 = arith.addf %380, %381 : vector<16x32xf32>
    %383 = arith.truncf %382 : vector<16x32xf32> to vector<16x32xbf16>
    %c0_144 = arith.constant 0 : index
    %c0_145 = arith.constant 0 : index
    %384 = vector.load %arg41[%c0_144, %c0_145] : memref<32x128xbf16, #tpu.memory_space<vmem>>, vector<32x128xbf16>
    %cst_146 = arith.constant dense<0.000000e+00> : vector<16x128xf32>
    %385 = tpu.matmul %383, %384, %cst_146 {dimension_numbers = #tpu.dot_dimension_numbers<[1], [0], [0], [1], [0, 0, 1, 1], [], []>} : vector<16x32xbf16>, vector<32x128xbf16>, vector<16x128xf32> -> vector<16x128xf32>
    %c0_147 = arith.constant 0 : index
    %c0_148 = arith.constant 0 : index
    %386 = vector.load %arg42[%c0_147, %c0_148] : memref<1x128xf32, #tpu.memory_space<vmem>>, vector<1x128xf32>
    %387 = vector.broadcast %386 : vector<1x128xf32> to vector<16x128xf32>
    %388 = arith.addf %385, %387 : vector<16x128xf32>
    %c0_149 = arith.constant 0 : index
    %c0_150 = arith.constant 0 : index
    %389 = vector.load %arg43[%c0_149, %c0_150] : memref<16x128xf32, #tpu.memory_space<vmem>>, vector<16x128xf32>
    tpu.vector_store %arg43[%c0_149, %c0_150], %388 {strides = array<i32>} : memref<16x128xf32, #tpu.memory_space<vmem>>, vector<16x128xf32>,
    %c0_151 = arith.constant 0 : index
    %c0_152 = arith.constant 0 : index
    %390 = vector.load %arg2[%c0_151, %c0_152] : memref<16x1xi32, #tpu.memory_space<vmem>>, vector<16x1xi32>
    %c0_153 = arith.constant 0 : index
    %c0_154 = arith.constant 0 : index
    %391 = vector.load %arg5[%c0_153, %c0_154] : memref<16x1xf32, #tpu.memory_space<vmem>>, vector<16x1xf32>
    %cst_155 = arith.constant dense<0xFF800000> : vector<16xf32>
    %392 = vector.multi_reduction <maximumf>, %388, %cst_155 [1] : vector<16x128xf32> to vector<16xf32>
    %393 = vector.shape_cast %392 : vector<16xf32> to vector<16x1xf32>
    %394 = vector.broadcast %393 : vector<16x1xf32> to vector<16x128xf32>
    %395 = arith.subf %388, %394 : vector<16x128xf32>
    %396 = math.exp %395 : vector<16x128xf32>
    %cst_156 = arith.constant dense<0.000000e+00> : vector<16xf32>
    %397 = vector.multi_reduction <add>, %396, %cst_156 [1] : vector<16x128xf32> to vector<16xf32>
    %398 = vector.shape_cast %397 : vector<16xf32> to vector<16x1xf32>
    %399 = math.log %398 : vector<16x1xf32>
    %400 = arith.addf %393, %399 : vector<16x1xf32>
    %401 = tpu.iota {dimensions = array<i32: 1>} : vector<16x128xi32>
    %402 = vector.broadcast %390 : vector<16x1xi32> to vector<16x128xi32>
    %403 = arith.cmpi eq, %401, %402 : vector<16x128xi32>
    %cst_157 = arith.constant 0.000000e+00 : f32
    %404 = vector.broadcast %cst_157 : f32 to vector<16x128xf32>
    %405 = arith.select %403, %388, %404 : vector<16x128xi1>, vector<16x128xf32>
    %cst_158 = arith.constant dense<0.000000e+00> : vector<16xf32>
    %406 = vector.multi_reduction <add>, %405, %cst_158 [1] : vector<16x128xf32> to vector<16xf32>
    %407 = vector.shape_cast %406 : vector<16xf32> to vector<16x1xf32>
    %408 = arith.subf %400, %407 : vector<16x1xf32>
    %409 = arith.mulf %408, %391 : vector<16x1xf32>
    %410 = vector.shape_cast %409 : vector<16x1xf32> to vector<1x16x1xf32>
    %cst_159 = arith.constant dense<0.000000e+00> : vector<1xf32>
    %411 = vector.multi_reduction <add>, %410, %cst_159 [1, 2] : vector<1x16x1xf32> to vector<1xf32>
    %412 = vector.shape_cast %411 : vector<1xf32> to vector<1x1x1xf32>
    %413 = vector.extract %412[0, 0, 0] : f32 from vector<1x1x1xf32>
    %414 = vector.shape_cast %391 : vector<16x1xf32> to vector<1x16x1xf32>
    %cst_160 = arith.constant dense<0.000000e+00> : vector<1xf32>
    %415 = vector.multi_reduction <add>, %414, %cst_160 [1, 2] : vector<1x16x1xf32> to vector<1xf32>
    %416 = vector.shape_cast %415 : vector<1xf32> to vector<1x1x1xf32>
    %417 = vector.extract %416[0, 0, 0] : f32 from vector<1x1x1xf32>
    %cst_161 = arith.constant 1.000000e+00 : f32
    %418 = arith.maximumf %417, %cst_161 : f32
    %419 = arith.divf %413, %418 : f32
    %c0_162 = arith.constant 0 : index
    %420 = memref.load %arg44[%c0_162] : memref<1xf32, #tpu.memory_space<smem>>
    memref.store %419, %arg44[%c0_162] : memref<1xf32, #tpu.memory_space<smem>>
    return
  }
  func.func @transform_0(%arg0: i32) -> (i32, i32) {
    %c0_i32 = arith.constant 0 : i32
    %c0_i32_0 = arith.constant 0 : i32
    %c0_i32_1 = arith.constant 0 : i32
    return %c0_i32, %c0_i32_0 : i32, i32
  }
  func.func @transform_1(%arg0: i32) -> (i32, i32) {
    %c0_i32 = arith.constant 0 : i32
    %c0_i32_0 = arith.constant 0 : i32
    %c0_i32_1 = arith.constant 0 : i32
    return %c0_i32, %c0_i32_0 : i32, i32
  }
  func.func @transform_2(%arg0: i32) -> (i32, i32) {
    %c0_i32 = arith.constant 0 : i32
    %c0_i32_0 = arith.constant 0 : i32
    %c0_i32_1 = arith.constant 0 : i32
    return %c0_i32, %c0_i32_0 : i32, i32
  }
  func.func @transform_3(%arg0: i32) -> (i32, i32) {
    %c0_i32 = arith.constant 0 : i32
    %c0_i32_0 = arith.constant 0 : i32
    %c0_i32_1 = arith.constant 0 : i32
    return %c0_i32, %c0_i32_0 : i32, i32
  }
  func.func @transform_4(%arg0: i32) -> (i32, i32) {
    %c0_i32 = arith.constant 0 : i32
    %c0_i32_0 = arith.constant 0 : i32
    %c0_i32_1 = arith.constant 0 : i32
    return %c0_i32, %c0_i32_0 : i32, i32
  }
  func.func @transform_5(%arg0: i32) -> (i32, i32) {
    %c0_i32 = arith.constant 0 : i32
    %c0_i32_0 = arith.constant 0 : i32
    %c0_i32_1 = arith.constant 0 : i32
    return %c0_i32, %c0_i32_0 : i32, i32
  }
  func.func @transform_6(%arg0: i32) -> (i32, i32) {
    %c0_i32 = arith.constant 0 : i32
    %c0_i32_0 = arith.constant 0 : i32
    %c0_i32_1 = arith.constant 0 : i32
    return %c0_i32, %c0_i32_0 : i32, i32
  }
  func.func @transform_7(%arg0: i32) -> (i32, i32) {
    %c0_i32 = arith.constant 0 : i32
    %c0_i32_0 = arith.constant 0 : i32
    %c0_i32_1 = arith.constant 0 : i32
    return %c0_i32, %c0_i32_0 : i32, i32
  }
  func.func @transform_8(%arg0: i32) -> (i32, i32) {
    %c0_i32 = arith.constant 0 : i32
    %c0_i32_0 = arith.constant 0 : i32
    %c0_i32_1 = arith.constant 0 : i32
    return %c0_i32, %c0_i32_0 : i32, i32
  }
  func.func @transform_9(%arg0: i32) -> (i32, i32) {
    %c0_i32 = arith.constant 0 : i32
    %c0_i32_0 = arith.constant 0 : i32
    %c0_i32_1 = arith.constant 0 : i32
    return %c0_i32, %c0_i32_0 : i32, i32
  }
  func.func @transform_10(%arg0: i32) -> (i32, i32) {
    %c0_i32 = arith.constant 0 : i32
    %c0_i32_0 = arith.constant 0 : i32
    %c0_i32_1 = arith.constant 0 : i32
    return %c0_i32, %c0_i32_0 : i32, i32
  }
  func.func @transform_11(%arg0: i32) -> (i32, i32) {
    %c0_i32 = arith.constant 0 : i32
    %c0_i32_0 = arith.constant 0 : i32
    %c0_i32_1 = arith.constant 0 : i32
    return %c0_i32, %c0_i32_0 : i32, i32
  }
  func.func @transform_12(%arg0: i32) -> (i32, i32) {
    %c0_i32 = arith.constant 0 : i32
    %c0_i32_0 = arith.constant 0 : i32
    %c0_i32_1 = arith.constant 0 : i32
    return %c0_i32, %c0_i32_0 : i32, i32
  }
  func.func @transform_13(%arg0: i32) -> (i32, i32) {
    %c0_i32 = arith.constant 0 : i32
    %c0_i32_0 = arith.constant 0 : i32
    %c0_i32_1 = arith.constant 0 : i32
    return %c0_i32, %c0_i32_0 : i32, i32
  }
  func.func @transform_14(%arg0: i32) -> (i32, i32) {
    %c0_i32 = arith.constant 0 : i32
    %c0_i32_0 = arith.constant 0 : i32
    %c0_i32_1 = arith.constant 0 : i32
    return %c0_i32, %c0_i32_0 : i32, i32
  }
  func.func @transform_15(%arg0: i32) -> (i32, i32) {
    %c0_i32 = arith.constant 0 : i32
    %c0_i32_0 = arith.constant 0 : i32
    %c0_i32_1 = arith.constant 0 : i32
    return %c0_i32, %c0_i32_0 : i32, i32
  }
  func.func @transform_16(%arg0: i32) -> (i32, i32) {
    %c0_i32 = arith.constant 0 : i32
    %c0_i32_0 = arith.constant 0 : i32
    %c0_i32_1 = arith.constant 0 : i32
    return %c0_i32, %c0_i32_0 : i32, i32
  }
  func.func @transform_17(%arg0: i32) -> (i32, i32) {
    %c0_i32 = arith.constant 0 : i32
    %c0_i32_0 = arith.constant 0 : i32
    %c0_i32_1 = arith.constant 0 : i32
    return %c0_i32, %c0_i32_0 : i32, i32
  }
  func.func @transform_18(%arg0: i32) -> (i32, i32) {
    %c0_i32 = arith.constant 0 : i32
    %c0_i32_0 = arith.constant 0 : i32
    %c0_i32_1 = arith.constant 0 : i32
    return %c0_i32, %c0_i32_0 : i32, i32
  }
  func.func @transform_19(%arg0: i32) -> (i32, i32) {
    %c0_i32 = arith.constant 0 : i32
    %c0_i32_0 = arith.constant 0 : i32
    %c0_i32_1 = arith.constant 0 : i32
    return %c0_i32, %c0_i32_0 : i32, i32
  }
  func.func @transform_20(%arg0: i32) -> (i32, i32) {
    %c0_i32 = arith.constant 0 : i32
    %c0_i32_0 = arith.constant 0 : i32
    %c0_i32_1 = arith.constant 0 : i32
    return %c0_i32, %c0_i32_0 : i32, i32
  }
  func.func @transform_21(%arg0: i32) -> (i32, i32) {
    %c0_i32 = arith.constant 0 : i32
    %c0_i32_0 = arith.constant 0 : i32
    %c0_i32_1 = arith.constant 0 : i32
    return %c0_i32, %c0_i32_0 : i32, i32
  }
  func.func @transform_22(%arg0: i32) -> (i32, i32) {
    %c0_i32 = arith.constant 0 : i32
    %c0_i32_0 = arith.constant 0 : i32
    %c0_i32_1 = arith.constant 0 : i32
    return %c0_i32, %c0_i32_0 : i32, i32
  }
  func.func @transform_23(%arg0: i32) -> (i32, i32) {
    %c0_i32 = arith.constant 0 : i32
    %c0_i32_0 = arith.constant 0 : i32
    %c0_i32_1 = arith.constant 0 : i32
    return %c0_i32, %c0_i32_0 : i32, i32
  }
  func.func @transform_24(%arg0: i32) -> (i32, i32) {
    %c0_i32 = arith.constant 0 : i32
    %c0_i32_0 = arith.constant 0 : i32
    %c0_i32_1 = arith.constant 0 : i32
    return %c0_i32, %c0_i32_0 : i32, i32
  }
  func.func @transform_25(%arg0: i32) -> (i32, i32) {
    %c0_i32 = arith.constant 0 : i32
    %c0_i32_0 = arith.constant 0 : i32
    %c0_i32_1 = arith.constant 0 : i32
    return %c0_i32, %c0_i32_0 : i32, i32
  }
  func.func @transform_26(%arg0: i32) -> (i32, i32) {
    %c0_i32 = arith.constant 0 : i32
    %c0_i32_0 = arith.constant 0 : i32
    %c0_i32_1 = arith.constant 0 : i32
    return %c0_i32, %c0_i32_0 : i32, i32
  }
  func.func @transform_27(%arg0: i32) -> (i32, i32) {
    %c0_i32 = arith.constant 0 : i32
    %c0_i32_0 = arith.constant 0 : i32
    %c0_i32_1 = arith.constant 0 : i32
    return %c0_i32, %c0_i32_0 : i32, i32
  }
  func.func @transform_28(%arg0: i32) -> (i32, i32) {
    %c0_i32 = arith.constant 0 : i32
    %c0_i32_0 = arith.constant 0 : i32
    %c0_i32_1 = arith.constant 0 : i32
    return %c0_i32, %c0_i32_0 : i32, i32
  }
  func.func @transform_29(%arg0: i32) -> (i32, i32) {
    %c0_i32 = arith.constant 0 : i32
    %c0_i32_0 = arith.constant 0 : i32
    %c0_i32_1 = arith.constant 0 : i32
    return %c0_i32, %c0_i32_0 : i32, i32
  }
  func.func @transform_30(%arg0: i32) -> (i32, i32) {
    %c0_i32 = arith.constant 0 : i32
    %c0_i32_0 = arith.constant 0 : i32
    %c0_i32_1 = arith.constant 0 : i32
    return %c0_i32, %c0_i32_0 : i32, i32
  }
  func.func @transform_31(%arg0: i32) -> (i32, i32) {
    %c0_i32 = arith.constant 0 : i32
    %c0_i32_0 = arith.constant 0 : i32
    %c0_i32_1 = arith.constant 0 : i32
    return %c0_i32, %c0_i32_0 : i32, i32
  }
  func.func @transform_32(%arg0: i32) -> (i32, i32) {
    %c0_i32 = arith.constant 0 : i32
    %c0_i32_0 = arith.constant 0 : i32
    %c0_i32_1 = arith.constant 0 : i32
    return %c0_i32, %c0_i32_0 : i32, i32
  }
  func.func @transform_33(%arg0: i32) -> (i32, i32) {
    %c0_i32 = arith.constant 0 : i32
    %c0_i32_0 = arith.constant 0 : i32
    %c0_i32_1 = arith.constant 0 : i32
    return %c0_i32, %c0_i32_0 : i32, i32
  }
  func.func @transform_34(%arg0: i32) -> (i32, i32) {
    %c0_i32 = arith.constant 0 : i32
    %c0_i32_0 = arith.constant 0 : i32
    %c0_i32_1 = arith.constant 0 : i32
    return %c0_i32, %c0_i32_0 : i32, i32
  }
  func.func @transform_35(%arg0: i32) -> (i32, i32) {
    %c0_i32 = arith.constant 0 : i32
    %c0_i32_0 = arith.constant 0 : i32
    %c0_i32_1 = arith.constant 0 : i32
    return %c0_i32, %c0_i32_0 : i32, i32
  }
  func.func @transform_36(%arg0: i32) -> (i32, i32) {
    %c0_i32 = arith.constant 0 : i32
    %c0_i32_0 = arith.constant 0 : i32
    %c0_i32_1 = arith.constant 0 : i32
    return %c0_i32, %c0_i32_0 : i32, i32
  }
  func.func @transform_37(%arg0: i32) -> (i32, i32) {
    %c0_i32 = arith.constant 0 : i32
    %c0_i32_0 = arith.constant 0 : i32
    %c0_i32_1 = arith.constant 0 : i32
    return %c0_i32, %c0_i32_0 : i32, i32
  }
  func.func @transform_38(%arg0: i32) -> (i32, i32) {
    %c0_i32 = arith.constant 0 : i32
    %c0_i32_0 = arith.constant 0 : i32
    %c0_i32_1 = arith.constant 0 : i32
    return %c0_i32, %c0_i32_0 : i32, i32
  }
  func.func @transform_39(%arg0: i32) -> (i32, i32) {
    %c0_i32 = arith.constant 0 : i32
    %c0_i32_0 = arith.constant 0 : i32
    %c0_i32_1 = arith.constant 0 : i32
    return %c0_i32, %c0_i32_0 : i32, i32
  }
  func.func @transform_40(%arg0: i32) -> (i32, i32) {
    %c0_i32 = arith.constant 0 : i32
    %c0_i32_0 = arith.constant 0 : i32
    %c0_i32_1 = arith.constant 0 : i32
    return %c0_i32, %c0_i32_0 : i32, i32
  }
  func.func @transform_41(%arg0: i32) -> (i32, i32) {
    %c0_i32 = arith.constant 0 : i32
    %c0_i32_0 = arith.constant 0 : i32
    %c0_i32_1 = arith.constant 0 : i32
    return %c0_i32, %c0_i32_0 : i32, i32
  }
  func.func @transform_42(%arg0: i32) -> (i32, i32) {
    %c0_i32 = arith.constant 0 : i32
    %c0_i32_0 = arith.constant 0 : i32
    %c0_i32_1 = arith.constant 0 : i32
    return %c0_i32, %c0_i32_0 : i32, i32
  }
  func.func @transform_43(%arg0: i32) -> i32 {
    %c0_i32 = arith.constant 0 : i32
    %c0_i32_0 = arith.constant 0 : i32
    return %c0_i32 : i32
  }
}

</mosaic_0001>

<llo_original>
// kernel: seq2seq_forward.1
$region0: #{seq2seq_forward.1}
  #allocation0 [shape = 'u32[]', space=smem, size = 0x4, offset = 0x4, fixed_abs, tag = 'smem constant byte address 0x4 - core index']
  #allocation1 [shape = 'u32[72,128]{1,0:T(1,128)}', space=vmem, size = 0x9000, scoped, tag = 'internal scratch']
  %s0 = inlined_call_operand.smem [shape: u32[44], index: -1, kind: input, shape index: {}]
  %s1 = sld [smem:[%s0]]
  %s2 = scalar_lea.smem %s0, 1
  %s3 = sld [smem:[%s2]]
  %s4 = scalar_lea.smem %s0, 2
  %s5 = sld [smem:[%s4]]
  %s6 = scalar_lea.smem %s0, 3
  %s7 = sld [smem:[%s6]]
  %s8 = scalar_lea.smem %s0, 4
  %s9 = sld [smem:[%s8]]
  %s10 = scalar_lea.smem %s0, 5
  %s11 = sld [smem:[%s10]]
  %s12 = scalar_lea.smem %s0, 6
  %s13 = sld [smem:[%s12]]
  %s14 = scalar_lea.smem %s0, 7
  %s15 = sld [smem:[%s14]]
  %s16 = scalar_lea.smem %s0, 8
  %s17 = sld [smem:[%s16]]
  %s18 = scalar_lea.smem %s0, 9
  %s19 = sld [smem:[%s18]]
  %s20 = scalar_lea.smem %s0, 10
  %s21 = sld [smem:[%s20]]
  %s22 = scalar_lea.smem %s0, 11
  %s23 = sld [smem:[%s22]]
  %s24 = scalar_lea.smem %s0, 12
  %s25 = sld [smem:[%s24]]
  %s26 = scalar_lea.smem %s0, 13
  %s27 = sld [smem:[%s26]]
  %s28 = scalar_lea.smem %s0, 14
  %s29 = sld [smem:[%s28]]
  %s30 = scalar_lea.smem %s0, 15
  %s31 = sld [smem:[%s30]]
  %s32 = scalar_lea.smem %s0, 16
  %s33 = sld [smem:[%s32]]
  %s34 = scalar_lea.smem %s0, 17
  %s35 = sld [smem:[%s34]]
  %s36 = scalar_lea.smem %s0, 18
  %s37 = sld [smem:[%s36]]
  %s38 = scalar_lea.smem %s0, 19
  %s39 = sld [smem:[%s38]]
  %s40 = scalar_lea.smem %s0, 20
  %s41 = sld [smem:[%s40]]
  %s42 = scalar_lea.smem %s0, 21
  %s43 = sld [smem:[%s42]]
  %s44 = scalar_lea.smem %s0, 22
  %s45 = sld [smem:[%s44]]
  %s46 = scalar_lea.smem %s0, 23
  %s47 = sld [smem:[%s46]]
  %s48 = scalar_lea.smem %s0, 24
  %s49 = sld [smem:[%s48]]
  %s50 = scalar_lea.smem %s0, 25
  %s51 = sld [smem:[%s50]]
  %s52 = scalar_lea.smem %s0, 26
  %s53 = sld [smem:[%s52]]
  %s54 = scalar_lea.smem %s0, 27
  %s55 = sld [smem:[%s54]]
  %s56 = scalar_lea.smem %s0, 28
  %s57 = sld [smem:[%s56]]
  %s58 = scalar_lea.smem %s0, 29
  %s59 = sld [smem:[%s58]]
  %s60 = scalar_lea.smem %s0, 30
  %s61 = sld [smem:[%s60]]
  %s62 = scalar_lea.smem %s0, 31
  %s63 = sld [smem:[%s62]]
  %s64 = scalar_lea.smem %s0, 32
  %s65 = sld [smem:[%s64]]
  %s66 = scalar_lea.smem %s0, 33
  %s67 = sld [smem:[%s66]]
  %s68 = scalar_lea.smem %s0, 34
  %s69 = sld [smem:[%s68]]
  %s70 = scalar_lea.smem %s0, 35
  %s71 = sld [smem:[%s70]]
  %s72 = scalar_lea.smem %s0, 36
  %s73 = sld [smem:[%s72]]
  %s74 = scalar_lea.smem %s0, 37
  %s75 = sld [smem:[%s74]]
  %s76 = scalar_lea.smem %s0, 38
  %s77 = sld [smem:[%s76]]
  %s78 = scalar_lea.smem %s0, 39
  %s79 = sld [smem:[%s78]]
  %s80 = scalar_lea.smem %s0, 40
  %s81 = sld [smem:[%s80]]
  %s82 = scalar_lea.smem %s0, 41
  %s83 = sld [smem:[%s82]]
  %s84 = scalar_lea.smem %s0, 42
  %s85 = sld [smem:[%s84]]
  %s86 = scalar_lea.smem %s0, 43
  %s87 = sld [smem:[%s86]]
  %88 = xla_tuple %s85, %s87
  %s89 = sld [smem:[#allocation0]]
  $region186: #{seq2seq_forward.1} parent=0
    _
  %s91 = ssub.s32 1, %s89
  %s92 = scalar_select 0, %s91, %s89
  $region1: #{seq2seq_forward.1} parent=0
    #allocation2 [shape = 'u8[8192]{0}', space=vmem, size = 0x2000, scoped, tag = 'output window, operand 0, single buffered']
    #allocation3 [shape = 's32[1]{0}', space=sflag, size = 0x4, scoped, tag = 'scoped memory for seq2seq_forward.1']
    #allocation4 [shape = 's32[1]{0}', space=sflag, size = 0x4, scoped, tag = 'scoped memory for seq2seq_forward.1']
    #allocation5 [shape = 'u8[512]{0}', space=smem, size = 0x200, scoped, tag = 'output window, operand 1, single buffered']
    %93 = vsyncpa [#allocation3], 0
    %94 = vsyncpa [#allocation4], 0
    // Predicated region
    $region2: #{seq2seq_forward.1} parent=1 // pred_check
      _
    $region3: #{seq2seq_forward.1} parent=1 // pred_check_branch
      %96 = sbr.rel (0) target = $region5
    $region4: #{seq2seq_forward.1} parent=1 // pred_region
      _
    $region5: #{seq2seq_forward.1} parent=1 // pred_fallthru
      _
    // Predicated region
    $region6: #{seq2seq_forward.1} parent=1 // pred_check
      _
    $region7: #{seq2seq_forward.1} parent=1 // pred_check_branch
      %98 = sbr.rel (0) target = $region9
    $region8: #{seq2seq_forward.1} parent=1 // pred_region
      _
    $region9: #{seq2seq_forward.1} parent=1 // pred_fallthru
      _
    // Predicated region
    $region10: #{seq2seq_forward.1} parent=1 // pred_check
      _
    $region11: #{seq2seq_forward.1} parent=1 // pred_check_branch
      %100 = sbr.rel (0) target = $region13
    $region12: #{seq2seq_forward.1} parent=1 // pred_region
      _
    $region13: #{seq2seq_forward.1} parent=1 // pred_fallthru
      _
    // Predicated region
    $region14: #{seq2seq_forward.1} parent=1 // pred_check
      _
    $region15: #{seq2seq_forward.1} parent=1 // pred_check_branch
      %102 = sbr.rel (0) target = $region17
    $region16: #{seq2seq_forward.1} parent=1 // pred_region
      _
    $region17: #{seq2seq_forward.1} parent=1 // pred_fallthru
      _
    // Predicated region
    $region18: #{seq2seq_forward.1} parent=1 // pred_check
      _
    $region19: #{seq2seq_forward.1} parent=1 // pred_check_branch
      %104 = sbr.rel (0) target = $region21
    $region20: #{seq2seq_forward.1} parent=1 // pred_region
      _
    $region21: #{seq2seq_forward.1} parent=1 // pred_fallthru
      _
    // Predicated region
    $region22: #{seq2seq_forward.1} parent=1 // pred_check
      _
    $region23: #{seq2seq_forward.1} parent=1 // pred_check_branch
      %106 = sbr.rel (0) target = $region25
    $region24: #{seq2seq_forward.1} parent=1 // pred_region
      _
    $region25: #{seq2seq_forward.1} parent=1 // pred_fallthru
      _
    // Predicated region
    $region26: #{seq2seq_forward.1} parent=1 // pred_check
      _
    $region27: #{seq2seq_forward.1} parent=1 // pred_check_branch
      %108 = sbr.rel (0) target = $region29
    $region28: #{seq2seq_forward.1} parent=1 // pred_region
      _
    $region29: #{seq2seq_forward.1} parent=1 // pred_fallthru
      _
    // Predicated region
    $region30: #{seq2seq_forward.1} parent=1 // pred_check
      _
    $region31: #{seq2seq_forward.1} parent=1 // pred_check_branch
      %110 = sbr.rel (0) target = $region33
    $region32: #{seq2seq_forward.1} parent=1 // pred_region
      _
    $region33: #{seq2seq_forward.1} parent=1 // pred_fallthru
      _
    // Predicated region
    $region34: #{seq2seq_forward.1} parent=1 // pred_check
      _
    $region35: #{seq2seq_forward.1} parent=1 // pred_check_branch
      %112 = sbr.rel (0) target = $region37
    $region36: #{seq2seq_forward.1} parent=1 // pred_region
      _
    $region37: #{seq2seq_forward.1} parent=1 // pred_fallthru
      _
    // Predicated region
    $region38: #{seq2seq_forward.1} parent=1 // pred_check
      _
    $region39: #{seq2seq_forward.1} parent=1 // pred_check_branch
      %114 = sbr.rel (0) target = $region41
    $region40: #{seq2seq_forward.1} parent=1 // pred_region
      _
    $region41: #{seq2seq_forward.1} parent=1 // pred_fallthru
      _
    // Predicated region
    $region42: #{seq2seq_forward.1} parent=1 // pred_check
      _
    $region43: #{seq2seq_forward.1} parent=1 // pred_check_branch
      %116 = sbr.rel (0) target = $region45
    $region44: #{seq2seq_forward.1} parent=1 // pred_region
      _
    $region45: #{seq2seq_forward.1} parent=1 // pred_fallthru
      _
    // Predicated region
    $region46: #{seq2seq_forward.1} parent=1 // pred_check
      _
    $region47: #{seq2seq_forward.1} parent=1 // pred_check_branch
      %118 = sbr.rel (0) target = $region49
    $region48: #{seq2seq_forward.1} parent=1 // pred_region
      _
    $region49: #{seq2seq_forward.1} parent=1 // pred_fallthru
      _
    // Predicated region
    $region50: #{seq2seq_forward.1} parent=1 // pred_check
      _
    $region51: #{seq2seq_forward.1} parent=1 // pred_check_branch
      %120 = sbr.rel (0) target = $region53
    $region52: #{seq2seq_forward.1} parent=1 // pred_region
      _
    $region53: #{seq2seq_forward.1} parent=1 // pred_fallthru
      _
    // Predicated region
    $region54: #{seq2seq_forward.1} parent=1 // pred_check
      _
    $region55: #{seq2seq_forward.1} parent=1 // pred_check_branch
      %122 = sbr.rel (0) target = $region57
    $region56: #{seq2seq_forward.1} parent=1 // pred_region
      _
    $region57: #{seq2seq_forward.1} parent=1 // pred_fallthru
      _
    // Predicated region
    $region58: #{seq2seq_forward.1} parent=1 // pred_check
      _
    $region59: #{seq2seq_forward.1} parent=1 // pred_check_branch
      %124 = sbr.rel (0) target = $region61
    $region60: #{seq2seq_forward.1} parent=1 // pred_region
      _
    $region61: #{seq2seq_forward.1} parent=1 // pred_fallthru
      _
    // Predicated region
    $region62: #{seq2seq_forward.1} parent=1 // pred_check
      _
    $region63: #{seq2seq_forward.1} parent=1 // pred_check_branch
      %126 = sbr.rel (0) target = $region65
    $region64: #{seq2seq_forward.1} parent=1 // pred_region
      _
    $region65: #{seq2seq_forward.1} parent=1 // pred_fallthru
      _
    // Predicated region
    $region66: #{seq2seq_forward.1} parent=1 // pred_check
      _
    $region67: #{seq2seq_forward.1} parent=1 // pred_check_branch
      %128 = sbr.rel (0) target = $region69
    $region68: #{seq2seq_forward.1} parent=1 // pred_region
      _
    $region69: #{seq2seq_forward.1} parent=1 // pred_fallthru
      _
    // Predicated region
    $region70: #{seq2seq_forward.1} parent=1 // pred_check
      _
    $region71: #{seq2seq_forward.1} parent=1 // pred_check_branch
      %130 = sbr.rel (0) target = $region73
    $region72: #{seq2seq_forward.1} parent=1 // pred_region
      _
    $region73: #{seq2seq_forward.1} parent=1 // pred_fallthru
      _
    // Predicated region
    $region74: #{seq2seq_forward.1} parent=1 // pred_check
      _
    $region75: #{seq2seq_forward.1} parent=1 // pred_check_branch
      %132 = sbr.rel (0) target = $region77
    $region76: #{seq2seq_forward.1} parent=1 // pred_region
      _
    $region77: #{seq2seq_forward.1} parent=1 // pred_fallthru
      _
    // Predicated region
    $region78: #{seq2seq_forward.1} parent=1 // pred_check
      _
    $region79: #{seq2seq_forward.1} parent=1 // pred_check_branch
      %134 = sbr.rel (0) target = $region81
    $region80: #{seq2seq_forward.1} parent=1 // pred_region
      _
    $region81: #{seq2seq_forward.1} parent=1 // pred_fallthru
      _
    // Predicated region
    $region82: #{seq2seq_forward.1} parent=1 // pred_check
      _
    $region83: #{seq2seq_forward.1} parent=1 // pred_check_branch
      %136 = sbr.rel (0) target = $region85
    $region84: #{seq2seq_forward.1} parent=1 // pred_region
      _
    $region85: #{seq2seq_forward.1} parent=1 // pred_fallthru
      _
    // Predicated region
    $region86: #{seq2seq_forward.1} parent=1 // pred_check
      _
    $region87: #{seq2seq_forward.1} parent=1 // pred_check_branch
      %138 = sbr.rel (0) target = $region89
    $region88: #{seq2seq_forward.1} parent=1 // pred_region
      _
    $region89: #{seq2seq_forward.1} parent=1 // pred_fallthru
      _
    // Predicated region
    $region90: #{seq2seq_forward.1} parent=1 // pred_check
      _
    $region91: #{seq2seq_forward.1} parent=1 // pred_check_branch
      %140 = sbr.rel (0) target = $region93
    $region92: #{seq2seq_forward.1} parent=1 // pred_region
      _
    $region93: #{seq2seq_forward.1} parent=1 // pred_fallthru
      _
    // Predicated region
    $region94: #{seq2seq_forward.1} parent=1 // pred_check
      _
    $region95: #{seq2seq_forward.1} parent=1 // pred_check_branch
      %142 = sbr.rel (0) target = $region97
    $region96: #{seq2seq_forward.1} parent=1 // pred_region
      _
    $region97: #{seq2seq_forward.1} parent=1 // pred_fallthru
      _
    // Predicated region
    $region98: #{seq2seq_forward.1} parent=1 // pred_check
      _
    $region99: #{seq2seq_forward.1} parent=1 // pred_check_branch
      %144 = sbr.rel (0) target = $region101
    $region100: #{seq2seq_forward.1} parent=1 // pred_region
      _
    $region101: #{seq2seq_forward.1} parent=1 // pred_fallthru
      _
    // Predicated region
    $region102: #{seq2seq_forward.1} parent=1 // pred_check
      _
    $region103: #{seq2seq_forward.1} parent=1 // pred_check_branch
      %146 = sbr.rel (0) target = $region105
    $region104: #{seq2seq_forward.1} parent=1 // pred_region
      _
    $region105: #{seq2seq_forward.1} parent=1 // pred_fallthru
      _
    // Predicated region
    $region106: #{seq2seq_forward.1} parent=1 // pred_check
      _
    $region107: #{seq2seq_forward.1} parent=1 // pred_check_branch
      %148 = sbr.rel (0) target = $region109
    $region108: #{seq2seq_forward.1} parent=1 // pred_region
      _
    $region109: #{seq2seq_forward.1} parent=1 // pred_fallthru
      _
    // Predicated region
    $region110: #{seq2seq_forward.1} parent=1 // pred_check
      _
    $region111: #{seq2seq_forward.1} parent=1 // pred_check_branch
      %150 = sbr.rel (0) target = $region113
    $region112: #{seq2seq_forward.1} parent=1 // pred_region
      _
    $region113: #{seq2seq_forward.1} parent=1 // pred_fallthru
      _
    // Predicated region
    $region114: #{seq2seq_forward.1} parent=1 // pred_check
      _
    $region115: #{seq2seq_forward.1} parent=1 // pred_check_branch
      %152 = sbr.rel (0) target = $region117
    $region116: #{seq2seq_forward.1} parent=1 // pred_region
      _
    $region117: #{seq2seq_forward.1} parent=1 // pred_fallthru
      _
    // Predicated region
    $region118: #{seq2seq_forward.1} parent=1 // pred_check
      _
    $region119: #{seq2seq_forward.1} parent=1 // pred_check_branch
      %154 = sbr.rel (0) target = $region121
    $region120: #{seq2seq_forward.1} parent=1 // pred_region
      _
    $region121: #{seq2seq_forward.1} parent=1 // pred_fallthru
      _
    // Predicated region
    $region122: #{seq2seq_forward.1} parent=1 // pred_check
      _
    $region123: #{seq2seq_forward.1} parent=1 // pred_check_branch
      %156 = sbr.rel (0) target = $region125
    $region124: #{seq2seq_forward.1} parent=1 // pred_region
      _
    $region125: #{seq2seq_forward.1} parent=1 // pred_fallthru
      _
    // Predicated region
    $region126: #{seq2seq_forward.1} parent=1 // pred_check
      _
    $region127: #{seq2seq_forward.1} parent=1 // pred_check_branch
      %158 = sbr.rel (0) target = $region129
    $region128: #{seq2seq_forward.1} parent=1 // pred_region
      _
    $region129: #{seq2seq_forward.1} parent=1 // pred_fallthru
      _
    // Predicated region
    $region130: #{seq2seq_forward.1} parent=1 // pred_check
      _
    $region131: #{seq2seq_forward.1} parent=1 // pred_check_branch
      %160 = sbr.rel (0) target = $region133
    $region132: #{seq2seq_forward.1} parent=1 // pred_region
      _
    $region133: #{seq2seq_forward.1} parent=1 // pred_fallthru
      _
    // Predicated region
    $region134: #{seq2seq_forward.1} parent=1 // pred_check
      _
    $region135: #{seq2seq_forward.1} parent=1 // pred_check_branch
      %162 = sbr.rel (0) target = $region137
    $region136: #{seq2seq_forward.1} parent=1 // pred_region
      _
    $region137: #{seq2seq_forward.1} parent=1 // pred_fallthru
      _
    // Predicated region
    $region138: #{seq2seq_forward.1} parent=1 // pred_check
      _
    $region139: #{seq2seq_forward.1} parent=1 // pred_check_branch
      %164 = sbr.rel (0) target = $region141
    $region140: #{seq2seq_forward.1} parent=1 // pred_region
      _
    $region141: #{seq2seq_forward.1} parent=1 // pred_fallthru
      _
    // Predicated region
    $region142: #{seq2seq_forward.1} parent=1 // pred_check
      _
    $region143: #{seq2seq_forward.1} parent=1 // pred_check_branch
      %166 = sbr.rel (0) target = $region145
    $region144: #{seq2seq_forward.1} parent=1 // pred_region
      _
    $region145: #{seq2seq_forward.1} parent=1 // pred_fallthru
      _
    // Predicated region
    $region146: #{seq2seq_forward.1} parent=1 // pred_check
      _
    $region147: #{seq2seq_forward.1} parent=1 // pred_check_branch
      %168 = sbr.rel (0) target = $region149
    $region148: #{seq2seq_forward.1} parent=1 // pred_region
      _
    $region149: #{seq2seq_forward.1} parent=1 // pred_fallthru
      _
    // Predicated region
    $region150: #{seq2seq_forward.1} parent=1 // pred_check
      _
    $region151: #{seq2seq_forward.1} parent=1 // pred_check_branch
      %170 = sbr.rel (0) target = $region153
    $region152: #{seq2seq_forward.1} parent=1 // pred_region
      _
    $region153: #{seq2seq_forward.1} parent=1 // pred_fallthru
      _
    // Predicated region
    $region154: #{seq2seq_forward.1} parent=1 // pred_check
      _
    $region155: #{seq2seq_forward.1} parent=1 // pred_check_branch
      %172 = sbr.rel (0) target = $region157
    $region156: #{seq2seq_forward.1} parent=1 // pred_region
      _
    $region157: #{seq2seq_forward.1} parent=1 // pred_fallthru
      _
    // Predicated region
    $region158: #{seq2seq_forward.1} parent=1 // pred_check
      _
    $region159: #{seq2seq_forward.1} parent=1 // pred_check_branch
      %174 = sbr.rel (0) target = $region161
    $region160: #{seq2seq_forward.1} parent=1 // pred_region
      _
    $region161: #{seq2seq_forward.1} parent=1 // pred_fallthru
      _
    // Predicated region
    $region162: #{seq2seq_forward.1} parent=1 // pred_check
      _
    $region163: #{seq2seq_forward.1} parent=1 // pred_check_branch
      %176 = sbr.rel (0) target = $region165
    $region164: #{seq2seq_forward.1} parent=1 // pred_region
      _
    $region165: #{seq2seq_forward.1} parent=1 // pred_fallthru
      _
    // Predicated region
    $region166: #{seq2seq_forward.1} parent=1 // pred_check
      _
    $region167: #{seq2seq_forward.1} parent=1 // pred_check_branch
      %178 = sbr.rel (0) target = $region169
    $region168: #{seq2seq_forward.1} parent=1 // pred_region
      _
    $region169: #{seq2seq_forward.1} parent=1 // pred_fallthru
      _
    %v180 = vld [vmem:[%s5] sm:$0x3]
    %v181 = vsub.f32 1.0, %v180
    %v183 = vrot.slane %v181, 1
    %v185 = vmul.f32 %v181, -1e+09
    %v186 = vmul.f32 %v183, -1e+09
    %v187 = vlaneseq
    %v188 = vshrl.u32 %v187, 7
    %v189 = vlaneseq
    %v190 = vand.u32 %v189, 127
    %vm191 = vcmp.le.s32.totalorder %v190, %v188
    %v192 = vsel %vm191, 1, 0
    %v193 = vcvt.s32.f32 %v192
    %v194 = vld [vmem:[%s7] sm:$0x3]
    %v196 = vrot.slane %v194, 1
    %v197 = vperm.slane %v194, 0
    %v198 = vperm.slane %v196, 0
    %v201 = vmul.f32 %v193, %v197
    %v202 = vmul.f32 %v193, %v198
    %v203 = vsub.f32 1.0, %v201
    %v204 = vsub.f32 1.0, %v202
    %v205 = vmul.f32 %v203, -1e+09
    %v206 = vmul.f32 %v204, -1e+09
    %v207 = vld [vmem:[%s11] sm:$0xff]
    %v208 = vld [vmem:[%s11 + $0x8] sm:$0xff]
    %v209 = vld [vmem:[%s11 + $0x10] sm:$0xff]
    %v210 = vld [vmem:[%s11 + $0x18] sm:$0xff]
    %v211 = vld [vmem:[%s11 + $0x20] sm:$0xff]
    %v212 = vld [vmem:[%s11 + $0x28] sm:$0xff]
    %v213 = vld [vmem:[%s11 + $0x30] sm:$0xff]
    %v214 = vld [vmem:[%s11 + $0x38] sm:$0xff]
    %v215 = vld [vmem:[%s11 + $0x40] sm:$0xff]
    %v216 = vld [vmem:[%s11 + $0x48] sm:$0xff]
    %v217 = vld [vmem:[%s11 + $0x50] sm:$0xff]
    %v218 = vld [vmem:[%s11 + $0x58] sm:$0xff]
    %v219 = vld [vmem:[%s11 + $0x60] sm:$0xff]
    %v220 = vld [vmem:[%s11 + $0x68] sm:$0xff]
    %v221 = vld [vmem:[%s11 + $0x70] sm:$0xff]
    %v222 = vld [vmem:[%s11 + $0x78] sm:$0xff]
    %v223 = vld [vmem:[%s1] sm:$0xff]
    %v224 = vld [vmem:[%s1 + $0x8] sm:$0xff]
    %225 = vset.pattern.permute.xlu0 0
    %226 = vperm.xlu0 %225, %v223
    %v227 = vpop.permute.xlu0 %226
    %228 = vset.pattern.permute.xlu0 0
    %229 = vperm.xlu0 %228, %v224
    %v230 = vpop.permute.xlu0 %229
    %vm231 = vcmp.eq.s32.totalorder %v190, %v227
    %vm232 = vcmp.eq.s32.totalorder %v190, %v230
    %v233 = vsel %vm231, 1, 0
    %v234 = vsel %vm232, 1, 0
    %v235 = vcvt.s32.f32 %v233
    %v236 = vcvt.s32.f32 %v234
    %237 = vmatpush.msra.mxu0 %v222
    %238 = vmatpush.msra.mxu0 %v221
    %239 = vmatpush.msra.mxu0 %v220
    %240 = vmatpush.msra.mxu0 %v219
    %241 = vmatpush.msra.mxu0 %v218
    %242 = vmatpush.msra.mxu0 %v217
    %243 = vmatpush.msra.mxu0 %v216
    %244 = vmatpush.msra.mxu0 %v215
    %245 = vmatpush.msra.mxu0 %v214
    %246 = vmatpush.msra.mxu0 %v213
    %247 = vmatpush.msra.mxu0 %v212
    %248 = vmatpush.msra.mxu0 %v211
    %249 = vmatpush.msra.mxu0 %v210
    %250 = vmatpush.msra.mxu0 %v209
    %251 = vmatpush.msra.mxu0 %v208
    %252 = vmatpush.msra.mxu0 %v207
    %253 = vmatmul.f32.gmra.mxu0 %v235
    %v254 = vpop.f32.mrf.mxu0
    %v255 = vadd.f32 0.0, %v254
    %256 = vmatmul.f32.gmra.mxu0 %v236
    %v257 = vpop.f32.mrf.mxu0
    %v258 = vadd.f32 0.0, %v257
    %259 = vdwg.mxu0
    %v260 = vld [vmem:[%s13] sm:$0xff]
    %v261 = vadd.f32 %v255, %v260
    %v262 = vadd.f32 %v258, %v260
    %v263 = vld [vmem:[%s17] sm:$0x1]
    %v264 = vld [vmem:[%s19] sm:$0x1]
    %v265 = vld [vmem:[%s21] sm:$0xf]
    %v266 = vld [vmem:[%s21 + $0x4] sm:$0xf]
    %v267 = vld [vmem:[%s21 + $0x8] sm:$0xf]
    %v268 = vld [vmem:[%s21 + $0xc] sm:$0xf]
    %v269 = vld [vmem:[%s23] sm:$0x1]
    %v270 = vld [vmem:[%s25] sm:$0xf]
    %v271 = vld [vmem:[%s25 + $0x4] sm:$0xf]
    %v272 = vld [vmem:[%s25 + $0x8] sm:$0xf]
    %v273 = vld [vmem:[%s25 + $0xc] sm:$0xf]
    %v274 = vld [vmem:[%s27] sm:$0x1]
    %vm275 = vcmask 261120
    %v276 = vsel %vm275, %v261, 0.0
    %277 = vadd.xlane.f32.xlu0 %v276
    %v278 = vpop.xlane.xlu0 %277
    %v279 = vsel %vm275, %v262, 0.0
    %280 = vadd.xlane.f32.xlu0 %v279
    %v281 = vpop.xlane.xlu0 %280
    %v282 = vrcp.pop 32.0
    %v283 = vmul.f32 32.0, %v282
    %v284 = vsub.f32 1.0, %v283
    %v285 = vmul.f32 %v282, %v284
    %v286 = vadd.f32 %v282, %v285
    %vm287 = vweird.f32 %v282
    %v288 = vsel %vm287, %v282, %v286
    %v289 = vmul.f32 %v278, %v288
    %v290 = vmul.f32 %v281, %v288
    %v291 = vsub.f32 %v261, %v289
    %v292 = vsub.f32 %v262, %v290
    %v293 = vmul.f32 %v291, %v291
    %v294 = vmul.f32 %v292, %v292
    %v295 = vsel %vm275, %v293, 0.0
    %296 = vadd.xlane.f32.xlu0 %v295
    %v297 = vpop.xlane.xlu0 %296
    %v298 = vsel %vm275, %v294, 0.0
    %299 = vadd.xlane.f32.xlu0 %v298
    %v300 = vpop.xlane.xlu0 %299
    %v301 = vmul.f32 %v297, %v288
    %v302 = vmul.f32 %v300, %v288
    %v303 = vadd.f32 %v301, 1e-05
    %v304 = vadd.f32 %v302, 1e-05
    %v305 = vrsqrt.pop %v303
    %v306 = vmul.f32 %v305, %v303
    %v307 = vmul.f32 %v306, %v305
    %v308 = vmul.f32 0.5, %v307
    %v309 = vsub.f32 1.5, %v308
    %v310 = vmul.f32 %v305, %v309
    %vm311 = vweird.f32 %v303
    %vm312 = vweird.f32 %v305
    %vm313 = vmor %vm311, %vm312
    %v314 = vsel %vm313, %v305, %v310
    %v315 = vrsqrt.pop %v304
    %v316 = vmul.f32 %v315, %v304
    %v317 = vmul.f32 %v316, %v315
    %v318 = vmul.f32 0.5, %v317
    %v319 = vsub.f32 1.5, %v318
    %v320 = vmul.f32 %v315, %v319
    %vm321 = vweird.f32 %v304
    %vm322 = vweird.f32 %v315
    %vm323 = vmor %vm321, %vm322
    %v324 = vsel %vm323, %v315, %v320
    %v325 = vmul.f32 %v291, %v314
    %v326 = vmul.f32 %v292, %v324
    %v328 = vperm.slane %v263, 0
    %v330 = vmul.f32 %v325, %v328
    %v331 = vmul.f32 %v326, %v328
    %v333 = vperm.slane %v264, 0
    %v335 = vadd.f32 %v330, %v333
    %v336 = vadd.f32 %v331, %v333
    %v337 = vpack.c.bf16 %v336, %v335
    %v339 = vperm.slane %v269, 0
    %v345 = vunpack.c.l.b16 %v265
    %v346 = vunpack.c.l.b16 %v266
    %v347 = vunpack.c.l.b16 %v267
    %v348 = vunpack.c.l.b16 %v268
    %v349 = vpack.c.b16 %v346, %v345
    %v350 = vpack.c.b16 %v348, %v347
    %v354 = vsel %vm275, %v337, 0
    %356 = vmatpush.bf16.msra.mxu0 0
    %357 = vmatpush.bf16.msra.mxu0 0
    %358 = vmatpush.bf16.msra.mxu0 0
    %359 = vmatpush.bf16.msra.mxu0 0
    %360 = vmatpush.bf16.msra.mxu0 0
    %361 = vmatpush.bf16.msra.mxu0 0
    %362 = vmatpush.bf16.msra.mxu0 %v350
    %363 = vmatpush.bf16.msra.mxu0 %v349
    %364 = vmatmul.bf16.gmra.mxu0 %v354
    %v365 = vpop.f32.mrf.mxu0
    %v366 = vadd.f32 %v339, %v365
    %v367 = vpop.f32.mrf.mxu0
    %v368 = vadd.f32 %v339, %v367
    %369 = vdwg.mxu0
    %v370 = vpack.c.bf16 %v366, %v366
    %v371 = vpack.c.bf16 %v368, %v368
    %v374 = vperm.slane %v185, 0
    %v375 = vperm.slane %v186, 0
    %v379 = vunpack.c.l.b16 %v370
    %v380 = vpack.c.b16 %v379, %v379
    %381 = vrot.lane.b32.xlu0 %v380, 96
    %v382 = vpop.permute.xlu0 %381
    %vm383 = vcmask 130048
    %v385 = vsel %vm383, %v370, 0
    %v388 = vsel %vm383, %v382, 0
    %390 = vmatpush.bf16.xpose.msra.mxu0 0
    %391 = vmatpush.bf16.xpose.msra.mxu0 0
    %392 = vmatpush.bf16.xpose.msra.mxu0 0
    %393 = vmatpush.bf16.xpose.msra.mxu0 0
    %394 = vmatpush.bf16.xpose.msra.mxu0 0
    %395 = vmatpush.bf16.xpose.msra.mxu0 0
    %396 = vmatpush.bf16.xpose.msra.mxu0 0
    %397 = vmatpush.bf16.xpose.msra.mxu0 %v388
    %398 = vmatmul.bf16.gmra.mxu0 %v385
    %v399 = vpop.f32.mrf.mxu0
    %v400 = vadd.f32 %v374, %v399
    %v401 = vpop.f32.mrf.mxu0
    %402 = vdwg.mxu0
    %v404 = vunpack.c.l.b16 %v371
    %v405 = vpack.c.b16 %v404, %v404
    %406 = vrot.lane.b32.xlu0 %v405, 96
    %v407 = vpop.permute.xlu0 %406
    %v409 = vsel %vm383, %v371, 0
    %v412 = vsel %vm383, %v407, 0
    %414 = vmatpush.bf16.xpose.msra.mxu0 0
    %415 = vmatpush.bf16.xpose.msra.mxu0 0
    %416 = vmatpush.bf16.xpose.msra.mxu0 0
    %417 = vmatpush.bf16.xpose.msra.mxu0 0
    %418 = vmatpush.bf16.xpose.msra.mxu0 0
    %419 = vmatpush.bf16.xpose.msra.mxu0 0
    %420 = vmatpush.bf16.xpose.msra.mxu0 0
    %421 = vmatpush.bf16.xpose.msra.mxu0 %v412
    %422 = vmatmul.bf16.gmra.mxu0 %v409
    %v423 = vpop.f32.mrf.mxu0
    %v424 = vadd.f32 %v375, %v423
    %v425 = vpop.f32.mrf.mxu0
    %426 = vdwg.mxu0
    %vm427 = vcmask 64512
    %v428 = vsel %vm427, %v400, -inf
    %429 = vmax.xlane.f32.xlu0 %v428
    %v430 = vpop.xlane.xlu0 %429
    %v431 = vsel %vm427, %v424, -inf
    %432 = vmax.xlane.f32.xlu0 %v431
    %v433 = vpop.xlane.xlu0 %432
    %v434 = vsub.f32 %v400, %v430
    %v435 = vsub.f32 %v424, %v433
    %v436 = vmul.f32 %v434, 1.442695
    %v437 = vpow.pop %v436
    %v438 = vmul.f32 %v435, 1.442695
    %v439 = vpow.pop %v438
    %v440 = vsel %vm427, %v437, 0.0
    %441 = vadd.xlane.f32.xlu0 %v440
    %v442 = vpop.xlane.xlu0 %441
    %v443 = vsel %vm427, %v439, 0.0
    %444 = vadd.xlane.f32.xlu0 %v443
    %v445 = vpop.xlane.xlu0 %444
    %v446 = vrcp.pop %v442
    %v447 = vrcp.pop %v445
    %v448 = vmul.f32 %v437, %v446
    %v449 = vmul.f32 %v439, %v447
    %v450 = vpack.c.bf16 %v448, %v448
    %v451 = vpack.c.bf16 %v449, %v449
    %452 = vrot.lane.b32.xlu0 %v380, 64
    %v453 = vpop.permute.xlu0 %452
    %v455 = vsel %vm427, %v450, 0
    %vm457 = vcmask 1043456
    %v459 = vsel %vm457, %v453, 0
    %461 = vmatpush.bf16.msra.mxu0 0
    %462 = vmatpush.bf16.msra.mxu0 0
    %463 = vmatpush.bf16.msra.mxu0 0
    %464 = vmatpush.bf16.msra.mxu0 0
    %465 = vmatpush.bf16.msra.mxu0 0
    %466 = vmatpush.bf16.msra.mxu0 0
    %467 = vmatpush.bf16.msra.mxu0 0
    %468 = vmatpush.bf16.msra.mxu0 %v459
    %469 = vmatmul.bf16.gmra.mxu0 %v455
    %v470 = vpop.f32.mrf.mxu0
    %v471 = vadd.f32 0.0, %v470
    %v472 = vpop.f32.mrf.mxu0
    %473 = vdwg.mxu0
    %474 = vrot.lane.b32.xlu0 %v405, 64
    %v475 = vpop.permute.xlu0 %474
    %v477 = vsel %vm427, %v451, 0
    %v480 = vsel %vm457, %v475, 0
    %482 = vmatpush.bf16.msra.mxu0 0
    %483 = vmatpush.bf16.msra.mxu0 0
    %484 = vmatpush.bf16.msra.mxu0 0
    %485 = vmatpush.bf16.msra.mxu0 0
    %486 = vmatpush.bf16.msra.mxu0 0
    %487 = vmatpush.bf16.msra.mxu0 0
    %488 = vmatpush.bf16.msra.mxu0 0
    %489 = vmatpush.bf16.msra.mxu0 %v480
    %490 = vmatmul.bf16.gmra.mxu0 %v477
    %v491 = vpop.f32.mrf.mxu0
    %v492 = vadd.f32 0.0, %v491
    %v493 = vpop.f32.mrf.mxu0
    %494 = vdwg.mxu0
    %495 = vrot.lane.b32.xlu0 %v380, 112
    %v496 = vpop.permute.xlu0 %495
    %497 = vrot.lane.b32.xlu0 %v380, 80
    %v498 = vpop.permute.xlu0 %497
    %v500 = vsel %vm383, %v496, 0
    %v503 = vsel %vm383, %v498, 0
    %505 = vmatpush.bf16.xpose.msra.mxu0 0
    %506 = vmatpush.bf16.xpose.msra.mxu0 0
    %507 = vmatpush.bf16.xpose.msra.mxu0 0
    %508 = vmatpush.bf16.xpose.msra.mxu0 0
    %509 = vmatpush.bf16.xpose.msra.mxu0 0
    %510 = vmatpush.bf16.xpose.msra.mxu0 0
    %511 = vmatpush.bf16.xpose.msra.mxu0 0
    %512 = vmatpush.bf16.xpose.msra.mxu0 %v503
    %513 = vmatmul.bf16.gmra.mxu0 %v500
    %v514 = vpop.f32.mrf.mxu0
    %v515 = vadd.f32 %v374, %v514
    %v516 = vpop.f32.mrf.mxu0
    %517 = vdwg.mxu0
    %518 = vrot.lane.b32.xlu0 %v405, 112
    %v519 = vpop.permute.xlu0 %518
    %520 = vrot.lane.b32.xlu0 %v405, 80
    %v521 = vpop.permute.xlu0 %520
    %v523 = vsel %vm383, %v519, 0
    %v526 = vsel %vm383, %v521, 0
    %528 = vmatpush.bf16.xpose.msra.mxu0 0
    %529 = vmatpush.bf16.xpose.msra.mxu0 0
    %530 = vmatpush.bf16.xpose.msra.mxu0 0
    %531 = vmatpush.bf16.xpose.msra.mxu0 0
    %532 = vmatpush.bf16.xpose.msra.mxu0 0
    %533 = vmatpush.bf16.xpose.msra.mxu0 0
    %534 = vmatpush.bf16.xpose.msra.mxu0 0
    %535 = vmatpush.bf16.xpose.msra.mxu0 %v526
    %536 = vmatmul.bf16.gmra.mxu0 %v523
    %v537 = vpop.f32.mrf.mxu0
    %v538 = vadd.f32 %v375, %v537
    %v539 = vpop.f32.mrf.mxu0
    %540 = vdwg.mxu0
    %v541 = vsel %vm427, %v515, -inf
    %542 = vmax.xlane.f32.xlu0 %v541
    %v543 = vpop.xlane.xlu0 %542
    %v544 = vsel %vm427, %v538, -inf
    %545 = vmax.xlane.f32.xlu0 %v544
    %v546 = vpop.xlane.xlu0 %545
    %v547 = vsub.f32 %v515, %v543
    %v548 = vsub.f32 %v538, %v546
    %v549 = vmul.f32 %v547, 1.442695
    %v550 = vpow.pop %v549
    %v551 = vmul.f32 %v548, 1.442695
    %v552 = vpow.pop %v551
    %v553 = vsel %vm427, %v550, 0.0
    %554 = vadd.xlane.f32.xlu0 %v553
    %v555 = vpop.xlane.xlu0 %554
    %v556 = vsel %vm427, %v552, 0.0
    %557 = vadd.xlane.f32.xlu0 %v556
    %v558 = vpop.xlane.xlu0 %557
    %v559 = vrcp.pop %v555
    %v560 = vrcp.pop %v558
    %v561 = vmul.f32 %v550, %v559
    %v562 = vmul.f32 %v552, %v560
    %v563 = vpack.c.bf16 %v561, %v561
    %v564 = vpack.c.bf16 %v562, %v562
    %565 = vrot.lane.b32.xlu0 %v380, 48
    %v566 = vpop.permute.xlu0 %565
    %v568 = vsel %vm427, %v563, 0
    %v571 = vsel %vm457, %v566, 0
    %573 = vmatpush.bf16.msra.mxu0 0
    %574 = vmatpush.bf16.msra.mxu0 0
    %575 = vmatpush.bf16.msra.mxu0 0
    %576 = vmatpush.bf16.msra.mxu0 0
    %577 = vmatpush.bf16.msra.mxu0 0
    %578 = vmatpush.bf16.msra.mxu0 0
    %579 = vmatpush.bf16.msra.mxu0 0
    %580 = vmatpush.bf16.msra.mxu0 %v571
    %581 = vmatmul.bf16.gmra.mxu0 %v568
    %v582 = vpop.f32.mrf.mxu0
    %v583 = vadd.f32 0.0, %v582
    %v584 = vpop.f32.mrf.mxu0
    %585 = vdwg.mxu0
    %586 = vrot.lane.b32.xlu0 %v405, 48
    %v587 = vpop.permute.xlu0 %586
    %v589 = vsel %vm427, %v564, 0
    %v592 = vsel %vm457, %v587, 0
    %594 = vmatpush.bf16.msra.mxu0 0
    %595 = vmatpush.bf16.msra.mxu0 0
    %596 = vmatpush.bf16.msra.mxu0 0
    %597 = vmatpush.bf16.msra.mxu0 0
    %598 = vmatpush.bf16.msra.mxu0 0
    %599 = vmatpush.bf16.msra.mxu0 0
    %600 = vmatpush.bf16.msra.mxu0 0
    %601 = vmatpush.bf16.msra.mxu0 %v592
    %602 = vmatmul.bf16.gmra.mxu0 %v589
    %v603 = vpop.f32.mrf.mxu0
    %v604 = vadd.f32 0.0, %v603
    %v605 = vpop.f32.mrf.mxu0
    %606 = vdwg.mxu0
    %609 = vrot.lane.b32.xlu0 %v583, 16
    %v610 = vpop.permute.xlu0 %609
    %611 = vrot.lane.b32.xlu0 %v604, 16
    %v612 = vpop.permute.xlu0 %611
    %v615 = vsel %vm383, %v471, %v610
    %v616 = vsel %vm383, %v492, %v612
    %v617 = vpack.c.bf16 %v616, %v615
    %v619 = vperm.slane %v274, 0
    %v625 = vunpack.c.l.b16 %v270
    %v626 = vunpack.c.l.b16 %v271
    %v627 = vunpack.c.l.b16 %v272
    %v628 = vunpack.c.l.b16 %v273
    %v629 = vpack.c.b16 %v626, %v625
    %v630 = vpack.c.b16 %v628, %v627
    %v634 = vsel %vm275, %v617, 0
    %636 = vmatpush.bf16.msra.mxu0 0
    %637 = vmatpush.bf16.msra.mxu0 0
    %638 = vmatpush.bf16.msra.mxu0 0
    %639 = vmatpush.bf16.msra.mxu0 0
    %640 = vmatpush.bf16.msra.mxu0 0
    %641 = vmatpush.bf16.msra.mxu0 0
    %642 = vmatpush.bf16.msra.mxu0 %v630
    %643 = vmatpush.bf16.msra.mxu0 %v629
    %644 = vmatmul.bf16.gmra.mxu0 %v634
    %v645 = vpop.f32.mrf.mxu0
    %v646 = vadd.f32 %v619, %v645
    %v647 = vpop.f32.mrf.mxu0
    %v648 = vadd.f32 %v619, %v647
    %649 = vdwg.mxu0
    %v650 = vadd.f32 %v261, %v646
    %v651 = vadd.f32 %v262, %v648
    %v652 = vld [vmem:[%s29] sm:$0x1]
    %v653 = vld [vmem:[%s31] sm:$0x1]
    %v654 = vld [vmem:[%s33] sm:$0xf]
    %v655 = vld [vmem:[%s33 + $0x4] sm:$0xf]
    %v656 = vld [vmem:[%s33 + $0x8] sm:$0xf]
    %v657 = vld [vmem:[%s33 + $0xc] sm:$0xf]
    %v658 = vld [vmem:[%s35] sm:$0x1]
    %v659 = vld [vmem:[%s37] sm:$0xf]
    %v660 = vld [vmem:[%s37 + $0x4] sm:$0xf]
    %v661 = vld [vmem:[%s37 + $0x8] sm:$0xf]
    %v662 = vld [vmem:[%s37 + $0xc] sm:$0xf]
    %v663 = vld [vmem:[%s37 + $0x10] sm:$0xf]
    %v664 = vld [vmem:[%s37 + $0x14] sm:$0xf]
    %v665 = vld [vmem:[%s37 + $0x18] sm:$0xf]
    %v666 = vld [vmem:[%s37 + $0x1c] sm:$0xf]
    %v667 = vld [vmem:[%s39] sm:$0x1]
    %v668 = vsel %vm275, %v650, 0.0
    %669 = vadd.xlane.f32.xlu0 %v668
    %v670 = vpop.xlane.xlu0 %669
    %v671 = vsel %vm275, %v651, 0.0
    %672 = vadd.xlane.f32.xlu0 %v671
    %v673 = vpop.xlane.xlu0 %672
    %v674 = vmul.f32 %v670, %v288
    %v675 = vmul.f32 %v673, %v288
    %v676 = vsub.f32 %v650, %v674
    %v677 = vsub.f32 %v651, %v675
    %v678 = vmul.f32 %v676, %v676
    %v679 = vmul.f32 %v677, %v677
    %v680 = vsel %vm275, %v678, 0.0
    %681 = vadd.xlane.f32.xlu0 %v680
    %v682 = vpop.xlane.xlu0 %681
    %v683 = vsel %vm275, %v679, 0.0
    %684 = vadd.xlane.f32.xlu0 %v683
    %v685 = vpop.xlane.xlu0 %684
    %v686 = vmul.f32 %v682, %v288
    %v687 = vmul.f32 %v685, %v288
    %v688 = vadd.f32 %v686, 1e-05
    %v689 = vadd.f32 %v687, 1e-05
    %v690 = vrsqrt.pop %v688
    %v691 = vmul.f32 %v690, %v688
    %v692 = vmul.f32 %v691, %v690
    %v693 = vmul.f32 0.5, %v692
    %v694 = vsub.f32 1.5, %v693
    %v695 = vmul.f32 %v690, %v694
    %vm696 = vweird.f32 %v688
    %vm697 = vweird.f32 %v690
    %vm698 = vmor %vm696, %vm697
    %v699 = vsel %vm698, %v690, %v695
    %v700 = vrsqrt.pop %v689
    %v701 = vmul.f32 %v700, %v689
    %v702 = vmul.f32 %v701, %v700
    %v703 = vmul.f32 0.5, %v702
    %v704 = vsub.f32 1.5, %v703
    %v705 = vmul.f32 %v700, %v704
    %vm706 = vweird.f32 %v689
    %vm707 = vweird.f32 %v700
    %vm708 = vmor %vm706, %vm707
    %v709 = vsel %vm708, %v700, %v705
    %v710 = vmul.f32 %v676, %v699
    %v711 = vmul.f32 %v677, %v709
    %v713 = vperm.slane %v652, 0
    %v715 = vmul.f32 %v710, %v713
    %v716 = vmul.f32 %v711, %v713
    %v718 = vperm.slane %v653, 0
    %v720 = vadd.f32 %v715, %v718
    %v721 = vadd.f32 %v716, %v718
    %v722 = vpack.c.bf16 %v721, %v720
    %v724 = vperm.slane %v658, 0
    %v730 = vunpack.c.l.b16 %v654
    %v731 = vunpack.c.l.b16 %v655
    %v732 = vunpack.c.l.b16 %v656
    %v733 = vunpack.c.l.b16 %v657
    %v734 = vpack.c.b16 %v731, %v730
    %v735 = vpack.c.b16 %v733, %v732
    %v739 = vsel %vm275, %v722, 0
    %741 = vmatpush.bf16.msra.mxu0 0
    %742 = vmatpush.bf16.msra.mxu0 0
    %743 = vmatpush.bf16.msra.mxu0 0
    %744 = vmatpush.bf16.msra.mxu0 0
    %745 = vmatpush.bf16.msra.mxu0 0
    %746 = vmatpush.bf16.msra.mxu0 0
    %747 = vmatpush.bf16.msra.mxu0 %v735
    %748 = vmatpush.bf16.msra.mxu0 %v734
    %749 = vmatmul.bf16.gmra.mxu0 %v739
    %v750 = vpop.f32.mrf.mxu0
    %v751 = vadd.f32 %v724, %v750
    %v752 = vpop.f32.mrf.mxu0
    %v753 = vadd.f32 %v724, %v752
    %754 = vdwg.mxu0
    %v755 = vmax.f32 %v751, 0.0
    %v756 = vmax.f32 %v753, 0.0
    %v757 = vpack.c.bf16 %v756, %v755
    %v766 = vunpack.c.l.b16 %v659
    %v767 = vunpack.c.l.b16 %v660
    %v768 = vunpack.c.l.b16 %v661
    %v769 = vunpack.c.l.b16 %v662
    %v770 = vunpack.c.l.b16 %v663
    %v771 = vunpack.c.l.b16 %v664
    %v772 = vunpack.c.l.b16 %v665
    %v773 = vunpack.c.l.b16 %v666
    %v774 = vpack.c.b16 %v767, %v766
    %v775 = vpack.c.b16 %v769, %v768
    %v776 = vpack.c.b16 %v771, %v770
    %v777 = vpack.c.b16 %v773, %v772
    %vm782 = vcmask 523264
    %v784 = vsel %vm782, %v757, 0
    %786 = vmatpush.bf16.msra.mxu0 0
    %787 = vmatpush.bf16.msra.mxu0 0
    %788 = vmatpush.bf16.msra.mxu0 0
    %789 = vmatpush.bf16.msra.mxu0 0
    %790 = vmatpush.bf16.msra.mxu0 %v777
    %791 = vmatpush.bf16.msra.mxu0 %v776
    %792 = vmatpush.bf16.msra.mxu0 %v775
    %793 = vmatpush.bf16.msra.mxu0 %v774
    %794 = vmatmul.bf16.gmra.mxu0 %v784
    %v795 = vpop.f32.mrf.mxu0
    %v796 = vadd.f32 0.0, %v795
    %v797 = vpop.f32.mrf.mxu0
    %v798 = vadd.f32 0.0, %v797
    %799 = vdwg.mxu0
    %v800 = vadd.f32 %v650, %v796
    %v801 = vadd.f32 %v651, %v798
    %v803 = vperm.slane %v667, 0
    %v805 = vadd.f32 %v800, %v803
    %v806 = vadd.f32 %v801, %v803
    %v807 = vld [vmem:[%s3] sm:$0xff]
    %v808 = vld [vmem:[%s3 + $0x8] sm:$0xff]
    %809 = vset.pattern.permute.xlu0 0
    %810 = vperm.xlu0 %809, %v807
    %v811 = vpop.permute.xlu0 %810
    %812 = vset.pattern.permute.xlu0 0
    %813 = vperm.xlu0 %812, %v808
    %v814 = vpop.permute.xlu0 %813
    %vm815 = vcmp.eq.s32.totalorder %v190, %v811
    %vm816 = vcmp.eq.s32.totalorder %v190, %v814
    %v817 = vsel %vm815, 1, 0
    %v818 = vsel %vm816, 1, 0
    %v819 = vcvt.s32.f32 %v817
    %v820 = vcvt.s32.f32 %v818
    %821 = vmatpush.msra.mxu0 %v222
    %822 = vmatpush.msra.mxu0 %v221
    %823 = vmatpush.msra.mxu0 %v220
    %824 = vmatpush.msra.mxu0 %v219
    %825 = vmatpush.msra.mxu0 %v218
    %826 = vmatpush.msra.mxu0 %v217
    %827 = vmatpush.msra.mxu0 %v216
    %828 = vmatpush.msra.mxu0 %v215
    %829 = vmatpush.msra.mxu0 %v214
    %830 = vmatpush.msra.mxu0 %v213
    %831 = vmatpush.msra.mxu0 %v212
    %832 = vmatpush.msra.mxu0 %v211
    %833 = vmatpush.msra.mxu0 %v210
    %834 = vmatpush.msra.mxu0 %v209
    %835 = vmatpush.msra.mxu0 %v208
    %836 = vmatpush.msra.mxu0 %v207
    %837 = vmatmul.f32.gmra.mxu0 %v819
    %v838 = vpop.f32.mrf.mxu0
    %v839 = vadd.f32 0.0, %v838
    %840 = vmatmul.f32.gmra.mxu0 %v820
    %v841 = vpop.f32.mrf.mxu0
    %v842 = vadd.f32 0.0, %v841
    %843 = vdwg.mxu0
    %v844 = vld [vmem:[%s15] sm:$0xff]
    %v845 = vadd.f32 %v839, %v844
    %v846 = vadd.f32 %v842, %v844
    %v847 = vld [vmem:[%s41] sm:$0x1]
    %v848 = vld [vmem:[%s43] sm:$0x1]
    %v849 = vld [vmem:[%s45] sm:$0xf]
    %v850 = vld [vmem:[%s45 + $0x4] sm:$0xf]
    %v851 = vld [vmem:[%s45 + $0x8] sm:$0xf]
    %v852 = vld [vmem:[%s45 + $0xc] sm:$0xf]
    %v853 = vld [vmem:[%s47] sm:$0x1]
    %v854 = vld [vmem:[%s49] sm:$0xf]
    %v855 = vld [vmem:[%s49 + $0x4] sm:$0xf]
    %v856 = vld [vmem:[%s49 + $0x8] sm:$0xf]
    %v857 = vld [vmem:[%s49 + $0xc] sm:$0xf]
    %v858 = vld [vmem:[%s51] sm:$0x1]
    %v859 = vsel %vm275, %v845, 0.0
    %860 = vadd.xlane.f32.xlu0 %v859
    %v861 = vpop.xlane.xlu0 %860
    %v862 = vsel %vm275, %v846, 0.0
    %863 = vadd.xlane.f32.xlu0 %v862
    %v864 = vpop.xlane.xlu0 %863
    %v865 = vmul.f32 %v861, %v288
    %v866 = vmul.f32 %v864, %v288
    %v867 = vsub.f32 %v845, %v865
    %v868 = vsub.f32 %v846, %v866
    %v869 = vmul.f32 %v867, %v867
    %v870 = vmul.f32 %v868, %v868
    %v871 = vsel %vm275, %v869, 0.0
    %872 = vadd.xlane.f32.xlu0 %v871
    %v873 = vpop.xlane.xlu0 %872
    %v874 = vsel %vm275, %v870, 0.0
    %875 = vadd.xlane.f32.xlu0 %v874
    %v876 = vpop.xlane.xlu0 %875
    %v877 = vmul.f32 %v873, %v288
    %v878 = vmul.f32 %v876, %v288
    %v879 = vadd.f32 %v877, 1e-05
    %v880 = vadd.f32 %v878, 1e-05
    %v881 = vrsqrt.pop %v879
    %v882 = vmul.f32 %v881, %v879
    %v883 = vmul.f32 %v882, %v881
    %v884 = vmul.f32 0.5, %v883
    %v885 = vsub.f32 1.5, %v884
    %v886 = vmul.f32 %v881, %v885
    %vm887 = vweird.f32 %v879
    %vm888 = vweird.f32 %v881
    %vm889 = vmor %vm887, %vm888
    %v890 = vsel %vm889, %v881, %v886
    %v891 = vrsqrt.pop %v880
    %v892 = vmul.f32 %v891, %v880
    %v893 = vmul.f32 %v892, %v891
    %v894 = vmul.f32 0.5, %v893
    %v895 = vsub.f32 1.5, %v894
    %v896 = vmul.f32 %v891, %v895
    %vm897 = vweird.f32 %v880
    %vm898 = vweird.f32 %v891
    %vm899 = vmor %vm897, %vm898
    %v900 = vsel %vm899, %v891, %v896
    %v901 = vmul.f32 %v867, %v890
    %v902 = vmul.f32 %v868, %v900
    %v904 = vperm.slane %v847, 0
    %v906 = vmul.f32 %v901, %v904
    %v907 = vmul.f32 %v902, %v904
    %v909 = vperm.slane %v848, 0
    %v911 = vadd.f32 %v906, %v909
    %v912 = vadd.f32 %v907, %v909
    %v913 = vpack.c.bf16 %v912, %v911
    %v915 = vperm.slane %v853, 0
    %v921 = vunpack.c.l.b16 %v849
    %v922 = vunpack.c.l.b16 %v850
    %v923 = vunpack.c.l.b16 %v851
    %v924 = vunpack.c.l.b16 %v852
    %v925 = vpack.c.b16 %v922, %v921
    %v926 = vpack.c.b16 %v924, %v923
    %v930 = vsel %vm275, %v913, 0
    %932 = vmatpush.bf16.msra.mxu0 0
    %933 = vmatpush.bf16.msra.mxu0 0
    %934 = vmatpush.bf16.msra.mxu0 0
    %935 = vmatpush.bf16.msra.mxu0 0
    %936 = vmatpush.bf16.msra.mxu0 0
    %937 = vmatpush.bf16.msra.mxu0 0
    %938 = vmatpush.bf16.msra.mxu0 %v926
    %939 = vmatpush.bf16.msra.mxu0 %v925
    %940 = vmatmul.bf16.gmra.mxu0 %v930
    %v941 = vpop.f32.mrf.mxu0
    %v942 = vadd.f32 %v915, %v941
    %v943 = vpop.f32.mrf.mxu0
    %v944 = vadd.f32 %v915, %v943
    %945 = vdwg.mxu0
    %v946 = vpack.c.bf16 %v942, %v942
    %v947 = vpack.c.bf16 %v944, %v944
    %v949 = vunpack.c.l.b16 %v946
    %v950 = vpack.c.b16 %v949, %v949
    %951 = vrot.lane.b32.xlu0 %v950, 96
    %v952 = vpop.permute.xlu0 %951
    %v954 = vsel %vm383, %v946, 0
    %v957 = vsel %vm383, %v952, 0
    %959 = vmatpush.bf16.xpose.msra.mxu0 0
    %960 = vmatpush.bf16.xpose.msra.mxu0 0
    %961 = vmatpush.bf16.xpose.msra.mxu0 0
    %962 = vmatpush.bf16.xpose.msra.mxu0 0
    %963 = vmatpush.bf16.xpose.msra.mxu0 0
    %964 = vmatpush.bf16.xpose.msra.mxu0 0
    %965 = vmatpush.bf16.xpose.msra.mxu0 0
    %966 = vmatpush.bf16.xpose.msra.mxu0 %v957
    %967 = vmatmul.bf16.gmra.mxu0 %v954
    %v968 = vpop.f32.mrf.mxu0
    %v969 = vadd.f32 %v205, %v968
    %v970 = vpop.f32.mrf.mxu0
    %971 = vdwg.mxu0
    %v973 = vunpack.c.l.b16 %v947
    %v974 = vpack.c.b16 %v973, %v973
    %975 = vrot.lane.b32.xlu0 %v974, 96
    %v976 = vpop.permute.xlu0 %975
    %v978 = vsel %vm383, %v947, 0
    %v981 = vsel %vm383, %v976, 0
    %983 = vmatpush.bf16.xpose.msra.mxu0 0
    %984 = vmatpush.bf16.xpose.msra.mxu0 0
    %985 = vmatpush.bf16.xpose.msra.mxu0 0
    %986 = vmatpush.bf16.xpose.msra.mxu0 0
    %987 = vmatpush.bf16.xpose.msra.mxu0 0
    %988 = vmatpush.bf16.xpose.msra.mxu0 0
    %989 = vmatpush.bf16.xpose.msra.mxu0 0
    %990 = vmatpush.bf16.xpose.msra.mxu0 %v981
    %991 = vmatmul.bf16.gmra.mxu0 %v978
    %v992 = vpop.f32.mrf.mxu0
    %v993 = vadd.f32 %v206, %v992
    %v994 = vpop.f32.mrf.mxu0
    %995 = vdwg.mxu0
    %v996 = vsel %vm427, %v969, -inf
    %997 = vmax.xlane.f32.xlu0 %v996
    %v998 = vpop.xlane.xlu0 %997
    %v999 = vsel %vm427, %v993, -inf
    %1000 = vmax.xlane.f32.xlu0 %v999
    %v1001 = vpop.xlane.xlu0 %1000
    %v1002 = vsub.f32 %v969, %v998
    %v1003 = vsub.f32 %v993, %v1001
    %v1004 = vmul.f32 %v1002, 1.442695
    %v1005 = vpow.pop %v1004
    %v1006 = vmul.f32 %v1003, 1.442695
    %v1007 = vpow.pop %v1006
    %v1008 = vsel %vm427, %v1005, 0.0
    %1009 = vadd.xlane.f32.xlu0 %v1008
    %v1010 = vpop.xlane.xlu0 %1009
    %v1011 = vsel %vm427, %v1007, 0.0
    %1012 = vadd.xlane.f32.xlu0 %v1011
    %v1013 = vpop.xlane.xlu0 %1012
    %v1014 = vrcp.pop %v1010
    %v1015 = vrcp.pop %v1013
    %v1016 = vmul.f32 %v1005, %v1014
    %v1017 = vmul.f32 %v1007, %v1015
    %v1018 = vpack.c.bf16 %v1016, %v1016
    %v1019 = vpack.c.bf16 %v1017, %v1017
    %1020 = vrot.lane.b32.xlu0 %v950, 64
    %v1021 = vpop.permute.xlu0 %1020
    %v1023 = vsel %vm427, %v1018, 0
    %v1026 = vsel %vm457, %v1021, 0
    %1028 = vmatpush.bf16.msra.mxu0 0
    %1029 = vmatpush.bf16.msra.mxu0 0
    %1030 = vmatpush.bf16.msra.mxu0 0
    %1031 = vmatpush.bf16.msra.mxu0 0
    %1032 = vmatpush.bf16.msra.mxu0 0
    %1033 = vmatpush.bf16.msra.mxu0 0
    %1034 = vmatpush.bf16.msra.mxu0 0
    %1035 = vmatpush.bf16.msra.mxu0 %v1026
    %1036 = vmatmul.bf16.gmra.mxu0 %v1023
    %v1037 = vpop.f32.mrf.mxu0
    %v1038 = vadd.f32 0.0, %v1037
    %v1039 = vpop.f32.mrf.mxu0
    %1040 = vdwg.mxu0
    %1041 = vrot.lane.b32.xlu0 %v974, 64
    %v1042 = vpop.permute.xlu0 %1041
    %v1044 = vsel %vm427, %v1019, 0
    %v1047 = vsel %vm457, %v1042, 0
    %1049 = vmatpush.bf16.msra.mxu0 0
    %1050 = vmatpush.bf16.msra.mxu0 0
    %1051 = vmatpush.bf16.msra.mxu0 0
    %1052 = vmatpush.bf16.msra.mxu0 0
    %1053 = vmatpush.bf16.msra.mxu0 0
    %1054 = vmatpush.bf16.msra.mxu0 0
    %1055 = vmatpush.bf16.msra.mxu0 0
    %1056 = vmatpush.bf16.msra.mxu0 %v1047
    %1057 = vmatmul.bf16.gmra.mxu0 %v1044
    %v1058 = vpop.f32.mrf.mxu0
    %v1059 = vadd.f32 0.0, %v1058
    %v1060 = vpop.f32.mrf.mxu0
    %1061 = vdwg.mxu0
    %1062 = vrot.lane.b32.xlu0 %v950, 112
    %v1063 = vpop.permute.xlu0 %1062
    %1064 = vrot.lane.b32.xlu0 %v950, 80
    %v1065 = vpop.permute.xlu0 %1064
    %v1067 = vsel %vm383, %v1063, 0
    %v1070 = vsel %vm383, %v1065, 0
    %1072 = vmatpush.bf16.xpose.msra.mxu0 0
    %1073 = vmatpush.bf16.xpose.msra.mxu0 0
    %1074 = vmatpush.bf16.xpose.msra.mxu0 0
    %1075 = vmatpush.bf16.xpose.msra.mxu0 0
    %1076 = vmatpush.bf16.xpose.msra.mxu0 0
    %1077 = vmatpush.bf16.xpose.msra.mxu0 0
    %1078 = vmatpush.bf16.xpose.msra.mxu0 0
    %1079 = vmatpush.bf16.xpose.msra.mxu0 %v1070
    %1080 = vmatmul.bf16.gmra.mxu0 %v1067
    %v1081 = vpop.f32.mrf.mxu0
    %v1082 = vadd.f32 %v205, %v1081
    %v1083 = vpop.f32.mrf.mxu0
    %1084 = vdwg.mxu0
    %1085 = vrot.lane.b32.xlu0 %v974, 112
    %v1086 = vpop.permute.xlu0 %1085
    %1087 = vrot.lane.b32.xlu0 %v974, 80
    %v1088 = vpop.permute.xlu0 %1087
    %v1090 = vsel %vm383, %v1086, 0
    %v1093 = vsel %vm383, %v1088, 0
    %1095 = vmatpush.bf16.xpose.msra.mxu0 0
    %1096 = vmatpush.bf16.xpose.msra.mxu0 0
    %1097 = vmatpush.bf16.xpose.msra.mxu0 0
    %1098 = vmatpush.bf16.xpose.msra.mxu0 0
    %1099 = vmatpush.bf16.xpose.msra.mxu0 0
    %1100 = vmatpush.bf16.xpose.msra.mxu0 0
    %1101 = vmatpush.bf16.xpose.msra.mxu0 0
    %1102 = vmatpush.bf16.xpose.msra.mxu0 %v1093
    %1103 = vmatmul.bf16.gmra.mxu0 %v1090
    %v1104 = vpop.f32.mrf.mxu0
    %v1105 = vadd.f32 %v206, %v1104
    %v1106 = vpop.f32.mrf.mxu0
    %1107 = vdwg.mxu0
    %v1108 = vsel %vm427, %v1082, -inf
    %1109 = vmax.xlane.f32.xlu0 %v1108
    %v1110 = vpop.xlane.xlu0 %1109
    %v1111 = vsel %vm427, %v1105, -inf
    %1112 = vmax.xlane.f32.xlu0 %v1111
    %v1113 = vpop.xlane.xlu0 %1112
    %v1114 = vsub.f32 %v1082, %v1110
    %v1115 = vsub.f32 %v1105, %v1113
    %v1116 = vmul.f32 %v1114, 1.442695
    %v1117 = vpow.pop %v1116
    %v1118 = vmul.f32 %v1115, 1.442695
    %v1119 = vpow.pop %v1118
    %v1120 = vsel %vm427, %v1117, 0.0
    %1121 = vadd.xlane.f32.xlu0 %v1120
    %v1122 = vpop.xlane.xlu0 %1121
    %v1123 = vsel %vm427, %v1119, 0.0
    %1124 = vadd.xlane.f32.xlu0 %v1123
    %v1125 = vpop.xlane.xlu0 %1124
    %v1126 = vrcp.pop %v1122
    %v1127 = vrcp.pop %v1125
    %v1128 = vmul.f32 %v1117, %v1126
    %v1129 = vmul.f32 %v1119, %v1127
    %v1130 = vpack.c.bf16 %v1128, %v1128
    %v1131 = vpack.c.bf16 %v1129, %v1129
    %1132 = vrot.lane.b32.xlu0 %v950, 48
    %v1133 = vpop.permute.xlu0 %1132
    %v1135 = vsel %vm427, %v1130, 0
    %v1138 = vsel %vm457, %v1133, 0
    %1140 = vmatpush.bf16.msra.mxu0 0
    %1141 = vmatpush.bf16.msra.mxu0 0
    %1142 = vmatpush.bf16.msra.mxu0 0
    %1143 = vmatpush.bf16.msra.mxu0 0
    %1144 = vmatpush.bf16.msra.mxu0 0
    %1145 = vmatpush.bf16.msra.mxu0 0
    %1146 = vmatpush.bf16.msra.mxu0 0
    %1147 = vmatpush.bf16.msra.mxu0 %v1138
    %1148 = vmatmul.bf16.gmra.mxu0 %v1135
    %v1149 = vpop.f32.mrf.mxu0
    %v1150 = vadd.f32 0.0, %v1149
    %v1151 = vpop.f32.mrf.mxu0
    %1152 = vdwg.mxu0
    %1153 = vrot.lane.b32.xlu0 %v974, 48
    %v1154 = vpop.permute.xlu0 %1153
    %v1156 = vsel %vm427, %v1131, 0
    %v1159 = vsel %vm457, %v1154, 0
    %1161 = vmatpush.bf16.msra.mxu0 0
    %1162 = vmatpush.bf16.msra.mxu0 0
    %1163 = vmatpush.bf16.msra.mxu0 0
    %1164 = vmatpush.bf16.msra.mxu0 0
    %1165 = vmatpush.bf16.msra.mxu0 0
    %1166 = vmatpush.bf16.msra.mxu0 0
    %1167 = vmatpush.bf16.msra.mxu0 0
    %1168 = vmatpush.bf16.msra.mxu0 %v1159
    %1169 = vmatmul.bf16.gmra.mxu0 %v1156
    %v1170 = vpop.f32.mrf.mxu0
    %v1171 = vadd.f32 0.0, %v1170
    %v1172 = vpop.f32.mrf.mxu0
    %1173 = vdwg.mxu0
    %1176 = vrot.lane.b32.xlu0 %v1150, 16
    %v1177 = vpop.permute.xlu0 %1176
    %1178 = vrot.lane.b32.xlu0 %v1171, 16
    %v1179 = vpop.permute.xlu0 %1178
    %v1182 = vsel %vm383, %v1038, %v1177
    %v1183 = vsel %vm383, %v1059, %v1179
    %v1184 = vpack.c.bf16 %v1183, %v1182
    %v1186 = vperm.slane %v858, 0
    %v1192 = vunpack.c.l.b16 %v854
    %v1193 = vunpack.c.l.b16 %v855
    %v1194 = vunpack.c.l.b16 %v856
    %v1195 = vunpack.c.l.b16 %v857
    %v1196 = vpack.c.b16 %v1193, %v1192
    %v1197 = vpack.c.b16 %v1195, %v1194
    %v1201 = vsel %vm275, %v1184, 0
    %1203 = vmatpush.bf16.msra.mxu0 0
    %1204 = vmatpush.bf16.msra.mxu0 0
    %1205 = vmatpush.bf16.msra.mxu0 0
    %1206 = vmatpush.bf16.msra.mxu0 0
    %1207 = vmatpush.bf16.msra.mxu0 0
    %1208 = vmatpush.bf16.msra.mxu0 0
    %1209 = vmatpush.bf16.msra.mxu0 %v1197
    %1210 = vmatpush.bf16.msra.mxu0 %v1196
    %1211 = vmatmul.bf16.gmra.mxu0 %v1201
    %v1212 = vpop.f32.mrf.mxu0
    %v1213 = vadd.f32 %v1186, %v1212
    %v1214 = vpop.f32.mrf.mxu0
    %v1215 = vadd.f32 %v1186, %v1214
    %1216 = vdwg.mxu0
    %v1217 = vadd.f32 %v845, %v1213
    %v1218 = vadd.f32 %v846, %v1215
    %v1219 = vld [vmem:[%s53] sm:$0x1]
    %v1220 = vld [vmem:[%s55] sm:$0x1]
    %v1221 = vld [vmem:[%s57] sm:$0xf]
    %v1222 = vld [vmem:[%s57 + $0x4] sm:$0xf]
    %v1223 = vld [vmem:[%s57 + $0x8] sm:$0xf]
    %v1224 = vld [vmem:[%s57 + $0xc] sm:$0xf]
    %v1225 = vld [vmem:[%s59] sm:$0x1]
    %v1226 = vld [vmem:[%s61] sm:$0xf]
    %v1227 = vld [vmem:[%s61 + $0x4] sm:$0xf]
    %v1228 = vld [vmem:[%s61 + $0x8] sm:$0xf]
    %v1229 = vld [vmem:[%s61 + $0xc] sm:$0xf]
    %v1230 = vld [vmem:[%s63] sm:$0x1]
    %v1231 = vld [vmem:[%s65] sm:$0xf]
    %v1232 = vld [vmem:[%s65 + $0x4] sm:$0xf]
    %v1233 = vld [vmem:[%s65 + $0x8] sm:$0xf]
    %v1234 = vld [vmem:[%s65 + $0xc] sm:$0xf]
    %v1235 = vld [vmem:[%s67] sm:$0x1]
    %v1236 = vsel %vm275, %v1217, 0.0
    %1237 = vadd.xlane.f32.xlu0 %v1236
    %v1238 = vpop.xlane.xlu0 %1237
    %v1239 = vsel %vm275, %v1218, 0.0
    %1240 = vadd.xlane.f32.xlu0 %v1239
    %v1241 = vpop.xlane.xlu0 %1240
    %v1242 = vmul.f32 %v1238, %v288
    %v1243 = vmul.f32 %v1241, %v288
    %v1244 = vsub.f32 %v1217, %v1242
    %v1245 = vsub.f32 %v1218, %v1243
    %v1246 = vmul.f32 %v1244, %v1244
    %v1247 = vmul.f32 %v1245, %v1245
    %v1248 = vsel %vm275, %v1246, 0.0
    %1249 = vadd.xlane.f32.xlu0 %v1248
    %v1250 = vpop.xlane.xlu0 %1249
    %v1251 = vsel %vm275, %v1247, 0.0
    %1252 = vadd.xlane.f32.xlu0 %v1251
    %v1253 = vpop.xlane.xlu0 %1252
    %v1254 = vmul.f32 %v1250, %v288
    %v1255 = vmul.f32 %v1253, %v288
    %v1256 = vadd.f32 %v1254, 1e-05
    %v1257 = vadd.f32 %v1255, 1e-05
    %v1258 = vrsqrt.pop %v1256
    %v1259 = vmul.f32 %v1258, %v1256
    %v1260 = vmul.f32 %v1259, %v1258
    %v1261 = vmul.f32 0.5, %v1260
    %v1262 = vsub.f32 1.5, %v1261
    %v1263 = vmul.f32 %v1258, %v1262
    %vm1264 = vweird.f32 %v1256
    %vm1265 = vweird.f32 %v1258
    %vm1266 = vmor %vm1264, %vm1265
    %v1267 = vsel %vm1266, %v1258, %v1263
    %v1268 = vrsqrt.pop %v1257
    %v1269 = vmul.f32 %v1268, %v1257
    %v1270 = vmul.f32 %v1269, %v1268
    %v1271 = vmul.f32 0.5, %v1270
    %v1272 = vsub.f32 1.5, %v1271
    %v1273 = vmul.f32 %v1268, %v1272
    %vm1274 = vweird.f32 %v1257
    %vm1275 = vweird.f32 %v1268
    %vm1276 = vmor %vm1274, %vm1275
    %v1277 = vsel %vm1276, %v1268, %v1273
    %v1278 = vmul.f32 %v1244, %v1267
    %v1279 = vmul.f32 %v1245, %v1277
    %v1281 = vperm.slane %v1219, 0
    %v1283 = vmul.f32 %v1278, %v1281
    %v1284 = vmul.f32 %v1279, %v1281
    %v1286 = vperm.slane %v1220, 0
    %v1288 = vadd.f32 %v1283, %v1286
    %v1289 = vadd.f32 %v1284, %v1286
    %v1290 = vpack.c.bf16 %v1289, %v1288
    %v1292 = vperm.slane %v1225, 0
    %v1298 = vunpack.c.l.b16 %v1221
    %v1299 = vunpack.c.l.b16 %v1222
    %v1300 = vunpack.c.l.b16 %v1223
    %v1301 = vunpack.c.l.b16 %v1224
    %v1302 = vpack.c.b16 %v1299, %v1298
    %v1303 = vpack.c.b16 %v1301, %v1300
    %v1307 = vsel %vm275, %v1290, 0
    %1309 = vmatpush.bf16.msra.mxu0 0
    %1310 = vmatpush.bf16.msra.mxu0 0
    %1311 = vmatpush.bf16.msra.mxu0 0
    %1312 = vmatpush.bf16.msra.mxu0 0
    %1313 = vmatpush.bf16.msra.mxu0 0
    %1314 = vmatpush.bf16.msra.mxu0 0
    %1315 = vmatpush.bf16.msra.mxu0 %v1303
    %1316 = vmatpush.bf16.msra.mxu0 %v1302
    %1317 = vmatmul.bf16.gmra.mxu0 %v1307
    %v1318 = vpop.f32.mrf.mxu0
    %v1319 = vadd.f32 %v1292, %v1318
    %v1320 = vpop.f32.mrf.mxu0
    %v1321 = vadd.f32 %v1292, %v1320
    %1322 = vdwg.mxu0
    %v1323 = vpack.c.bf16 %v806, %v805
    %v1325 = vperm.slane %v1230, 0
    %v1331 = vunpack.c.l.b16 %v1226
    %v1332 = vunpack.c.l.b16 %v1227
    %v1333 = vunpack.c.l.b16 %v1228
    %v1334 = vunpack.c.l.b16 %v1229
    %v1335 = vpack.c.b16 %v1332, %v1331
    %v1336 = vpack.c.b16 %v1334, %v1333
    %v1340 = vsel %vm275, %v1323, 0
    %1342 = vmatpush.bf16.msra.mxu0 0
    %1343 = vmatpush.bf16.msra.mxu0 0
    %1344 = vmatpush.bf16.msra.mxu0 0
    %1345 = vmatpush.bf16.msra.mxu0 0
    %1346 = vmatpush.bf16.msra.mxu0 0
    %1347 = vmatpush.bf16.msra.mxu0 0
    %1348 = vmatpush.bf16.msra.mxu0 %v1336
    %1349 = vmatpush.bf16.msra.mxu0 %v1335
    %1350 = vmatmul.bf16.gmra.mxu0 %v1340
    %v1351 = vpop.f32.mrf.mxu0
    %v1352 = vadd.f32 %v1325, %v1351
    %v1353 = vpop.f32.mrf.mxu0
    %v1354 = vadd.f32 %v1325, %v1353
    %1355 = vdwg.mxu0
    %v1356 = vpack.c.bf16 %v1319, %v1319
    %v1357 = vpack.c.bf16 %v1321, %v1321
    %v1358 = vpack.c.bf16 %v1352, %v1352
    %v1359 = vpack.c.bf16 %v1354, %v1354
    %v1361 = vsel %vm383, %v1356, 0
    %v1364 = vsel %vm383, %v1358, 0
    %1366 = vmatpush.bf16.xpose.msra.mxu0 0
    %1367 = vmatpush.bf16.xpose.msra.mxu0 0
    %1368 = vmatpush.bf16.xpose.msra.mxu0 0
    %1369 = vmatpush.bf16.xpose.msra.mxu0 0
    %1370 = vmatpush.bf16.xpose.msra.mxu0 0
    %1371 = vmatpush.bf16.xpose.msra.mxu0 0
    %1372 = vmatpush.bf16.xpose.msra.mxu0 0
    %1373 = vmatpush.bf16.xpose.msra.mxu0 %v1364
    %1374 = vmatmul.bf16.gmra.mxu0 %v1361
    %v1375 = vpop.f32.mrf.mxu0
    %v1376 = vadd.f32 %v374, %v1375
    %v1377 = vpop.f32.mrf.mxu0
    %1378 = vdwg.mxu0
    %v1380 = vsel %vm383, %v1357, 0
    %v1383 = vsel %vm383, %v1359, 0
    %1385 = vmatpush.bf16.xpose.msra.mxu0 0
    %1386 = vmatpush.bf16.xpose.msra.mxu0 0
    %1387 = vmatpush.bf16.xpose.msra.mxu0 0
    %1388 = vmatpush.bf16.xpose.msra.mxu0 0
    %1389 = vmatpush.bf16.xpose.msra.mxu0 0
    %1390 = vmatpush.bf16.xpose.msra.mxu0 0
    %1391 = vmatpush.bf16.xpose.msra.mxu0 0
    %1392 = vmatpush.bf16.xpose.msra.mxu0 %v1383
    %1393 = vmatmul.bf16.gmra.mxu0 %v1380
    %v1394 = vpop.f32.mrf.mxu0
    %v1395 = vadd.f32 %v375, %v1394
    %v1396 = vpop.f32.mrf.mxu0
    %1397 = vdwg.mxu0
    %v1398 = vsel %vm427, %v1376, -inf
    %1399 = vmax.xlane.f32.xlu0 %v1398
    %v1400 = vpop.xlane.xlu0 %1399
    %v1401 = vsel %vm427, %v1395, -inf
    %1402 = vmax.xlane.f32.xlu0 %v1401
    %v1403 = vpop.xlane.xlu0 %1402
    %v1404 = vsub.f32 %v1376, %v1400
    %v1405 = vsub.f32 %v1395, %v1403
    %v1406 = vmul.f32 %v1404, 1.442695
    %v1407 = vpow.pop %v1406
    %v1408 = vmul.f32 %v1405, 1.442695
    %v1409 = vpow.pop %v1408
    %v1410 = vsel %vm427, %v1407, 0.0
    %1411 = vadd.xlane.f32.xlu0 %v1410
    %v1412 = vpop.xlane.xlu0 %1411
    %v1413 = vsel %vm427, %v1409, 0.0
    %1414 = vadd.xlane.f32.xlu0 %v1413
    %v1415 = vpop.xlane.xlu0 %1414
    %v1416 = vrcp.pop %v1412
    %v1417 = vrcp.pop %v1415
    %v1418 = vmul.f32 %v1407, %v1416
    %v1419 = vmul.f32 %v1409, %v1417
    %v1420 = vpack.c.bf16 %v1418, %v1418
    %v1421 = vpack.c.bf16 %v1419, %v1419
    %v1423 = vunpack.c.l.b16 %v1358
    %v1424 = vpack.c.b16 %v1423, %v1423
    %1425 = vrot.lane.b32.xlu0 %v1424, 96
    %v1426 = vpop.permute.xlu0 %1425
    %v1428 = vsel %vm427, %v1420, 0
    %v1431 = vsel %vm457, %v1426, 0
    %1433 = vmatpush.bf16.msra.mxu0 0
    %1434 = vmatpush.bf16.msra.mxu0 0
    %1435 = vmatpush.bf16.msra.mxu0 0
    %1436 = vmatpush.bf16.msra.mxu0 0
    %1437 = vmatpush.bf16.msra.mxu0 0
    %1438 = vmatpush.bf16.msra.mxu0 0
    %1439 = vmatpush.bf16.msra.mxu0 0
    %1440 = vmatpush.bf16.msra.mxu0 %v1431
    %1441 = vmatmul.bf16.gmra.mxu0 %v1428
    %v1442 = vpop.f32.mrf.mxu0
    %v1443 = vadd.f32 0.0, %v1442
    %v1444 = vpop.f32.mrf.mxu0
    %1445 = vdwg.mxu0
    %v1447 = vunpack.c.l.b16 %v1359
    %v1448 = vpack.c.b16 %v1447, %v1447
    %1449 = vrot.lane.b32.xlu0 %v1448, 96
    %v1450 = vpop.permute.xlu0 %1449
    %v1452 = vsel %vm427, %v1421, 0
    %v1455 = vsel %vm457, %v1450, 0
    %1457 = vmatpush.bf16.msra.mxu0 0
    %1458 = vmatpush.bf16.msra.mxu0 0
    %1459 = vmatpush.bf16.msra.mxu0 0
    %1460 = vmatpush.bf16.msra.mxu0 0
    %1461 = vmatpush.bf16.msra.mxu0 0
    %1462 = vmatpush.bf16.msra.mxu0 0
    %1463 = vmatpush.bf16.msra.mxu0 0
    %1464 = vmatpush.bf16.msra.mxu0 %v1455
    %1465 = vmatmul.bf16.gmra.mxu0 %v1452
    %v1466 = vpop.f32.mrf.mxu0
    %v1467 = vadd.f32 0.0, %v1466
    %v1468 = vpop.f32.mrf.mxu0
    %1469 = vdwg.mxu0
    %v1471 = vunpack.c.l.b16 %v1356
    %v1472 = vpack.c.b16 %v1471, %v1471
    %1473 = vrot.lane.b32.xlu0 %v1472, 112
    %v1474 = vpop.permute.xlu0 %1473
    %1475 = vrot.lane.b32.xlu0 %v1424, 112
    %v1476 = vpop.permute.xlu0 %1475
    %v1478 = vsel %vm383, %v1474, 0
    %v1481 = vsel %vm383, %v1476, 0
    %1483 = vmatpush.bf16.xpose.msra.mxu0 0
    %1484 = vmatpush.bf16.xpose.msra.mxu0 0
    %1485 = vmatpush.bf16.xpose.msra.mxu0 0
    %1486 = vmatpush.bf16.xpose.msra.mxu0 0
    %1487 = vmatpush.bf16.xpose.msra.mxu0 0
    %1488 = vmatpush.bf16.xpose.msra.mxu0 0
    %1489 = vmatpush.bf16.xpose.msra.mxu0 0
    %1490 = vmatpush.bf16.xpose.msra.mxu0 %v1481
    %1491 = vmatmul.bf16.gmra.mxu0 %v1478
    %v1492 = vpop.f32.mrf.mxu0
    %v1493 = vadd.f32 %v374, %v1492
    %v1494 = vpop.f32.mrf.mxu0
    %1495 = vdwg.mxu0
    %v1497 = vunpack.c.l.b16 %v1357
    %v1498 = vpack.c.b16 %v1497, %v1497
    %1499 = vrot.lane.b32.xlu0 %v1498, 112
    %v1500 = vpop.permute.xlu0 %1499
    %1501 = vrot.lane.b32.xlu0 %v1448, 112
    %v1502 = vpop.permute.xlu0 %1501
    %v1504 = vsel %vm383, %v1500, 0
    %v1507 = vsel %vm383, %v1502, 0
    %1509 = vmatpush.bf16.xpose.msra.mxu0 0
    %1510 = vmatpush.bf16.xpose.msra.mxu0 0
    %1511 = vmatpush.bf16.xpose.msra.mxu0 0
    %1512 = vmatpush.bf16.xpose.msra.mxu0 0
    %1513 = vmatpush.bf16.xpose.msra.mxu0 0
    %1514 = vmatpush.bf16.xpose.msra.mxu0 0
    %1515 = vmatpush.bf16.xpose.msra.mxu0 0
    %1516 = vmatpush.bf16.xpose.msra.mxu0 %v1507
    %1517 = vmatmul.bf16.gmra.mxu0 %v1504
    %v1518 = vpop.f32.mrf.mxu0
    %v1519 = vadd.f32 %v375, %v1518
    %v1520 = vpop.f32.mrf.mxu0
    %1521 = vdwg.mxu0
    %v1522 = vsel %vm427, %v1493, -inf
    %1523 = vmax.xlane.f32.xlu0 %v1522
    %v1524 = vpop.xlane.xlu0 %1523
    %v1525 = vsel %vm427, %v1519, -inf
    %1526 = vmax.xlane.f32.xlu0 %v1525
    %v1527 = vpop.xlane.xlu0 %1526
    %v1528 = vsub.f32 %v1493, %v1524
    %v1529 = vsub.f32 %v1519, %v1527
    %v1530 = vmul.f32 %v1528, 1.442695
    %v1531 = vpow.pop %v1530
    %v1532 = vmul.f32 %v1529, 1.442695
    %v1533 = vpow.pop %v1532
    %v1534 = vsel %vm427, %v1531, 0.0
    %1535 = vadd.xlane.f32.xlu0 %v1534
    %v1536 = vpop.xlane.xlu0 %1535
    %v1537 = vsel %vm427, %v1533, 0.0
    %1538 = vadd.xlane.f32.xlu0 %v1537
    %v1539 = vpop.xlane.xlu0 %1538
    %v1540 = vrcp.pop %v1536
    %v1541 = vrcp.pop %v1539
    %v1542 = vmul.f32 %v1531, %v1540
    %v1543 = vmul.f32 %v1533, %v1541
    %v1544 = vpack.c.bf16 %v1542, %v1542
    %v1545 = vpack.c.bf16 %v1543, %v1543
    %1546 = vrot.lane.b32.xlu0 %v1424, 80
    %v1547 = vpop.permute.xlu0 %1546
    %v1549 = vsel %vm427, %v1544, 0
    %v1552 = vsel %vm457, %v1547, 0
    %1554 = vmatpush.bf16.msra.mxu0 0
    %1555 = vmatpush.bf16.msra.mxu0 0
    %1556 = vmatpush.bf16.msra.mxu0 0
    %1557 = vmatpush.bf16.msra.mxu0 0
    %1558 = vmatpush.bf16.msra.mxu0 0
    %1559 = vmatpush.bf16.msra.mxu0 0
    %1560 = vmatpush.bf16.msra.mxu0 0
    %1561 = vmatpush.bf16.msra.mxu0 %v1552
    %1562 = vmatmul.bf16.gmra.mxu0 %v1549
    %v1563 = vpop.f32.mrf.mxu0
    %v1564 = vadd.f32 0.0, %v1563
    %v1565 = vpop.f32.mrf.mxu0
    %1566 = vdwg.mxu0
    %1567 = vrot.lane.b32.xlu0 %v1448, 80
    %v1568 = vpop.permute.xlu0 %1567
    %v1570 = vsel %vm427, %v1545, 0
    %v1573 = vsel %vm457, %v1568, 0
    %1575 = vmatpush.bf16.msra.mxu0 0
    %1576 = vmatpush.bf16.msra.mxu0 0
    %1577 = vmatpush.bf16.msra.mxu0 0
    %1578 = vmatpush.bf16.msra.mxu0 0
    %1579 = vmatpush.bf16.msra.mxu0 0
    %1580 = vmatpush.bf16.msra.mxu0 0
    %1581 = vmatpush.bf16.msra.mxu0 0
    %1582 = vmatpush.bf16.msra.mxu0 %v1573
    %1583 = vmatmul.bf16.gmra.mxu0 %v1570
    %v1584 = vpop.f32.mrf.mxu0
    %v1585 = vadd.f32 0.0, %v1584
    %v1586 = vpop.f32.mrf.mxu0
    %1587 = vdwg.mxu0
    %1590 = vrot.lane.b32.xlu0 %v1564, 16
    %v1591 = vpop.permute.xlu0 %1590
    %1592 = vrot.lane.b32.xlu0 %v1585, 16
    %v1593 = vpop.permute.xlu0 %1592
    %v1596 = vsel %vm383, %v1443, %v1591
    %v1597 = vsel %vm383, %v1467, %v1593
    %v1598 = vpack.c.bf16 %v1597, %v1596
    %v1600 = vperm.slane %v1235, 0
    %v1606 = vunpack.c.l.b16 %v1231
    %v1607 = vunpack.c.l.b16 %v1232
    %v1608 = vunpack.c.l.b16 %v1233
    %v1609 = vunpack.c.l.b16 %v1234
    %v1610 = vpack.c.b16 %v1607, %v1606
    %v1611 = vpack.c.b16 %v1609, %v1608
    %v1615 = vsel %vm275, %v1598, 0
    %1617 = vmatpush.bf16.msra.mxu0 0
    %1618 = vmatpush.bf16.msra.mxu0 0
    %1619 = vmatpush.bf16.msra.mxu0 0
    %1620 = vmatpush.bf16.msra.mxu0 0
    %1621 = vmatpush.bf16.msra.mxu0 0
    %1622 = vmatpush.bf16.msra.mxu0 0
    %1623 = vmatpush.bf16.msra.mxu0 %v1611
    %1624 = vmatpush.bf16.msra.mxu0 %v1610
    %1625 = vmatmul.bf16.gmra.mxu0 %v1615
    %v1626 = vpop.f32.mrf.mxu0
    %v1627 = vadd.f32 %v1600, %v1626
    %v1628 = vpop.f32.mrf.mxu0
    %v1629 = vadd.f32 %v1600, %v1628
    %1630 = vdwg.mxu0
    %v1631 = vadd.f32 %v1217, %v1627
    %v1632 = vadd.f32 %v1218, %v1629
    %v1633 = vld [vmem:[%s69] sm:$0x1]
    %v1634 = vld [vmem:[%s71] sm:$0x1]
    %v1635 = vld [vmem:[%s73] sm:$0xf]
    %v1636 = vld [vmem:[%s73 + $0x4] sm:$0xf]
    %v1637 = vld [vmem:[%s73 + $0x8] sm:$0xf]
    %v1638 = vld [vmem:[%s73 + $0xc] sm:$0xf]
    %v1639 = vld [vmem:[%s75] sm:$0x1]
    %v1640 = vld [vmem:[%s77] sm:$0xf]
    %v1641 = vld [vmem:[%s77 + $0x4] sm:$0xf]
    %v1642 = vld [vmem:[%s77 + $0x8] sm:$0xf]
    %v1643 = vld [vmem:[%s77 + $0xc] sm:$0xf]
    %v1644 = vld [vmem:[%s77 + $0x10] sm:$0xf]
    %v1645 = vld [vmem:[%s77 + $0x14] sm:$0xf]
    %v1646 = vld [vmem:[%s77 + $0x18] sm:$0xf]
    %v1647 = vld [vmem:[%s77 + $0x1c] sm:$0xf]
    %v1648 = vld [vmem:[%s79] sm:$0x1]
    %v1649 = vsel %vm275, %v1631, 0.0
    %1650 = vadd.xlane.f32.xlu0 %v1649
    %v1651 = vpop.xlane.xlu0 %1650
    %v1652 = vsel %vm275, %v1632, 0.0
    %1653 = vadd.xlane.f32.xlu0 %v1652
    %v1654 = vpop.xlane.xlu0 %1653
    %v1655 = vmul.f32 %v1651, %v288
    %v1656 = vmul.f32 %v1654, %v288
    %v1657 = vsub.f32 %v1631, %v1655
    %v1658 = vsub.f32 %v1632, %v1656
    %v1659 = vmul.f32 %v1657, %v1657
    %v1660 = vmul.f32 %v1658, %v1658
    %v1661 = vsel %vm275, %v1659, 0.0
    %1662 = vadd.xlane.f32.xlu0 %v1661
    %v1663 = vpop.xlane.xlu0 %1662
    %v1664 = vsel %vm275, %v1660, 0.0
    %1665 = vadd.xlane.f32.xlu0 %v1664
    %v1666 = vpop.xlane.xlu0 %1665
    %v1667 = vmul.f32 %v1663, %v288
    %v1668 = vmul.f32 %v1666, %v288
    %v1669 = vadd.f32 %v1667, 1e-05
    %v1670 = vadd.f32 %v1668, 1e-05
    %v1671 = vrsqrt.pop %v1669
    %v1672 = vmul.f32 %v1671, %v1669
    %v1673 = vmul.f32 %v1672, %v1671
    %v1674 = vmul.f32 0.5, %v1673
    %v1675 = vsub.f32 1.5, %v1674
    %v1676 = vmul.f32 %v1671, %v1675
    %vm1677 = vweird.f32 %v1669
    %vm1678 = vweird.f32 %v1671
    %vm1679 = vmor %vm1677, %vm1678
    %v1680 = vsel %vm1679, %v1671, %v1676
    %v1681 = vrsqrt.pop %v1670
    %v1682 = vmul.f32 %v1681, %v1670
    %v1683 = vmul.f32 %v1682, %v1681
    %v1684 = vmul.f32 0.5, %v1683
    %v1685 = vsub.f32 1.5, %v1684
    %v1686 = vmul.f32 %v1681, %v1685
    %vm1687 = vweird.f32 %v1670
    %vm1688 = vweird.f32 %v1681
    %vm1689 = vmor %vm1687, %vm1688
    %v1690 = vsel %vm1689, %v1681, %v1686
    %v1691 = vmul.f32 %v1657, %v1680
    %v1692 = vmul.f32 %v1658, %v1690
    %v1694 = vperm.slane %v1633, 0
    %v1696 = vmul.f32 %v1691, %v1694
    %v1697 = vmul.f32 %v1692, %v1694
    %v1699 = vperm.slane %v1634, 0
    %v1701 = vadd.f32 %v1696, %v1699
    %v1702 = vadd.f32 %v1697, %v1699
    %v1703 = vpack.c.bf16 %v1702, %v1701
    %v1705 = vperm.slane %v1639, 0
    %v1711 = vunpack.c.l.b16 %v1635
    %v1712 = vunpack.c.l.b16 %v1636
    %v1713 = vunpack.c.l.b16 %v1637
    %v1714 = vunpack.c.l.b16 %v1638
    %v1715 = vpack.c.b16 %v1712, %v1711
    %v1716 = vpack.c.b16 %v1714, %v1713
    %v1720 = vsel %vm275, %v1703, 0
    %1722 = vmatpush.bf16.msra.mxu0 0
    %1723 = vmatpush.bf16.msra.mxu0 0
    %1724 = vmatpush.bf16.msra.mxu0 0
    %1725 = vmatpush.bf16.msra.mxu0 0
    %1726 = vmatpush.bf16.msra.mxu0 0
    %1727 = vmatpush.bf16.msra.mxu0 0
    %1728 = vmatpush.bf16.msra.mxu0 %v1716
    %1729 = vmatpush.bf16.msra.mxu0 %v1715
    %1730 = vmatmul.bf16.gmra.mxu0 %v1720
    %v1731 = vpop.f32.mrf.mxu0
    %v1732 = vadd.f32 %v1705, %v1731
    %v1733 = vpop.f32.mrf.mxu0
    %v1734 = vadd.f32 %v1705, %v1733
    %1735 = vdwg.mxu0
    %v1736 = vmax.f32 %v1732, 0.0
    %v1737 = vmax.f32 %v1734, 0.0
    %v1738 = vpack.c.bf16 %v1737, %v1736
    %v1747 = vunpack.c.l.b16 %v1640
    %v1748 = vunpack.c.l.b16 %v1641
    %v1749 = vunpack.c.l.b16 %v1642
    %v1750 = vunpack.c.l.b16 %v1643
    %v1751 = vunpack.c.l.b16 %v1644
    %v1752 = vunpack.c.l.b16 %v1645
    %v1753 = vunpack.c.l.b16 %v1646
    %v1754 = vunpack.c.l.b16 %v1647
    %v1755 = vpack.c.b16 %v1748, %v1747
    %v1756 = vpack.c.b16 %v1750, %v1749
    %v1757 = vpack.c.b16 %v1752, %v1751
    %v1758 = vpack.c.b16 %v1754, %v1753
    %v1764 = vsel %vm782, %v1738, 0
    %1766 = vmatpush.bf16.msra.mxu0 0
    %1767 = vmatpush.bf16.msra.mxu0 0
    %1768 = vmatpush.bf16.msra.mxu0 0
    %1769 = vmatpush.bf16.msra.mxu0 0
    %1770 = vmatpush.bf16.msra.mxu0 %v1758
    %1771 = vmatpush.bf16.msra.mxu0 %v1757
    %1772 = vmatpush.bf16.msra.mxu0 %v1756
    %1773 = vmatpush.bf16.msra.mxu0 %v1755
    %1774 = vmatmul.bf16.gmra.mxu0 %v1764
    %v1775 = vpop.f32.mrf.mxu0
    %v1776 = vadd.f32 0.0, %v1775
    %v1777 = vpop.f32.mrf.mxu0
    %v1778 = vadd.f32 0.0, %v1777
    %1779 = vdwg.mxu0
    %v1780 = vadd.f32 %v1631, %v1776
    %v1781 = vadd.f32 %v1632, %v1778
    %v1783 = vperm.slane %v1648, 0
    %v1785 = vadd.f32 %v1780, %v1783
    %v1786 = vadd.f32 %v1781, %v1783
    %v1787 = vpack.c.bf16 %v1786, %v1785
    %v1788 = vld [vmem:[%s81] sm:$0xf]
    %v1789 = vld [vmem:[%s81 + $0x4] sm:$0xf]
    %v1790 = vld [vmem:[%s81 + $0x8] sm:$0xf]
    %v1791 = vld [vmem:[%s81 + $0xc] sm:$0xf]
    %v1792 = vld [vmem:[%s83] sm:$0x1]
    %v1794 = vperm.slane %v1792, 0
    %v1800 = vunpack.c.l.b16 %v1788
    %v1801 = vunpack.c.l.b16 %v1789
    %v1802 = vunpack.c.l.b16 %v1790
    %v1803 = vunpack.c.l.b16 %v1791
    %v1804 = vpack.c.b16 %v1801, %v1800
    %v1805 = vpack.c.b16 %v1803, %v1802
    %v1809 = vsel %vm275, %v1787, 0
    %1811 = vmatpush.bf16.msra.mxu0 0
    %1812 = vmatpush.bf16.msra.mxu0 0
    %1813 = vmatpush.bf16.msra.mxu0 0
    %1814 = vmatpush.bf16.msra.mxu0 0
    %1815 = vmatpush.bf16.msra.mxu0 0
    %1816 = vmatpush.bf16.msra.mxu0 0
    %1817 = vmatpush.bf16.msra.mxu0 %v1805
    %1818 = vmatpush.bf16.msra.mxu0 %v1804
    %1819 = vmatmul.bf16.gmra.mxu0 %v1809
    %v1820 = vpop.f32.mrf.mxu0
    %v1821 = vadd.f32 %v1794, %v1820
    %v1822 = vpop.f32.mrf.mxu0
    %v1823 = vadd.f32 %v1794, %v1822
    %1824 = vdwg.mxu0
    %1825 = vst [vmem:[#allocation2] sm:$0xff] %v1821
    %1826 = vst [vmem:[#allocation2 + $0x8] sm:$0xff] %v1823
    %v1827 = vld [vmem:[%s3] sm:$0xff]
    %v1828 = vld [vmem:[%s3 + $0x8] sm:$0xff]
    %v1829 = vld [vmem:[%s9] sm:$0xff]
    %v1830 = vld [vmem:[%s9 + $0x8] sm:$0xff]
    %1831 = vmax.xlane.f32.xlu0 %v1821
    %v1832 = vpop.xlane.xlu0 %1831
    %1833 = vmax.xlane.f32.xlu0 %v1823
    %v1834 = vpop.xlane.xlu0 %1833
    %v1835 = vsub.f32 %v1821, %v1832
    %v1836 = vsub.f32 %v1823, %v1834
    %v1837 = vmul.f32 %v1835, 1.442695
    %v1838 = vpow.pop %v1837
    %v1839 = vmul.f32 %v1836, 1.442695
    %v1840 = vpow.pop %v1839
    %1841 = vadd.xlane.f32.xlu0 %v1838
    %v1842 = vpop.xlane.xlu0 %1841
    %1843 = vadd.xlane.f32.xlu0 %v1840
    %v1844 = vpop.xlane.xlu0 %1843
    %v1845 = vlog2.pop %v1842
    %v1846 = vmul.f32 %v1845, 0.6931472
    %v1847 = vlog2.pop %v1844
    %v1848 = vmul.f32 %v1847, 0.6931472
    %v1849 = vadd.f32 %v1832, %v1846
    %v1850 = vadd.f32 %v1834, %v1848
    %1851 = vset.pattern.permute.xlu0 0
    %1852 = vperm.xlu0 %1851, %v1827
    %v1853 = vpop.permute.xlu0 %1852
    %1854 = vset.pattern.permute.xlu0 0
    %1855 = vperm.xlu0 %1854, %v1828
    %v1856 = vpop.permute.xlu0 %1855
    %vm1857 = vcmp.eq.s32.totalorder %v190, %v1853
    %vm1858 = vcmp.eq.s32.totalorder %v190, %v1856
    %v1859 = vsel %vm1857, %v1821, 0.0
    %v1860 = vsel %vm1858, %v1823, 0.0
    %1861 = vadd.xlane.f32.xlu0 %v1859
    %v1862 = vpop.xlane.xlu0 %1861
    %1863 = vadd.xlane.f32.xlu0 %v1860
    %v1864 = vpop.xlane.xlu0 %1863
    %v1865 = vsub.f32 %v1849, %v1862
    %v1866 = vsub.f32 %v1850, %v1864
    %v1867 = vmul.f32 %v1865, %v1829
    %v1868 = vmul.f32 %v1866, %v1830
    %vm1869 = vcmask 7168
    %v1870 = vsel %vm1869, %v1867, 0.0
    %v1871 = vsel %vm1869, %v1868, 0.0
    %v1872 = vadd.f32 %v1870, %v1871
    %1873 = vadd.xlane.f32.xlu0 %v1872
    %v1874 = vpop.xlane.xlu0 %1873
    %v1875 = vrot.slane %v1874, 4
    %v1876 = vadd.f32 %v1874, %v1875
    %v1877 = vrot.slane %v1876, 2
    %v1878 = vadd.f32 %v1876, %v1877
    %v1879 = vrot.slane %v1878, 1
    %v1880 = vadd.f32 %v1878, %v1879
    %s1881 = vtos %v1880
    %v1882 = vsel %vm1869, %v1829, 0.0
    %v1883 = vsel %vm1869, %v1830, 0.0
    %v1884 = vadd.f32 %v1882, %v1883
    %1885 = vadd.xlane.f32.xlu0 %v1884
    %v1886 = vpop.xlane.xlu0 %1885
    %v1887 = vrot.slane %v1886, 4
    %v1888 = vadd.f32 %v1886, %v1887
    %v1889 = vrot.slane %v1888, 2
    %v1890 = vadd.f32 %v1888, %v1889
    %v1891 = vrot.slane %v1890, 1
    %v1892 = vadd.f32 %v1890, %v1891
    %s1893 = vtos %v1892
    %s1894 = smax.f32 %s1893, 1.0
    %v1895 = vstv %s1894
    %v1896 = vrcp.pop %v1895
    %v1897 = vmul.f32 %v1895, %v1896
    %v1898 = vsub.f32 1.0, %v1897
    %v1899 = vmul.f32 %v1896, %v1898
    %v1900 = vadd.f32 %v1896, %v1899
    %vm1901 = vweird.f32 %v1895
    %vm1902 = vweird.f32 %v1896
    %vm1903 = vmor %vm1901, %vm1902
    %v1904 = vsel %vm1903, %v1896, %v1900
    %v1905 = vand.u32 2147483647, %v1895
    %vm1906 = vcmp.eq.f32.partialorder %v1905, 8.507059e+37
    %v1907 = vand.u32 %v1895, 2147483648
    %v1908 = vor.u32 1.1754944e-38, %v1907
    %v1909 = vsel %vm1906, %v1908, %v1904
    %s1910 = vtos %v1909
    %s1911 = smul.f32 %s1881, %s1910
    %s1912 = scalar_lea.smem [#allocation5], 0
    %1913 = sst [smem:[%s1912]] %s1911
    // Predicated region
    $region170: #{seq2seq_forward.1} parent=1 // pred_check
      _
    $region171: #{seq2seq_forward.1} parent=1 // pred_check_branch
      %1915 = sbr.rel (0) target = $region173
    $region172: #{seq2seq_forward.1} parent=1 // pred_region
      %1917 = vsyncadd [#allocation3], 0
      %s1918 = sshll.u32 [#allocation2], 4
      %s1919 = int_to_ptr.vmem [resolvable:$true] %s1918
      %s1920 = sshll.u32 %s85, 4
      %s1921 = int_to_ptr.hbm [resolvable:$true] %s1920
      %1926 = dma.vmem_to_hbm [thread:$0]  %s1919, 256, %s1921, [#allocation3], 128, 128, 8
    $region173: #{seq2seq_forward.1} parent=1 // pred_fallthru
      _
    // Predicated region
    $region174: #{seq2seq_forward.1} parent=1 // pred_check
      _
    $region175: #{seq2seq_forward.1} parent=1 // pred_check_branch
      %1928 = sbr.rel (0) target = $region177
    $region176: #{seq2seq_forward.1} parent=1 // pred_region
      %1930 = vsyncadd [#allocation4], 0
      %s1932 = sshll.u32 %s87, 4
      %s1933 = int_to_ptr.hbm [resolvable:$true] %s1932
      %1935 = dma.smem_to_hbm [#allocation5], 16, %s1933, [#allocation4]
    $region177: #{seq2seq_forward.1} parent=1 // pred_fallthru
      _
    // Predicated region
    $region178: #{seq2seq_forward.1} parent=1 // pred_check
      _
    $region179: #{seq2seq_forward.1} parent=1 // pred_check_branch
      %1937 = sbr.rel (0) target = $region181
    $region180: #{seq2seq_forward.1} parent=1 // pred_region
      %1939 = dma.done [#allocation3], 256
    $region181: #{seq2seq_forward.1} parent=1 // pred_fallthru
      _
    // Predicated region
    $region182: #{seq2seq_forward.1} parent=1 // pred_check
      _
    $region183: #{seq2seq_forward.1} parent=1 // pred_check_branch
      %1941 = sbr.rel (0) target = $region185
    $region184: #{seq2seq_forward.1} parent=1 // pred_region
      %1943 = dma.done [#allocation4], 16
    $region185: #{seq2seq_forward.1} parent=1 // pred_fallthru
      _
    %1944 = sfence
    %1945 = vsyncpa [#allocation3], 1
    %1946 = vsyncpa [#allocation4], 1

</llo_original>
